<compile_context>
chip_gen: v5e
topology: v5e:2x2
jax: 0.10.0
libtpu: 0.0.40
codegen_flags: <defaults>
</compile_context>

<pallas_src>
import jax
import jax.numpy as jnp
import numpy as np
from jax.experimental import pallas as pl
from jax.experimental.pallas import tpu as pltpu


def _prelu(x, a):
    return jnp.where(x > 0, x, a * x)


def _round_up(n, m):
    return ((n + m - 1) // m) * m


# ----------------------------------------------------------------------------
# Kernel: one grid step processes a (TM, ...) batch tile end-to-end.
# ----------------------------------------------------------------------------
def smpl_part_rf_kernel(xin_ref,             # (TM, in_pad)              f32
                        slope_ref,           # (7, 256)  per-lane slopes f32
                        embW_ref, embb_ref,  # (in_pad, 256), (1, 256)
                        W1_ref, b1_ref,      # (3, 256, 256), (3, 1, 256)
                        W2_ref, b2_ref,      # (3, 256, 256), (3, 1, 256)
                        finW_ref, finb_ref,  # (256, 128), (1, 128)  zero-pad
                        out_ref):            # (TM, 128)  f32 or bf16
    wdt = embW_ref.dtype   # matmul-operand dtype (bf16 default, f32 optional)

    # ---- merged pos_emd + beta_emd: one block-diagonal matmul (BN folded) ---
    h = jnp.dot(xin_ref[...].astype(wdt), embW_ref[...],
                preferred_element_type=jnp.float32) + embb_ref[...]
    h = _prelu(h, slope_ref[0])              # per-lane slopes (branch-wise)

    # ---- 3 x BasicBlock (residual MLP), BN+bias pre-folded into W/b ---------
    # 256x256 matmuls map onto one MXU tile; only the batch (M) axis is tiled.
    for i in range(3):
        t = jnp.dot(h.astype(wdt), W1_ref[i],
                    preferred_element_type=jnp.float32) + b1_ref[i]
        t = _prelu(t, slope_ref[1 + 2 * i])
        t = jnp.dot(t.astype(wdt), W2_ref[i],
                    preferred_element_type=jnp.float32) + b2_ref[i]
        t = _prelu(t, slope_ref[2 + 2 * i])
        h = h + t

    # ---- final Linear, lane-dense 128-wide output slab ----------------------
    out_ref[...] = (jnp.dot(h.astype(wdt), finW_ref[...],
                            preferred_element_type=jnp.float32)
                    + finb_ref[...]).astype(out_ref.dtype)


# ----------------------------------------------------------------------------
# Raw (PyTorch-structured) parameter construction — deterministic, synthetic.
# ----------------------------------------------------------------------------
def _linear(key, fan_in, fan_out):
    kw, kb = jax.random.split(key)
    w = jax.random.normal(kw, (fan_in, fan_out), jnp.float32) / np.sqrt(fan_in)
    b = 0.01 * jax.random.normal(kb, (1, fan_out), jnp.float32)
    return w, b


def _bn(key, dim):
    k1, k2, k3, k4 = jax.random.split(key, 4)
    return {
        "gamma": 1.0 + 0.1 * jax.random.normal(k1, (dim,), jnp.float32),
        "beta": 0.1 * jax.random.normal(k2, (dim,), jnp.float32),
        "mean": 0.1 * jax.random.normal(k3, (dim,), jnp.float32),
        "var": 1.0 + 0.1 * jax.random.uniform(k4, (dim,), jnp.float32),
    }


def init_raw_params(key, num_jts, num_theta, hidden=256):
    assert hidden == 256, "architecture requires (h-64)+(h-192)==h -> h=256"
    ks = jax.random.split(key, 24)
    raw = {}
    raw["posW"], raw["posb"] = _linear(ks[0], num_jts * 3, hidden - 64)
    raw["pos_bn"] = _bn(ks[1], hidden - 64)
    raw["betW"], raw["betb"] = _linear(ks[2], 10, hidden - 192)
    raw["bet_bn"] = _bn(ks[3], hidden - 192)
    blocks = []
    for i in range(3):
        blk = {}
        blk["W1"], blk["b1"] = _linear(ks[4 + 4 * i], hidden, hidden)
        blk["bn1"] = _bn(ks[5 + 4 * i], hidden)
        blk["W2"], blk["b2"] = _linear(ks[6 + 4 * i], hidden, hidden)
        blk["bn2"] = _bn(ks[7 + 4 * i], hidden)
        blocks.append(blk)
    raw["blocks"] = blocks
    raw["finW"], raw["finb"] = _linear(ks[16], hidden, num_theta * 2)
    # PyTorch PReLU() default: single learnable slope = 0.25 per activation.
    raw["slopes"] = jnp.full((8,), 0.25, jnp.float32)
    return raw


# ----------------------------------------------------------------------------
# Host-side folding (do this ONCE per dtype, outside the forward path):
#   BN+bias into weights, block-diagonal embedding merge with input padding,
#   per-lane slope vectors, lane-dense padded final layer.
# ----------------------------------------------------------------------------
def fold_params(raw, weight_dtype=jnp.bfloat16, eps=1e-5, in_align=32):
    def fold(W, b, bnp):
        scale = bnp["gamma"] / jnp.sqrt(bnp["var"] + eps)
        shift = bnp["beta"] - bnp["mean"] * scale
        return W * scale[None, :], b * scale[None, :] + shift[None, :]

    posW, posb = fold(raw["posW"], raw["posb"], raw["pos_bn"])
    betW, betb = fold(raw["betW"], raw["betb"], raw["bet_bn"])
    d_pos_in, d_pos = posW.shape
    d_bet_in, d_bet = betW.shape
    hidden = d_pos + d_bet

    # Block-diagonal merged embedding weight, zero rows for the xin padding.
    d_in = d_pos_in + d_bet_in
    in_pad = _round_up(d_in, in_align)
    embW = jnp.zeros((in_pad, hidden), jnp.float32)
    embW = embW.at[:d_pos_in, :d_pos].set(posW)
    embW = embW.at[d_pos_in:d_in, d_pos:].set(betW)
    embb = jnp.concatenate([posb, betb], axis=-1)

    sl = raw["slopes"]
    # Per-lane PReLU slopes: row 0 = merged embedding (pos lanes then beta
    # lanes); rows 1..6 = the 6 BasicBlock PReLUs (constant across lanes).
    rows = [jnp.concatenate([jnp.full((d_pos,), sl[0], jnp.float32),
                             jnp.full((d_bet,), sl[1], jnp.float32)])]
    for j in range(6):
        rows.append(jnp.full((hidden,), sl[2 + j], jnp.float32))
    slope_vecs = jnp.stack(rows)                       # (7, hidden)

    W1, b1, W2, b2 = [], [], [], []
    for blk in raw["blocks"]:
        w, b = fold(blk["W1"], blk["b1"], blk["bn1"]); W1.append(w); b1.append(b)
        w, b = fold(blk["W2"], blk["b2"], blk["bn2"]); W2.append(w); b2.append(b)
    W1 = jnp.stack(W1); b1 = jnp.stack(b1)
    W2 = jnp.stack(W2); b2 = jnp.stack(b2)

    out_dim = raw["finW"].shape[1]
    out_pad = max(128, _round_up(out_dim, 128))        # lane-dense output slab
    finW = jnp.zeros((hidden, out_pad), jnp.float32).at[:, :out_dim].set(raw["finW"])
    finb = jnp.zeros((1, out_pad), jnp.float32).at[:, :out_dim].set(raw["finb"])

    # bf16 output slab halves HBM writeback (dominant stream on v5e); keep an
    # f32 slab in the exact f32 path.
    out_dtype = jnp.float32 if weight_dtype == jnp.float32 else jnp.bfloat16

    return {
        "slope_vecs": slope_vecs,
        "embW": embW.astype(weight_dtype), "embb": embb,
        "W1": W1.astype(weight_dtype), "b1": b1,
        "W2": W2.astype(weight_dtype), "b2": b2,
        "finW": finW.astype(weight_dtype), "finb": finb,
        "in_dim": d_in, "in_pad": in_pad,
        "out_dim": out_dim, "out_dtype": out_dtype,
    }


# ----------------------------------------------------------------------------
# Wrapper: joint gather, batch tiling / padding, pallas_call.
# Takes pre-folded params (fold once with fold_params, reuse every call).
# ----------------------------------------------------------------------------
def smpl_part_rf_forward(p3d, beta, folded, jts_index, num_theta):
    B = p3d.shape[0]
    num_jts = len(jts_index)

    # p3d[:, jts_index, :].view(B, num_jts*3) and concat with beta. xin stays
    # f32 in HBM; the bf16 cast (if any) happens inside the kernel only.
    up_p3d = p3d[:, jnp.asarray(jts_index), :].reshape(B, num_jts * 3)
    xin = jnp.concatenate([up_p3d, beta], axis=-1).astype(jnp.float32)

    in_dim, in_pad = folded["in_dim"], folded["in_pad"]
    if in_pad != in_dim:
        xin = jnp.pad(xin, ((0, 0), (0, in_pad - in_dim)))

    # Batch tiling: TM multiple of 8 (f32 sublane), capped at 1024 rows/tile.
    # For B >= 16 split into >= 2 grid steps so both v7x TensorCores get work.
    if B < 16:
        TM = _round_up(max(B, 1), 8)
    else:
        TM = min(1024, _round_up(pl.cdiv(B, 2), 8))
    B_pad = _round_up(B, TM)
    if B_pad != B:
        xin = jnp.pad(xin, ((0, B_pad - B), (0, 0)))
    grid = (B_pad // TM,)

    out_pad = folded["finW"].shape[1]
    out_dtype = folded["out_dtype"]

    weight_args = (folded["slope_vecs"], folded["embW"], folded["embb"],
                   folded["W1"], folded["b1"], folded["W2"], folded["b2"],
                   folded["finW"], folded["finb"])

    def build(single_buffer_weights):
        def wspec(a):
            nd = a.ndim
            kw = {}
            if single_buffer_weights:
                # Constant index_map -> one pipeline buffer is enough; halves
                # the resident-weight VMEM footprint.
                kw["pipeline_mode"] = pl.Buffered(1)
            return pl.BlockSpec(a.shape, lambda i, _nd=nd: (0,) * _nd, **kw)

        in_specs = ([pl.BlockSpec((TM, in_pad), lambda i: (i, 0))] +
                    [wspec(a) for a in weight_args])
        return pl.pallas_call(
            smpl_part_rf_kernel,
            out_shape=jax.ShapeDtypeStruct((B_pad, out_pad), out_dtype),
            grid=grid,
            in_specs=in_specs,
            out_specs=pl.BlockSpec((TM, out_pad), lambda i: (i, 0)),
            compiler_params=pltpu.CompilerParams(
                dimension_semantics=("parallel",),
                vmem_limit_bytes=32 * 1024 * 1024),   # v5e default is 16 MiB
        )

    try:
        out = jax.block_until_ready(build(True)(xin, *weight_args))
    except Exception:
        # pipeline_mode / pl.Buffered(1) not supported on this jax version:
        # fall back to the default double-buffered weight specs.
        out = build(False)(xin, *weight_args)

    out = out[:B, :folded["out_dim"]].astype(jnp.float32)
    return out.reshape(B, num_theta, 2)


# ----------------------------------------------------------------------------
# Pure-JAX reference (unfolded, eval-mode BN / identity Dropout) — mirrors the
# PyTorch module math exactly, used to verify the folding rewrite.
# ----------------------------------------------------------------------------
def _bn_apply(z, bnp, eps=1e-5):
    scale = bnp["gamma"] / jnp.sqrt(bnp["var"] + eps)
    return (z - bnp["mean"]) * scale + bnp["beta"]


def reference_forward(p3d, beta, raw, jts_index, num_theta):
    B = p3d.shape[0]
    num_jts = len(jts_index)
    up = p3d[:, jnp.asarray(jts_index), :].reshape(B, num_jts * 3)
    sl = raw["slopes"]
    x = up @ raw["posW"] + raw["posb"]
    x = _bn_apply(x, raw["pos_bn"])
    x = _prelu(x, sl[0])
    y = beta @ raw["betW"] + raw["betb"]
    y = _bn_apply(y, raw["bet_bn"])
    y = _prelu(y, sl[1])
    h = jnp.concatenate([x, y], axis=-1)
    for i, blk in enumerate(raw["blocks"]):
        t = h @ blk["W1"] + blk["b1"]
        t = _bn_apply(t, blk["bn1"])
        t = _prelu(t, sl[2 + 2 * i])
        t = t @ blk["W2"] + blk["b2"]
        t = _bn_apply(t, blk["bn2"])
        t = _prelu(t, sl[3 + 2 * i])
        h = h + t
    out = h @ raw["finW"] + raw["finb"]
    return out.reshape(B, num_theta, 2)


if __name__ == "__main__":
    key = jax.random.PRNGKey(0)
    k_p3d, k_beta, k_params = jax.random.split(key, 3)

    # Small, module-consistent shapes
    B = 8
    num_joints_total = 24
    jts_index = [1, 4, 7, 10, 13]        # num_jts = 5  -> input dim 15 (+10 beta)
    theta_index = [0, 3, 6]              # num_theta = 3 -> output dim 6
    num_hidden = 256                     # required: (h-64)+(h-192) == h

    p3d = jax.random.normal(k_p3d, (B, num_joints_total, 3), jnp.float32)
    beta = jax.random.normal(k_beta, (B, 10), jnp.float32)

    raw = init_raw_params(k_params, len(jts_index), len(theta_index), num_hidden)

    ref = reference_forward(p3d, beta, raw, jts_index, len(theta_index))
    ref = np.asarray(jax.block_until_ready(ref))

    # f32 path: exact eval-mode semantics, checked against unfolded reference.
    folded_f32 = fold_params(raw, weight_dtype=jnp.float32)
    out_f32 = smpl_part_rf_forward(p3d, beta, folded_f32, jts_index,
                                   len(theta_index))
    out_f32 = np.asarray(jax.block_until_ready(out_f32))
    assert out_f32.shape == (B, len(theta_index), 2)
    assert np.allclose(out_f32, ref, rtol=1e-4, atol=1e-4)

    # bf16 matmul-operand path (default / fast on v5e/v6e/v7x): elementwise
    # math stays f32; checked against the reference with a loose tolerance.
    folded_bf16 = fold_params(raw, weight_dtype=jnp.bfloat16)
    out_bf16 = smpl_part_rf_forward(p3d, beta, folded_bf16, jts_index,
                                    len(theta_index))
    out_bf16 = np.asarray(jax.block_until_ready(out_bf16))
    assert out_bf16.shape == (B, len(theta_index), 2)
    assert np.isfinite(out_bf16).all()
    rel = np.linalg.norm(out_bf16 - ref) / (np.linalg.norm(ref) + 1e-8)
    assert rel < 5e-2, f"bf16 path relative error too large: {rel}"

    print("KERNEL_OK")
</pallas_src>

<mosaic_0001>
module attributes {stable_mosaic.version = 11 : i64} {
  func.func @smpl_part_rf_kernel(%arg0: i32, %arg1: memref<8x32xf32, #tpu.memory_space<vmem>>, %arg2: memref<7x256xf32, #tpu.memory_space<vmem>>, %arg3: memref<32x256xf32, #tpu.memory_space<vmem>>, %arg4: memref<1x256xf32, #tpu.memory_space<vmem>>, %arg5: memref<3x256x256xf32, #tpu.memory_space<vmem>>, %arg6: memref<3x1x256xf32, #tpu.memory_space<vmem>>, %arg7: memref<3x256x256xf32, #tpu.memory_space<vmem>>, %arg8: memref<3x1x256xf32, #tpu.memory_space<vmem>>, %arg9: memref<256x128xf32, #tpu.memory_space<vmem>>, %arg10: memref<1x128xf32, #tpu.memory_space<vmem>>, %arg11: memref<8x128xf32, #tpu.memory_space<vmem>>) attributes {dimension_semantics = [#tpu.dimension_semantics<parallel>], iteration_bounds = array<i64: 1>, scalar_prefetch = 0 : i64, scratch_operands = 0 : i64, tpu.core_type = #tpu.core_type<tc>, window_params = [{transform_indices = @transform_0, window_bounds = array<i64: 8, 32>}, {pipeline_mode = #tpu.pipeline_mode<synchronous>, transform_indices = @transform_1, window_bounds = array<i64: 7, 256>}, {pipeline_mode = #tpu.pipeline_mode<synchronous>, transform_indices = @transform_2, window_bounds = array<i64: 32, 256>}, {pipeline_mode = #tpu.pipeline_mode<synchronous>, transform_indices = @transform_3, window_bounds = array<i64: 1, 256>}, {pipeline_mode = #tpu.pipeline_mode<synchronous>, transform_indices = @transform_4, window_bounds = array<i64: 3, 256, 256>}, {pipeline_mode = #tpu.pipeline_mode<synchronous>, transform_indices = @transform_5, window_bounds = array<i64: 3, 1, 256>}, {pipeline_mode = #tpu.pipeline_mode<synchronous>, transform_indices = @transform_6, window_bounds = array<i64: 3, 256, 256>}, {pipeline_mode = #tpu.pipeline_mode<synchronous>, transform_indices = @transform_7, window_bounds = array<i64: 3, 1, 256>}, {pipeline_mode = #tpu.pipeline_mode<synchronous>, transform_indices = @transform_8, window_bounds = array<i64: 256, 128>}, {pipeline_mode = #tpu.pipeline_mode<synchronous>, transform_indices = @transform_9, window_bounds = array<i64: 1, 128>}, {transform_indices = @transform_10, window_bounds = array<i64: 8, 128>}]} {
    %c0 = arith.constant 0 : index
    %c0_0 = arith.constant 0 : index
    %0 = vector.load %arg1[%c0, %c0_0] : memref<8x32xf32, #tpu.memory_space<vmem>>, vector<8x32xf32>
    %c0_1 = arith.constant 0 : index
    %c0_2 = arith.constant 0 : index
    %1 = vector.load %arg3[%c0_1, %c0_2] : memref<32x256xf32, #tpu.memory_space<vmem>>, vector<32x256xf32>
    %cst = arith.constant dense<0.000000e+00> : vector<8x256xf32>
    %2 = tpu.matmul %0, %1, %cst {dimension_numbers = #tpu.dot_dimension_numbers<[1], [0], [0], [1], [0, 0, 1, 1], [], []>} : vector<8x32xf32>, vector<32x256xf32>, vector<8x256xf32> -> vector<8x256xf32>
    %c0_3 = arith.constant 0 : index
    %c0_4 = arith.constant 0 : index
    %3 = vector.load %arg4[%c0_3, %c0_4] : memref<1x256xf32, #tpu.memory_space<vmem>>, vector<1x256xf32>
    %4 = vector.broadcast %3 : vector<1x256xf32> to vector<8x256xf32>
    %5 = arith.addf %2, %4 : vector<8x256xf32>
    %c0_5 = arith.constant 0 : index
    %c0_6 = arith.constant 0 : index
    %6 = vector.load %arg2[%c0_5, %c0_6] : memref<7x256xf32, #tpu.memory_space<vmem>>, vector<1x256xf32>
    %7 = vector.shape_cast %6 : vector<1x256xf32> to vector<256xf32>
    %cst_7 = arith.constant 0.000000e+00 : f32
    %8 = vector.broadcast %cst_7 : f32 to vector<8x256xf32>
    %9 = arith.cmpf ogt, %5, %8 : vector<8x256xf32>
    %10 = vector.shape_cast %7 : vector<256xf32> to vector<1x256xf32>
    %11 = vector.broadcast %10 : vector<1x256xf32> to vector<8x256xf32>
    %12 = arith.mulf %11, %5 : vector<8x256xf32>
    %13 = arith.select %9, %5, %12 : vector<8x256xi1>, vector<8x256xf32>
    %c0_8 = arith.constant 0 : index
    %c0_9 = arith.constant 0 : index
    %c0_10 = arith.constant 0 : index
    %14 = vector.load %arg5[%c0_8, %c0_9, %c0_10] : memref<3x256x256xf32, #tpu.memory_space<vmem>>, vector<1x256x256xf32>
    %15 = vector.shape_cast %14 : vector<1x256x256xf32> to vector<256x256xf32>
    %cst_11 = arith.constant dense<0.000000e+00> : vector<8x256xf32>
    %16 = tpu.matmul %13, %15, %cst_11 {dimension_numbers = #tpu.dot_dimension_numbers<[1], [0], [0], [1], [0, 0, 1, 1], [], []>} : vector<8x256xf32>, vector<256x256xf32>, vector<8x256xf32> -> vector<8x256xf32>
    %c0_12 = arith.constant 0 : index
    %c0_13 = arith.constant 0 : index
    %c0_14 = arith.constant 0 : index
    %17 = vector.load %arg6[%c0_12, %c0_13, %c0_14] : memref<3x1x256xf32, #tpu.memory_space<vmem>>, vector<1x1x256xf32>
    %18 = vector.shape_cast %17 : vector<1x1x256xf32> to vector<1x256xf32>
    %19 = vector.broadcast %18 : vector<1x256xf32> to vector<8x256xf32>
    %20 = arith.addf %16, %19 : vector<8x256xf32>
    %c1 = arith.constant 1 : index
    %c0_15 = arith.constant 0 : index
    %21 = vector.load %arg2[%c1, %c0_15] : memref<7x256xf32, #tpu.memory_space<vmem>>, vector<1x256xf32>
    %22 = vector.shape_cast %21 : vector<1x256xf32> to vector<256xf32>
    %cst_16 = arith.constant 0.000000e+00 : f32
    %23 = vector.broadcast %cst_16 : f32 to vector<8x256xf32>
    %24 = arith.cmpf ogt, %20, %23 : vector<8x256xf32>
    %25 = vector.shape_cast %22 : vector<256xf32> to vector<1x256xf32>
    %26 = vector.broadcast %25 : vector<1x256xf32> to vector<8x256xf32>
    %27 = arith.mulf %26, %20 : vector<8x256xf32>
    %28 = arith.select %24, %20, %27 : vector<8x256xi1>, vector<8x256xf32>
    %c0_17 = arith.constant 0 : index
    %c0_18 = arith.constant 0 : index
    %c0_19 = arith.constant 0 : index
    %29 = vector.load %arg7[%c0_17, %c0_18, %c0_19] : memref<3x256x256xf32, #tpu.memory_space<vmem>>, vector<1x256x256xf32>
    %30 = vector.shape_cast %29 : vector<1x256x256xf32> to vector<256x256xf32>
    %cst_20 = arith.constant dense<0.000000e+00> : vector<8x256xf32>
    %31 = tpu.matmul %28, %30, %cst_20 {dimension_numbers = #tpu.dot_dimension_numbers<[1], [0], [0], [1], [0, 0, 1, 1], [], []>} : vector<8x256xf32>, vector<256x256xf32>, vector<8x256xf32> -> vector<8x256xf32>
    %c0_21 = arith.constant 0 : index
    %c0_22 = arith.constant 0 : index
    %c0_23 = arith.constant 0 : index
    %32 = vector.load %arg8[%c0_21, %c0_22, %c0_23] : memref<3x1x256xf32, #tpu.memory_space<vmem>>, vector<1x1x256xf32>
    %33 = vector.shape_cast %32 : vector<1x1x256xf32> to vector<1x256xf32>
    %34 = vector.broadcast %33 : vector<1x256xf32> to vector<8x256xf32>
    %35 = arith.addf %31, %34 : vector<8x256xf32>
    %c2 = arith.constant 2 : index
    %c0_24 = arith.constant 0 : index
    %36 = vector.load %arg2[%c2, %c0_24] : memref<7x256xf32, #tpu.memory_space<vmem>>, vector<1x256xf32>
    %37 = vector.shape_cast %36 : vector<1x256xf32> to vector<256xf32>
    %cst_25 = arith.constant 0.000000e+00 : f32
    %38 = vector.broadcast %cst_25 : f32 to vector<8x256xf32>
    %39 = arith.cmpf ogt, %35, %38 : vector<8x256xf32>
    %40 = vector.shape_cast %37 : vector<256xf32> to vector<1x256xf32>
    %41 = vector.broadcast %40 : vector<1x256xf32> to vector<8x256xf32>
    %42 = arith.mulf %41, %35 : vector<8x256xf32>
    %43 = arith.select %39, %35, %42 : vector<8x256xi1>, vector<8x256xf32>
    %44 = arith.addf %13, %43 : vector<8x256xf32>
    %c1_26 = arith.constant 1 : index
    %c0_27 = arith.constant 0 : index
    %c0_28 = arith.constant 0 : index
    %45 = vector.load %arg5[%c1_26, %c0_27, %c0_28] : memref<3x256x256xf32, #tpu.memory_space<vmem>>, vector<1x256x256xf32>
    %46 = vector.shape_cast %45 : vector<1x256x256xf32> to vector<256x256xf32>
    %cst_29 = arith.constant dense<0.000000e+00> : vector<8x256xf32>
    %47 = tpu.matmul %44, %46, %cst_29 {dimension_numbers = #tpu.dot_dimension_numbers<[1], [0], [0], [1], [0, 0, 1, 1], [], []>} : vector<8x256xf32>, vector<256x256xf32>, vector<8x256xf32> -> vector<8x256xf32>
    %c1_30 = arith.constant 1 : index
    %c0_31 = arith.constant 0 : index
    %c0_32 = arith.constant 0 : index
    %48 = vector.load %arg6[%c1_30, %c0_31, %c0_32] : memref<3x1x256xf32, #tpu.memory_space<vmem>>, vector<1x1x256xf32>
    %49 = vector.shape_cast %48 : vector<1x1x256xf32> to vector<1x256xf32>
    %50 = vector.broadcast %49 : vector<1x256xf32> to vector<8x256xf32>
    %51 = arith.addf %47, %50 : vector<8x256xf32>
    %c3 = arith.constant 3 : index
    %c0_33 = arith.constant 0 : index
    %52 = vector.load %arg2[%c3, %c0_33] : memref<7x256xf32, #tpu.memory_space<vmem>>, vector<1x256xf32>
    %53 = vector.shape_cast %52 : vector<1x256xf32> to vector<256xf32>
    %cst_34 = arith.constant 0.000000e+00 : f32
    %54 = vector.broadcast %cst_34 : f32 to vector<8x256xf32>
    %55 = arith.cmpf ogt, %51, %54 : vector<8x256xf32>
    %56 = vector.shape_cast %53 : vector<256xf32> to vector<1x256xf32>
    %57 = vector.broadcast %56 : vector<1x256xf32> to vector<8x256xf32>
    %58 = arith.mulf %57, %51 : vector<8x256xf32>
    %59 = arith.select %55, %51, %58 : vector<8x256xi1>, vector<8x256xf32>
    %c1_35 = arith.constant 1 : index
    %c0_36 = arith.constant 0 : index
    %c0_37 = arith.constant 0 : index
    %60 = vector.load %arg7[%c1_35, %c0_36, %c0_37] : memref<3x256x256xf32, #tpu.memory_space<vmem>>, vector<1x256x256xf32>
    %61 = vector.shape_cast %60 : vector<1x256x256xf32> to vector<256x256xf32>
    %cst_38 = arith.constant dense<0.000000e+00> : vector<8x256xf32>
    %62 = tpu.matmul %59, %61, %cst_38 {dimension_numbers = #tpu.dot_dimension_numbers<[1], [0], [0], [1], [0, 0, 1, 1], [], []>} : vector<8x256xf32>, vector<256x256xf32>, vector<8x256xf32> -> vector<8x256xf32>
    %c1_39 = arith.constant 1 : index
    %c0_40 = arith.constant 0 : index
    %c0_41 = arith.constant 0 : index
    %63 = vector.load %arg8[%c1_39, %c0_40, %c0_41] : memref<3x1x256xf32, #tpu.memory_space<vmem>>, vector<1x1x256xf32>
    %64 = vector.shape_cast %63 : vector<1x1x256xf32> to vector<1x256xf32>
    %65 = vector.broadcast %64 : vector<1x256xf32> to vector<8x256xf32>
    %66 = arith.addf %62, %65 : vector<8x256xf32>
    %c4 = arith.constant 4 : index
    %c0_42 = arith.constant 0 : index
    %67 = vector.load %arg2[%c4, %c0_42] : memref<7x256xf32, #tpu.memory_space<vmem>>, vector<1x256xf32>
    %68 = vector.shape_cast %67 : vector<1x256xf32> to vector<256xf32>
    %cst_43 = arith.constant 0.000000e+00 : f32
    %69 = vector.broadcast %cst_43 : f32 to vector<8x256xf32>
    %70 = arith.cmpf ogt, %66, %69 : vector<8x256xf32>
    %71 = vector.shape_cast %68 : vector<256xf32> to vector<1x256xf32>
    %72 = vector.broadcast %71 : vector<1x256xf32> to vector<8x256xf32>
    %73 = arith.mulf %72, %66 : vector<8x256xf32>
    %74 = arith.select %70, %66, %73 : vector<8x256xi1>, vector<8x256xf32>
    %75 = arith.addf %44, %74 : vector<8x256xf32>
    %c2_44 = arith.constant 2 : index
    %c0_45 = arith.constant 0 : index
    %c0_46 = arith.constant 0 : index
    %76 = vector.load %arg5[%c2_44, %c0_45, %c0_46] : memref<3x256x256xf32, #tpu.memory_space<vmem>>, vector<1x256x256xf32>
    %77 = vector.shape_cast %76 : vector<1x256x256xf32> to vector<256x256xf32>
    %cst_47 = arith.constant dense<0.000000e+00> : vector<8x256xf32>
    %78 = tpu.matmul %75, %77, %cst_47 {dimension_numbers = #tpu.dot_dimension_numbers<[1], [0], [0], [1], [0, 0, 1, 1], [], []>} : vector<8x256xf32>, vector<256x256xf32>, vector<8x256xf32> -> vector<8x256xf32>
    %c2_48 = arith.constant 2 : index
    %c0_49 = arith.constant 0 : index
    %c0_50 = arith.constant 0 : index
    %79 = vector.load %arg6[%c2_48, %c0_49, %c0_50] : memref<3x1x256xf32, #tpu.memory_space<vmem>>, vector<1x1x256xf32>
    %80 = vector.shape_cast %79 : vector<1x1x256xf32> to vector<1x256xf32>
    %81 = vector.broadcast %80 : vector<1x256xf32> to vector<8x256xf32>
    %82 = arith.addf %78, %81 : vector<8x256xf32>
    %c5 = arith.constant 5 : index
    %c0_51 = arith.constant 0 : index
    %83 = vector.load %arg2[%c5, %c0_51] : memref<7x256xf32, #tpu.memory_space<vmem>>, vector<1x256xf32>
    %84 = vector.shape_cast %83 : vector<1x256xf32> to vector<256xf32>
    %cst_52 = arith.constant 0.000000e+00 : f32
    %85 = vector.broadcast %cst_52 : f32 to vector<8x256xf32>
    %86 = arith.cmpf ogt, %82, %85 : vector<8x256xf32>
    %87 = vector.shape_cast %84 : vector<256xf32> to vector<1x256xf32>
    %88 = vector.broadcast %87 : vector<1x256xf32> to vector<8x256xf32>
    %89 = arith.mulf %88, %82 : vector<8x256xf32>
    %90 = arith.select %86, %82, %89 : vector<8x256xi1>, vector<8x256xf32>
    %c2_53 = arith.constant 2 : index
    %c0_54 = arith.constant 0 : index
    %c0_55 = arith.constant 0 : index
    %91 = vector.load %arg7[%c2_53, %c0_54, %c0_55] : memref<3x256x256xf32, #tpu.memory_space<vmem>>, vector<1x256x256xf32>
    %92 = vector.shape_cast %91 : vector<1x256x256xf32> to vector<256x256xf32>
    %cst_56 = arith.constant dense<0.000000e+00> : vector<8x256xf32>
    %93 = tpu.matmul %90, %92, %cst_56 {dimension_numbers = #tpu.dot_dimension_numbers<[1], [0], [0], [1], [0, 0, 1, 1], [], []>} : vector<8x256xf32>, vector<256x256xf32>, vector<8x256xf32> -> vector<8x256xf32>
    %c2_57 = arith.constant 2 : index
    %c0_58 = arith.constant 0 : index
    %c0_59 = arith.constant 0 : index
    %94 = vector.load %arg8[%c2_57, %c0_58, %c0_59] : memref<3x1x256xf32, #tpu.memory_space<vmem>>, vector<1x1x256xf32>
    %95 = vector.shape_cast %94 : vector<1x1x256xf32> to vector<1x256xf32>
    %96 = vector.broadcast %95 : vector<1x256xf32> to vector<8x256xf32>
    %97 = arith.addf %93, %96 : vector<8x256xf32>
    %c6 = arith.constant 6 : index
    %c0_60 = arith.constant 0 : index
    %98 = vector.load %arg2[%c6, %c0_60] : memref<7x256xf32, #tpu.memory_space<vmem>>, vector<1x256xf32>
    %99 = vector.shape_cast %98 : vector<1x256xf32> to vector<256xf32>
    %cst_61 = arith.constant 0.000000e+00 : f32
    %100 = vector.broadcast %cst_61 : f32 to vector<8x256xf32>
    %101 = arith.cmpf ogt, %97, %100 : vector<8x256xf32>
    %102 = vector.shape_cast %99 : vector<256xf32> to vector<1x256xf32>
    %103 = vector.broadcast %102 : vector<1x256xf32> to vector<8x256xf32>
    %104 = arith.mulf %103, %97 : vector<8x256xf32>
    %105 = arith.select %101, %97, %104 : vector<8x256xi1>, vector<8x256xf32>
    %106 = arith.addf %75, %105 : vector<8x256xf32>
    %c0_62 = arith.constant 0 : index
    %c0_63 = arith.constant 0 : index
    %107 = vector.load %arg9[%c0_62, %c0_63] : memref<256x128xf32, #tpu.memory_space<vmem>>, vector<256x128xf32>
    %cst_64 = arith.constant dense<0.000000e+00> : vector<8x128xf32>
    %108 = tpu.matmul %106, %107, %cst_64 {dimension_numbers = #tpu.dot_dimension_numbers<[1], [0], [0], [1], [0, 0, 1, 1], [], []>} : vector<8x256xf32>, vector<256x128xf32>, vector<8x128xf32> -> vector<8x128xf32>
    %c0_65 = arith.constant 0 : index
    %c0_66 = arith.constant 0 : index
    %109 = vector.load %arg10[%c0_65, %c0_66] : memref<1x128xf32, #tpu.memory_space<vmem>>, vector<1x128xf32>
    %110 = vector.broadcast %109 : vector<1x128xf32> to vector<8x128xf32>
    %111 = arith.addf %108, %110 : vector<8x128xf32>
    %c0_67 = arith.constant 0 : index
    %c0_68 = arith.constant 0 : index
    %112 = vector.load %arg11[%c0_67, %c0_68] : memref<8x128xf32, #tpu.memory_space<vmem>>, vector<8x128xf32>
    tpu.vector_store %arg11[%c0_67, %c0_68], %111 {strides = array<i32>} : memref<8x128xf32, #tpu.memory_space<vmem>>, vector<8x128xf32>,
    return
  }
  func.func @transform_0(%arg0: i32) -> (i32, i32) {
    %c0_i32 = arith.constant 0 : i32
    %c0_i32_0 = arith.constant 0 : i32
    return %arg0, %c0_i32 : i32, i32
  }
  func.func @transform_1(%arg0: i32) -> (i32, i32) {
    %c0_i32 = arith.constant 0 : i32
    %c0_i32_0 = arith.constant 0 : i32
    %c0_i32_1 = arith.constant 0 : i32
    return %c0_i32, %c0_i32_0 : i32, i32
  }
  func.func @transform_2(%arg0: i32) -> (i32, i32) {
    %c0_i32 = arith.constant 0 : i32
    %c0_i32_0 = arith.constant 0 : i32
    %c0_i32_1 = arith.constant 0 : i32
    return %c0_i32, %c0_i32_0 : i32, i32
  }
  func.func @transform_3(%arg0: i32) -> (i32, i32) {
    %c0_i32 = arith.constant 0 : i32
    %c0_i32_0 = arith.constant 0 : i32
    %c0_i32_1 = arith.constant 0 : i32
    return %c0_i32, %c0_i32_0 : i32, i32
  }
  func.func @transform_4(%arg0: i32) -> (i32, i32, i32) {
    %c0_i32 = arith.constant 0 : i32
    %c0_i32_0 = arith.constant 0 : i32
    %c0_i32_1 = arith.constant 0 : i32
    %c0_i32_2 = arith.constant 0 : i32
    return %c0_i32, %c0_i32_0, %c0_i32_1 : i32, i32, i32
  }
  func.func @transform_5(%arg0: i32) -> (i32, i32, i32) {
    %c0_i32 = arith.constant 0 : i32
    %c0_i32_0 = arith.constant 0 : i32
    %c0_i32_1 = arith.constant 0 : i32
    %c0_i32_2 = arith.constant 0 : i32
    return %c0_i32, %c0_i32_0, %c0_i32_1 : i32, i32, i32
  }
  func.func @transform_6(%arg0: i32) -> (i32, i32, i32) {
    %c0_i32 = arith.constant 0 : i32
    %c0_i32_0 = arith.constant 0 : i32
    %c0_i32_1 = arith.constant 0 : i32
    %c0_i32_2 = arith.constant 0 : i32
    return %c0_i32, %c0_i32_0, %c0_i32_1 : i32, i32, i32
  }
  func.func @transform_7(%arg0: i32) -> (i32, i32, i32) {
    %c0_i32 = arith.constant 0 : i32
    %c0_i32_0 = arith.constant 0 : i32
    %c0_i32_1 = arith.constant 0 : i32
    %c0_i32_2 = arith.constant 0 : i32
    return %c0_i32, %c0_i32_0, %c0_i32_1 : i32, i32, i32
  }
  func.func @transform_8(%arg0: i32) -> (i32, i32) {
    %c0_i32 = arith.constant 0 : i32
    %c0_i32_0 = arith.constant 0 : i32
    %c0_i32_1 = arith.constant 0 : i32
    return %c0_i32, %c0_i32_0 : i32, i32
  }
  func.func @transform_9(%arg0: i32) -> (i32, i32) {
    %c0_i32 = arith.constant 0 : i32
    %c0_i32_0 = arith.constant 0 : i32
    %c0_i32_1 = arith.constant 0 : i32
    return %c0_i32, %c0_i32_0 : i32, i32
  }
  func.func @transform_10(%arg0: i32) -> (i32, i32) {
    %c0_i32 = arith.constant 0 : i32
    %c0_i32_0 = arith.constant 0 : i32
    return %arg0, %c0_i32 : i32, i32
  }
}

module attributes {stable_mosaic.version = 11 : i64} {
  func.func @smpl_part_rf_kernel(%arg0: i32, %arg1: memref<8x32xf32, #tpu.memory_space<vmem>>, %arg2: memref<7x256xf32, #tpu.memory_space<vmem>>, %arg3: memref<32x256xf32, #tpu.memory_space<vmem>>, %arg4: memref<1x256xf32, #tpu.memory_space<vmem>>, %arg5: memref<3x256x256xf32, #tpu.memory_space<vmem>>, %arg6: memref<3x1x256xf32, #tpu.memory_space<vmem>>, %arg7: memref<3x256x256xf32, #tpu.memory_space<vmem>>, %arg8: memref<3x1x256xf32, #tpu.memory_space<vmem>>, %arg9: memref<256x128xf32, #tpu.memory_space<vmem>>, %arg10: memref<1x128xf32, #tpu.memory_space<vmem>>, %arg11: memref<8x128xf32, #tpu.memory_space<vmem>>) attributes {dimension_semantics = [#tpu.dimension_semantics<parallel>], iteration_bounds = array<i64: 1>, scalar_prefetch = 0 : i64, scratch_operands = 0 : i64, tpu.core_type = #tpu.core_type<tc>, window_params = [{transform_indices = @transform_0, window_bounds = array<i64: 8, 32>}, {pipeline_mode = #tpu.pipeline_mode<synchronous>, transform_indices = @transform_1, window_bounds = array<i64: 7, 256>}, {pipeline_mode = #tpu.pipeline_mode<synchronous>, transform_indices = @transform_2, window_bounds = array<i64: 32, 256>}, {pipeline_mode = #tpu.pipeline_mode<synchronous>, transform_indices = @transform_3, window_bounds = array<i64: 1, 256>}, {pipeline_mode = #tpu.pipeline_mode<synchronous>, transform_indices = @transform_4, window_bounds = array<i64: 3, 256, 256>}, {pipeline_mode = #tpu.pipeline_mode<synchronous>, transform_indices = @transform_5, window_bounds = array<i64: 3, 1, 256>}, {pipeline_mode = #tpu.pipeline_mode<synchronous>, transform_indices = @transform_6, window_bounds = array<i64: 3, 256, 256>}, {pipeline_mode = #tpu.pipeline_mode<synchronous>, transform_indices = @transform_7, window_bounds = array<i64: 3, 1, 256>}, {pipeline_mode = #tpu.pipeline_mode<synchronous>, transform_indices = @transform_8, window_bounds = array<i64: 256, 128>}, {pipeline_mode = #tpu.pipeline_mode<synchronous>, transform_indices = @transform_9, window_bounds = array<i64: 1, 128>}, {transform_indices = @transform_10, window_bounds = array<i64: 8, 128>}]} {
    %c0 = arith.constant 0 : index
    %c0_0 = arith.constant 0 : index
    %0 = vector.load %arg1[%c0, %c0_0] : memref<8x32xf32, #tpu.memory_space<vmem>>, vector<8x32xf32>
    %c0_1 = arith.constant 0 : index
    %c0_2 = arith.constant 0 : index
    %1 = vector.load %arg3[%c0_1, %c0_2] : memref<32x256xf32, #tpu.memory_space<vmem>>, vector<32x256xf32>
    %cst = arith.constant dense<0.000000e+00> : vector<8x256xf32>
    %2 = tpu.matmul %0, %1, %cst {dimension_numbers = #tpu.dot_dimension_numbers<[1], [0], [0], [1], [0, 0, 1, 1], [], []>} : vector<8x32xf32>, vector<32x256xf32>, vector<8x256xf32> -> vector<8x256xf32>
    %c0_3 = arith.constant 0 : index
    %c0_4 = arith.constant 0 : index
    %3 = vector.load %arg4[%c0_3, %c0_4] : memref<1x256xf32, #tpu.memory_space<vmem>>, vector<1x256xf32>
    %4 = vector.broadcast %3 : vector<1x256xf32> to vector<8x256xf32>
    %5 = arith.addf %2, %4 : vector<8x256xf32>
    %c0_5 = arith.constant 0 : index
    %c0_6 = arith.constant 0 : index
    %6 = vector.load %arg2[%c0_5, %c0_6] : memref<7x256xf32, #tpu.memory_space<vmem>>, vector<1x256xf32>
    %7 = vector.shape_cast %6 : vector<1x256xf32> to vector<256xf32>
    %cst_7 = arith.constant 0.000000e+00 : f32
    %8 = vector.broadcast %cst_7 : f32 to vector<8x256xf32>
    %9 = arith.cmpf ogt, %5, %8 : vector<8x256xf32>
    %10 = vector.shape_cast %7 : vector<256xf32> to vector<1x256xf32>
    %11 = vector.broadcast %10 : vector<1x256xf32> to vector<8x256xf32>
    %12 = arith.mulf %11, %5 : vector<8x256xf32>
    %13 = arith.select %9, %5, %12 : vector<8x256xi1>, vector<8x256xf32>
    %c0_8 = arith.constant 0 : index
    %c0_9 = arith.constant 0 : index
    %c0_10 = arith.constant 0 : index
    %14 = vector.load %arg5[%c0_8, %c0_9, %c0_10] : memref<3x256x256xf32, #tpu.memory_space<vmem>>, vector<1x256x256xf32>
    %15 = vector.shape_cast %14 : vector<1x256x256xf32> to vector<256x256xf32>
    %cst_11 = arith.constant dense<0.000000e+00> : vector<8x256xf32>
    %16 = tpu.matmul %13, %15, %cst_11 {dimension_numbers = #tpu.dot_dimension_numbers<[1], [0], [0], [1], [0, 0, 1, 1], [], []>} : vector<8x256xf32>, vector<256x256xf32>, vector<8x256xf32> -> vector<8x256xf32>
    %c0_12 = arith.constant 0 : index
    %c0_13 = arith.constant 0 : index
    %c0_14 = arith.constant 0 : index
    %17 = vector.load %arg6[%c0_12, %c0_13, %c0_14] : memref<3x1x256xf32, #tpu.memory_space<vmem>>, vector<1x1x256xf32>
    %18 = vector.shape_cast %17 : vector<1x1x256xf32> to vector<1x256xf32>
    %19 = vector.broadcast %18 : vector<1x256xf32> to vector<8x256xf32>
    %20 = arith.addf %16, %19 : vector<8x256xf32>
    %c1 = arith.constant 1 : index
    %c0_15 = arith.constant 0 : index
    %21 = vector.load %arg2[%c1, %c0_15] : memref<7x256xf32, #tpu.memory_space<vmem>>, vector<1x256xf32>
    %22 = vector.shape_cast %21 : vector<1x256xf32> to vector<256xf32>
    %cst_16 = arith.constant 0.000000e+00 : f32
    %23 = vector.broadcast %cst_16 : f32 to vector<8x256xf32>
    %24 = arith.cmpf ogt, %20, %23 : vector<8x256xf32>
    %25 = vector.shape_cast %22 : vector<256xf32> to vector<1x256xf32>
    %26 = vector.broadcast %25 : vector<1x256xf32> to vector<8x256xf32>
    %27 = arith.mulf %26, %20 : vector<8x256xf32>
    %28 = arith.select %24, %20, %27 : vector<8x256xi1>, vector<8x256xf32>
    %c0_17 = arith.constant 0 : index
    %c0_18 = arith.constant 0 : index
    %c0_19 = arith.constant 0 : index
    %29 = vector.load %arg7[%c0_17, %c0_18, %c0_19] : memref<3x256x256xf32, #tpu.memory_space<vmem>>, vector<1x256x256xf32>
    %30 = vector.shape_cast %29 : vector<1x256x256xf32> to vector<256x256xf32>
    %cst_20 = arith.constant dense<0.000000e+00> : vector<8x256xf32>
    %31 = tpu.matmul %28, %30, %cst_20 {dimension_numbers = #tpu.dot_dimension_numbers<[1], [0], [0], [1], [0, 0, 1, 1], [], []>} : vector<8x256xf32>, vector<256x256xf32>, vector<8x256xf32> -> vector<8x256xf32>
    %c0_21 = arith.constant 0 : index
    %c0_22 = arith.constant 0 : index
    %c0_23 = arith.constant 0 : index
    %32 = vector.load %arg8[%c0_21, %c0_22, %c0_23] : memref<3x1x256xf32, #tpu.memory_space<vmem>>, vector<1x1x256xf32>
    %33 = vector.shape_cast %32 : vector<1x1x256xf32> to vector<1x256xf32>
    %34 = vector.broadcast %33 : vector<1x256xf32> to vector<8x256xf32>
    %35 = arith.addf %31, %34 : vector<8x256xf32>
    %c2 = arith.constant 2 : index
    %c0_24 = arith.constant 0 : index
    %36 = vector.load %arg2[%c2, %c0_24] : memref<7x256xf32, #tpu.memory_space<vmem>>, vector<1x256xf32>
    %37 = vector.shape_cast %36 : vector<1x256xf32> to vector<256xf32>
    %cst_25 = arith.constant 0.000000e+00 : f32
    %38 = vector.broadcast %cst_25 : f32 to vector<8x256xf32>
    %39 = arith.cmpf ogt, %35, %38 : vector<8x256xf32>
    %40 = vector.shape_cast %37 : vector<256xf32> to vector<1x256xf32>
    %41 = vector.broadcast %40 : vector<1x256xf32> to vector<8x256xf32>
    %42 = arith.mulf %41, %35 : vector<8x256xf32>
    %43 = arith.select %39, %35, %42 : vector<8x256xi1>, vector<8x256xf32>
    %44 = arith.addf %13, %43 : vector<8x256xf32>
    %c1_26 = arith.constant 1 : index
    %c0_27 = arith.constant 0 : index
    %c0_28 = arith.constant 0 : index
    %45 = vector.load %arg5[%c1_26, %c0_27, %c0_28] : memref<3x256x256xf32, #tpu.memory_space<vmem>>, vector<1x256x256xf32>
    %46 = vector.shape_cast %45 : vector<1x256x256xf32> to vector<256x256xf32>
    %cst_29 = arith.constant dense<0.000000e+00> : vector<8x256xf32>
    %47 = tpu.matmul %44, %46, %cst_29 {dimension_numbers = #tpu.dot_dimension_numbers<[1], [0], [0], [1], [0, 0, 1, 1], [], []>} : vector<8x256xf32>, vector<256x256xf32>, vector<8x256xf32> -> vector<8x256xf32>
    %c1_30 = arith.constant 1 : index
    %c0_31 = arith.constant 0 : index
    %c0_32 = arith.constant 0 : index
    %48 = vector.load %arg6[%c1_30, %c0_31, %c0_32] : memref<3x1x256xf32, #tpu.memory_space<vmem>>, vector<1x1x256xf32>
    %49 = vector.shape_cast %48 : vector<1x1x256xf32> to vector<1x256xf32>
    %50 = vector.broadcast %49 : vector<1x256xf32> to vector<8x256xf32>
    %51 = arith.addf %47, %50 : vector<8x256xf32>
    %c3 = arith.constant 3 : index
    %c0_33 = arith.constant 0 : index
    %52 = vector.load %arg2[%c3, %c0_33] : memref<7x256xf32, #tpu.memory_space<vmem>>, vector<1x256xf32>
    %53 = vector.shape_cast %52 : vector<1x256xf32> to vector<256xf32>
    %cst_34 = arith.constant 0.000000e+00 : f32
    %54 = vector.broadcast %cst_34 : f32 to vector<8x256xf32>
    %55 = arith.cmpf ogt, %51, %54 : vector<8x256xf32>
    %56 = vector.shape_cast %53 : vector<256xf32> to vector<1x256xf32>
    %57 = vector.broadcast %56 : vector<1x256xf32> to vector<8x256xf32>
    %58 = arith.mulf %57, %51 : vector<8x256xf32>
    %59 = arith.select %55, %51, %58 : vector<8x256xi1>, vector<8x256xf32>
    %c1_35 = arith.constant 1 : index
    %c0_36 = arith.constant 0 : index
    %c0_37 = arith.constant 0 : index
    %60 = vector.load %arg7[%c1_35, %c0_36, %c0_37] : memref<3x256x256xf32, #tpu.memory_space<vmem>>, vector<1x256x256xf32>
    %61 = vector.shape_cast %60 : vector<1x256x256xf32> to vector<256x256xf32>
    %cst_38 = arith.constant dense<0.000000e+00> : vector<8x256xf32>
    %62 = tpu.matmul %59, %61, %cst_38 {dimension_numbers = #tpu.dot_dimension_numbers<[1], [0], [0], [1], [0, 0, 1, 1], [], []>} : vector<8x256xf32>, vector<256x256xf32>, vector<8x256xf32> -> vector<8x256xf32>
    %c1_39 = arith.constant 1 : index
    %c0_40 = arith.constant 0 : index
    %c0_41 = arith.constant 0 : index
    %63 = vector.load %arg8[%c1_39, %c0_40, %c0_41] : memref<3x1x256xf32, #tpu.memory_space<vmem>>, vector<1x1x256xf32>
    %64 = vector.shape_cast %63 : vector<1x1x256xf32> to vector<1x256xf32>
    %65 = vector.broadcast %64 : vector<1x256xf32> to vector<8x256xf32>
    %66 = arith.addf %62, %65 : vector<8x256xf32>
    %c4 = arith.constant 4 : index
    %c0_42 = arith.constant 0 : index
    %67 = vector.load %arg2[%c4, %c0_42] : memref<7x256xf32, #tpu.memory_space<vmem>>, vector<1x256xf32>
    %68 = vector.shape_cast %67 : vector<1x256xf32> to vector<256xf32>
    %cst_43 = arith.constant 0.000000e+00 : f32
    %69 = vector.broadcast %cst_43 : f32 to vector<8x256xf32>
    %70 = arith.cmpf ogt, %66, %69 : vector<8x256xf32>
    %71 = vector.shape_cast %68 : vector<256xf32> to vector<1x256xf32>
    %72 = vector.broadcast %71 : vector<1x256xf32> to vector<8x256xf32>
    %73 = arith.mulf %72, %66 : vector<8x256xf32>
    %74 = arith.select %70, %66, %73 : vector<8x256xi1>, vector<8x256xf32>
    %75 = arith.addf %44, %74 : vector<8x256xf32>
    %c2_44 = arith.constant 2 : index
    %c0_45 = arith.constant 0 : index
    %c0_46 = arith.constant 0 : index
    %76 = vector.load %arg5[%c2_44, %c0_45, %c0_46] : memref<3x256x256xf32, #tpu.memory_space<vmem>>, vector<1x256x256xf32>
    %77 = vector.shape_cast %76 : vector<1x256x256xf32> to vector<256x256xf32>
    %cst_47 = arith.constant dense<0.000000e+00> : vector<8x256xf32>
    %78 = tpu.matmul %75, %77, %cst_47 {dimension_numbers = #tpu.dot_dimension_numbers<[1], [0], [0], [1], [0, 0, 1, 1], [], []>} : vector<8x256xf32>, vector<256x256xf32>, vector<8x256xf32> -> vector<8x256xf32>
    %c2_48 = arith.constant 2 : index
    %c0_49 = arith.constant 0 : index
    %c0_50 = arith.constant 0 : index
    %79 = vector.load %arg6[%c2_48, %c0_49, %c0_50] : memref<3x1x256xf32, #tpu.memory_space<vmem>>, vector<1x1x256xf32>
    %80 = vector.shape_cast %79 : vector<1x1x256xf32> to vector<1x256xf32>
    %81 = vector.broadcast %80 : vector<1x256xf32> to vector<8x256xf32>
    %82 = arith.addf %78, %81 : vector<8x256xf32>
    %c5 = arith.constant 5 : index
    %c0_51 = arith.constant 0 : index
    %83 = vector.load %arg2[%c5, %c0_51] : memref<7x256xf32, #tpu.memory_space<vmem>>, vector<1x256xf32>
    %84 = vector.shape_cast %83 : vector<1x256xf32> to vector<256xf32>
    %cst_52 = arith.constant 0.000000e+00 : f32
    %85 = vector.broadcast %cst_52 : f32 to vector<8x256xf32>
    %86 = arith.cmpf ogt, %82, %85 : vector<8x256xf32>
    %87 = vector.shape_cast %84 : vector<256xf32> to vector<1x256xf32>
    %88 = vector.broadcast %87 : vector<1x256xf32> to vector<8x256xf32>
    %89 = arith.mulf %88, %82 : vector<8x256xf32>
    %90 = arith.select %86, %82, %89 : vector<8x256xi1>, vector<8x256xf32>
    %c2_53 = arith.constant 2 : index
    %c0_54 = arith.constant 0 : index
    %c0_55 = arith.constant 0 : index
    %91 = vector.load %arg7[%c2_53, %c0_54, %c0_55] : memref<3x256x256xf32, #tpu.memory_space<vmem>>, vector<1x256x256xf32>
    %92 = vector.shape_cast %91 : vector<1x256x256xf32> to vector<256x256xf32>
    %cst_56 = arith.constant dense<0.000000e+00> : vector<8x256xf32>
    %93 = tpu.matmul %90, %92, %cst_56 {dimension_numbers = #tpu.dot_dimension_numbers<[1], [0], [0], [1], [0, 0, 1, 1], [], []>} : vector<8x256xf32>, vector<256x256xf32>, vector<8x256xf32> -> vector<8x256xf32>
    %c2_57 = arith.constant 2 : index
    %c0_58 = arith.constant 0 : index
    %c0_59 = arith.constant 0 : index
    %94 = vector.load %arg8[%c2_57, %c0_58, %c0_59] : memref<3x1x256xf32, #tpu.memory_space<vmem>>, vector<1x1x256xf32>
    %95 = vector.shape_cast %94 : vector<1x1x256xf32> to vector<1x256xf32>
    %96 = vector.broadcast %95 : vector<1x256xf32> to vector<8x256xf32>
    %97 = arith.addf %93, %96 : vector<8x256xf32>
    %c6 = arith.constant 6 : index
    %c0_60 = arith.constant 0 : index
    %98 = vector.load %arg2[%c6, %c0_60] : memref<7x256xf32, #tpu.memory_space<vmem>>, vector<1x256xf32>
    %99 = vector.shape_cast %98 : vector<1x256xf32> to vector<256xf32>
    %cst_61 = arith.constant 0.000000e+00 : f32
    %100 = vector.broadcast %cst_61 : f32 to vector<8x256xf32>
    %101 = arith.cmpf ogt, %97, %100 : vector<8x256xf32>
    %102 = vector.shape_cast %99 : vector<256xf32> to vector<1x256xf32>
    %103 = vector.broadcast %102 : vector<1x256xf32> to vector<8x256xf32>
    %104 = arith.mulf %103, %97 : vector<8x256xf32>
    %105 = arith.select %101, %97, %104 : vector<8x256xi1>, vector<8x256xf32>
    %106 = arith.addf %75, %105 : vector<8x256xf32>
    %c0_62 = arith.constant 0 : index
    %c0_63 = arith.constant 0 : index
    %107 = vector.load %arg9[%c0_62, %c0_63] : memref<256x128xf32, #tpu.memory_space<vmem>>, vector<256x128xf32>
    %cst_64 = arith.constant dense<0.000000e+00> : vector<8x128xf32>
    %108 = tpu.matmul %106, %107, %cst_64 {dimension_numbers = #tpu.dot_dimension_numbers<[1], [0], [0], [1], [0, 0, 1, 1], [], []>} : vector<8x256xf32>, vector<256x128xf32>, vector<8x128xf32> -> vector<8x128xf32>
    %c0_65 = arith.constant 0 : index
    %c0_66 = arith.constant 0 : index
    %109 = vector.load %arg10[%c0_65, %c0_66] : memref<1x128xf32, #tpu.memory_space<vmem>>, vector<1x128xf32>
    %110 = vector.broadcast %109 : vector<1x128xf32> to vector<8x128xf32>
    %111 = arith.addf %108, %110 : vector<8x128xf32>
    %c0_67 = arith.constant 0 : index
    %c0_68 = arith.constant 0 : index
    %112 = vector.load %arg11[%c0_67, %c0_68] : memref<8x128xf32, #tpu.memory_space<vmem>>, vector<8x128xf32>
    tpu.vector_store %arg11[%c0_67, %c0_68], %111 {strides = array<i32>} : memref<8x128xf32, #tpu.memory_space<vmem>>, vector<8x128xf32>,
    return
  }
  func.func @transform_0(%arg0: i32) -> (i32, i32) {
    %c0_i32 = arith.constant 0 : i32
    %c0_i32_0 = arith.constant 0 : i32
    return %arg0, %c0_i32 : i32, i32
  }
  func.func @transform_1(%arg0: i32) -> (i32, i32) {
    %c0_i32 = arith.constant 0 : i32
    %c0_i32_0 = arith.constant 0 : i32
    %c0_i32_1 = arith.constant 0 : i32
    return %c0_i32, %c0_i32_0 : i32, i32
  }
  func.func @transform_2(%arg0: i32) -> (i32, i32) {
    %c0_i32 = arith.constant 0 : i32
    %c0_i32_0 = arith.constant 0 : i32
    %c0_i32_1 = arith.constant 0 : i32
    return %c0_i32, %c0_i32_0 : i32, i32
  }
  func.func @transform_3(%arg0: i32) -> (i32, i32) {
    %c0_i32 = arith.constant 0 : i32
    %c0_i32_0 = arith.constant 0 : i32
    %c0_i32_1 = arith.constant 0 : i32
    return %c0_i32, %c0_i32_0 : i32, i32
  }
  func.func @transform_4(%arg0: i32) -> (i32, i32, i32) {
    %c0_i32 = arith.constant 0 : i32
    %c0_i32_0 = arith.constant 0 : i32
    %c0_i32_1 = arith.constant 0 : i32
    %c0_i32_2 = arith.constant 0 : i32
    return %c0_i32, %c0_i32_0, %c0_i32_1 : i32, i32, i32
  }
  func.func @transform_5(%arg0: i32) -> (i32, i32, i32) {
    %c0_i32 = arith.constant 0 : i32
    %c0_i32_0 = arith.constant 0 : i32
    %c0_i32_1 = arith.constant 0 : i32
    %c0_i32_2 = arith.constant 0 : i32
    return %c0_i32, %c0_i32_0, %c0_i32_1 : i32, i32, i32
  }
  func.func @transform_6(%arg0: i32) -> (i32, i32, i32) {
    %c0_i32 = arith.constant 0 : i32
    %c0_i32_0 = arith.constant 0 : i32
    %c0_i32_1 = arith.constant 0 : i32
    %c0_i32_2 = arith.constant 0 : i32
    return %c0_i32, %c0_i32_0, %c0_i32_1 : i32, i32, i32
  }
  func.func @transform_7(%arg0: i32) -> (i32, i32, i32) {
    %c0_i32 = arith.constant 0 : i32
    %c0_i32_0 = arith.constant 0 : i32
    %c0_i32_1 = arith.constant 0 : i32
    %c0_i32_2 = arith.constant 0 : i32
    return %c0_i32, %c0_i32_0, %c0_i32_1 : i32, i32, i32
  }
  func.func @transform_8(%arg0: i32) -> (i32, i32) {
    %c0_i32 = arith.constant 0 : i32
    %c0_i32_0 = arith.constant 0 : i32
    %c0_i32_1 = arith.constant 0 : i32
    return %c0_i32, %c0_i32_0 : i32, i32
  }
  func.func @transform_9(%arg0: i32) -> (i32, i32) {
    %c0_i32 = arith.constant 0 : i32
    %c0_i32_0 = arith.constant 0 : i32
    %c0_i32_1 = arith.constant 0 : i32
    return %c0_i32, %c0_i32_0 : i32, i32
  }
  func.func @transform_10(%arg0: i32) -> (i32, i32) {
    %c0_i32 = arith.constant 0 : i32
    %c0_i32_0 = arith.constant 0 : i32
    return %arg0, %c0_i32 : i32, i32
  }
}

</mosaic_0001>

<llo_original>
// kernel: tpu_custom_call.1
$region0: #{tpu_custom_call.1}
  #allocation0 [shape = 'u32[]', space=smem, size = 0x4, offset = 0x4, fixed_abs, tag = 'smem constant byte address 0x4 - core index']
  #allocation1 [shape = 'u32[72,128]{1,0:T(1,128)}', space=vmem, size = 0x9000, scoped, tag = 'internal scratch']
  %s0 = inlined_call_operand.hbm [shape: f32[8,32], index: 0, kind: input, shape index: {}]
  %s1 = inlined_call_operand.hbm [shape: f32[7,256], index: 1, kind: input, shape index: {}]
  %s2 = inlined_call_operand.hbm [shape: f32[32,256], index: 2, kind: input, shape index: {}]
  %s3 = inlined_call_operand.hbm [shape: f32[1,256], index: 3, kind: input, shape index: {}]
  %s4 = inlined_call_operand.hbm [shape: f32[3,256,256], index: 4, kind: input, shape index: {}]
  %s5 = inlined_call_operand.hbm [shape: f32[3,1,256], index: 5, kind: input, shape index: {}]
  %s6 = inlined_call_operand.hbm [shape: f32[3,256,256], index: 6, kind: input, shape index: {}]
  %s7 = inlined_call_operand.vmem [shape: f32[3,1,256], index: 7, kind: input, shape index: {}]
  %s8 = inlined_call_operand.hbm [shape: f32[256,128], index: 8, kind: input, shape index: {}]
  %s9 = inlined_call_operand.vmem [shape: f32[1,128], index: 9, kind: input, shape index: {}]
  %s10 = inlined_call_operand.hbm [shape: f32[8,128], index: 10, kind: output, shape index: {}]
  %s11 = sld [smem:[#allocation0]]
  $region82: #{tpu_custom_call.1} parent=0
    _
  %s13 = ssub.s32 1, %s11
  %s14 = scalar_select 0, %s13, %s11
  $region1: #{tpu_custom_call.1} parent=0
    #allocation2 [shape = 'u8[4096]{0}', space=vmem, size = 0x1000, scoped, tag = 'input window, operand 0, single buffered']
    #allocation3 [shape = 's32[1]{0}', space=sflag, size = 0x4, scoped, tag = 'scoped memory for tpu_custom_call.1']
    #allocation4 [shape = 's32[1]{0}', space=sflag, size = 0x4, scoped, tag = 'scoped memory for tpu_custom_call.1']
    #allocation5 [shape = 'u8[8192]{0}', space=vmem, size = 0x2000, scoped, tag = 'input window, operand 1, single buffered']
    #allocation6 [shape = 's32[1]{0}', space=sflag, size = 0x4, scoped, tag = 'scoped memory for tpu_custom_call.1']
    #allocation7 [shape = 'u8[32768]{0}', space=vmem, size = 0x8000, scoped, tag = 'input window, operand 2, single buffered']
    #allocation8 [shape = 'u8[1024]{0}', space=vmem, size = 0x400, scoped, tag = 'input window, operand 3, single buffered']
    #allocation9 [shape = 's32[1]{0}', space=sflag, size = 0x4, scoped, tag = 'scoped memory for tpu_custom_call.1']
    #allocation10 [shape = 'u8[786432]{0}', space=vmem, size = 0xc0000, scoped, tag = 'input window, operand 4, single buffered']
    #allocation11 [shape = 'u8[3072]{0}', space=vmem, size = 0xc00, scoped, tag = 'input window, operand 5, single buffered']
    #allocation12 [shape = 's32[1]{0}', space=sflag, size = 0x4, scoped, tag = 'scoped memory for tpu_custom_call.1']
    #allocation13 [shape = 'u8[786432]{0}', space=vmem, size = 0xc0000, scoped, tag = 'input window, operand 6, single buffered']
    #allocation14 [shape = 'u8[131072]{0}', space=vmem, size = 0x20000, scoped, tag = 'input window, operand 8, single buffered']
    #allocation15 [shape = 's32[1]{0}', space=sflag, size = 0x4, scoped, tag = 'scoped memory for tpu_custom_call.1']
    #allocation16 [shape = 'u8[4096]{0}', space=vmem, size = 0x1000, scoped, tag = 'output window, operand 0, single buffered']
    %15 = vsyncpa [#allocation3], 0
    %16 = vsyncpa [#allocation6], 0
    %17 = vsyncpa [#allocation9], 0
    %18 = vsyncpa [#allocation12], 0
    %19 = vsyncpa [#allocation15], 0
    %20 = vsyncpa [#allocation4], 0
    // Predicated region
    $region2: #{tpu_custom_call.1} parent=1 // pred_check
      _
    $region3: #{tpu_custom_call.1} parent=1 // pred_check_branch
      %22 = sbr.rel (0) target = $region5
    $region4: #{tpu_custom_call.1} parent=1 // pred_region
      %24 = vsyncadd [#allocation3], 0
      %s26 = sshll.u32 %s0, 4
      %s27 = int_to_ptr.hbm [resolvable:$true] %s26
      %s28 = sshll.u32 [#allocation2], 4
      %s29 = int_to_ptr.vmem [resolvable:$true] %s28
      %31 = dma.hbm_to_vmem [thread:$0]  %s27, 128, %s29, [#allocation3]
    $region5: #{tpu_custom_call.1} parent=1 // pred_fallthru
      _
    // Predicated region
    $region6: #{tpu_custom_call.1} parent=1 // pred_check
      _
    $region7: #{tpu_custom_call.1} parent=1 // pred_check_branch
      %33 = sbr.rel (0) target = $region9
    $region8: #{tpu_custom_call.1} parent=1 // pred_region
      %35 = vsyncadd [#allocation6], 0
      %s37 = sshll.u32 %s1, 4
      %s38 = int_to_ptr.hbm [resolvable:$true] %s37
      %s39 = sshll.u32 [#allocation5], 4
      %s40 = int_to_ptr.vmem [resolvable:$true] %s39
      %42 = dma.hbm_to_vmem [thread:$0]  %s38, 256, %s40, [#allocation6]
    $region9: #{tpu_custom_call.1} parent=1 // pred_fallthru
      _
    // Predicated region
    $region10: #{tpu_custom_call.1} parent=1 // pred_check
      _
    $region11: #{tpu_custom_call.1} parent=1 // pred_check_branch
      %44 = sbr.rel (0) target = $region13
    $region12: #{tpu_custom_call.1} parent=1 // pred_region
      %46 = vsyncadd [#allocation6], 0
      %s47 = sshll.u32 %s2, 4
      %s48 = int_to_ptr.hbm [resolvable:$true] %s47
      %s49 = sshll.u32 [#allocation7], 4
      %s50 = int_to_ptr.vmem [resolvable:$true] %s49
      %55 = dma.hbm_to_vmem [thread:$0]  %s48, 1024, %s50, [#allocation6], 256, 256, 16
    $region13: #{tpu_custom_call.1} parent=1 // pred_fallthru
      _
    // Predicated region
    $region14: #{tpu_custom_call.1} parent=1 // pred_check
      _
    $region15: #{tpu_custom_call.1} parent=1 // pred_check_branch
      %57 = sbr.rel (0) target = $region17
    $region16: #{tpu_custom_call.1} parent=1 // pred_region
      %59 = vsyncadd [#allocation9], 0
      %s61 = sshll.u32 %s3, 4
      %s62 = int_to_ptr.hbm [resolvable:$true] %s61
      %s63 = sshll.u32 [#allocation8], 4
      %s64 = int_to_ptr.vmem [resolvable:$true] %s63
      %66 = dma.hbm_to_vmem [thread:$0]  %s62, 32, %s64, [#allocation9]
    $region17: #{tpu_custom_call.1} parent=1 // pred_fallthru
      _
    // Predicated region
    $region18: #{tpu_custom_call.1} parent=1 // pred_check
      _
    $region19: #{tpu_custom_call.1} parent=1 // pred_check_branch
      %68 = sbr.rel (0) target = $region21
    $region20: #{tpu_custom_call.1} parent=1 // pred_region
      %70 = vsyncadd [#allocation9], 0
      %s71 = sshll.u32 %s4, 4
      %s72 = int_to_ptr.hbm [resolvable:$true] %s71
      %s73 = sshll.u32 [#allocation10], 4
      %s74 = int_to_ptr.vmem [resolvable:$true] %s73
      %79 = dma.hbm_to_vmem [thread:$0]  %s72, 24576, %s74, [#allocation9], 256, 256, 16
    $region21: #{tpu_custom_call.1} parent=1 // pred_fallthru
      _
    // Predicated region
    $region22: #{tpu_custom_call.1} parent=1 // pred_check
      _
    $region23: #{tpu_custom_call.1} parent=1 // pred_check_branch
      %81 = sbr.rel (0) target = $region25
    $region24: #{tpu_custom_call.1} parent=1 // pred_region
      %83 = vsyncadd [#allocation12], 0
      %s84 = sshll.u32 %s5, 4
      %s85 = int_to_ptr.hbm [resolvable:$true] %s84
      %s86 = sshll.u32 [#allocation11], 4
      %s87 = int_to_ptr.vmem [resolvable:$true] %s86
      %92 = dma.hbm_to_vmem [thread:$0]  %s85, 96, %s87, [#allocation12], 32, 32, 2
    $region25: #{tpu_custom_call.1} parent=1 // pred_fallthru
      _
    // Predicated region
    $region26: #{tpu_custom_call.1} parent=1 // pred_check
      _
    $region27: #{tpu_custom_call.1} parent=1 // pred_check_branch
      %94 = sbr.rel (0) target = $region29
    $region28: #{tpu_custom_call.1} parent=1 // pred_region
      %96 = vsyncadd [#allocation12], 0
      %s97 = sshll.u32 %s6, 4
      %s98 = int_to_ptr.hbm [resolvable:$true] %s97
      %s99 = sshll.u32 [#allocation13], 4
      %s100 = int_to_ptr.vmem [resolvable:$true] %s99
      %105 = dma.hbm_to_vmem [thread:$0]  %s98, 24576, %s100, [#allocation12], 256, 256, 16
    $region29: #{tpu_custom_call.1} parent=1 // pred_fallthru
      _
    // Predicated region
    $region30: #{tpu_custom_call.1} parent=1 // pred_check
      _
    $region31: #{tpu_custom_call.1} parent=1 // pred_check_branch
      %107 = sbr.rel (0) target = $region33
    $region32: #{tpu_custom_call.1} parent=1 // pred_region
      _
    $region33: #{tpu_custom_call.1} parent=1 // pred_fallthru
      _
    // Predicated region
    $region34: #{tpu_custom_call.1} parent=1 // pred_check
      _
    $region35: #{tpu_custom_call.1} parent=1 // pred_check_branch
      %109 = sbr.rel (0) target = $region37
    $region36: #{tpu_custom_call.1} parent=1 // pred_region
      %111 = vsyncadd [#allocation15], 0
      %s112 = sshll.u32 %s8, 4
      %s113 = int_to_ptr.hbm [resolvable:$true] %s112
      %s114 = sshll.u32 [#allocation14], 4
      %s115 = int_to_ptr.vmem [resolvable:$true] %s114
      %120 = dma.hbm_to_vmem [thread:$0]  %s113, 4096, %s115, [#allocation15], 128, 128, 8
    $region37: #{tpu_custom_call.1} parent=1 // pred_fallthru
      _
    // Predicated region
    $region38: #{tpu_custom_call.1} parent=1 // pred_check
      _
    $region39: #{tpu_custom_call.1} parent=1 // pred_check_branch
      %122 = sbr.rel (0) target = $region41
    $region40: #{tpu_custom_call.1} parent=1 // pred_region
      _
    $region41: #{tpu_custom_call.1} parent=1 // pred_fallthru
      _
    // Predicated region
    $region42: #{tpu_custom_call.1} parent=1 // pred_check
      _
    $region43: #{tpu_custom_call.1} parent=1 // pred_check_branch
      %124 = sbr.rel (0) target = $region45
    $region44: #{tpu_custom_call.1} parent=1 // pred_region
      %126 = dma.done [#allocation3], 128
    $region45: #{tpu_custom_call.1} parent=1 // pred_fallthru
      _
    // Predicated region
    $region46: #{tpu_custom_call.1} parent=1 // pred_check
      _
    $region47: #{tpu_custom_call.1} parent=1 // pred_check_branch
      %128 = sbr.rel (0) target = $region49
    $region48: #{tpu_custom_call.1} parent=1 // pred_region
      %130 = dma.done [#allocation6], 256
    $region49: #{tpu_custom_call.1} parent=1 // pred_fallthru
      _
    // Predicated region
    $region50: #{tpu_custom_call.1} parent=1 // pred_check
      _
    $region51: #{tpu_custom_call.1} parent=1 // pred_check_branch
      %132 = sbr.rel (0) target = $region53
    $region52: #{tpu_custom_call.1} parent=1 // pred_region
      %134 = dma.done [#allocation6], 1024
    $region53: #{tpu_custom_call.1} parent=1 // pred_fallthru
      _
    // Predicated region
    $region54: #{tpu_custom_call.1} parent=1 // pred_check
      _
    $region55: #{tpu_custom_call.1} parent=1 // pred_check_branch
      %136 = sbr.rel (0) target = $region57
    $region56: #{tpu_custom_call.1} parent=1 // pred_region
      %138 = dma.done [#allocation9], 32
    $region57: #{tpu_custom_call.1} parent=1 // pred_fallthru
      _
    // Predicated region
    $region58: #{tpu_custom_call.1} parent=1 // pred_check
      _
    $region59: #{tpu_custom_call.1} parent=1 // pred_check_branch
      %140 = sbr.rel (0) target = $region61
    $region60: #{tpu_custom_call.1} parent=1 // pred_region
      %142 = dma.done [#allocation9], 24576
    $region61: #{tpu_custom_call.1} parent=1 // pred_fallthru
      _
    // Predicated region
    $region62: #{tpu_custom_call.1} parent=1 // pred_check
      _
    $region63: #{tpu_custom_call.1} parent=1 // pred_check_branch
      %144 = sbr.rel (0) target = $region65
    $region64: #{tpu_custom_call.1} parent=1 // pred_region
      %146 = dma.done [#allocation12], 96
    $region65: #{tpu_custom_call.1} parent=1 // pred_fallthru
      _
    // Predicated region
    $region66: #{tpu_custom_call.1} parent=1 // pred_check
      _
    $region67: #{tpu_custom_call.1} parent=1 // pred_check_branch
      %148 = sbr.rel (0) target = $region69
    $region68: #{tpu_custom_call.1} parent=1 // pred_region
      %150 = dma.done [#allocation12], 24576
    $region69: #{tpu_custom_call.1} parent=1 // pred_fallthru
      _
    // Predicated region
    $region70: #{tpu_custom_call.1} parent=1 // pred_check
      _
    $region71: #{tpu_custom_call.1} parent=1 // pred_check_branch
      %152 = sbr.rel (0) target = $region73
    $region72: #{tpu_custom_call.1} parent=1 // pred_region
      %154 = dma.done [#allocation15], 4096
    $region73: #{tpu_custom_call.1} parent=1 // pred_fallthru
      _
    %v155 = vld [vmem:[#allocation2] sm:$0xff]
    %v156 = vld [vmem:[#allocation7] sm:$0xff]
    %v157 = vld [vmem:[#allocation7 + $0x8] sm:$0xff]
    %v158 = vld [vmem:[#allocation7 + $0x10] sm:$0xff]
    %v159 = vld [vmem:[#allocation7 + $0x18] sm:$0xff]
    %v160 = vld [vmem:[#allocation7 + $0x20] sm:$0xff]
    %v161 = vld [vmem:[#allocation7 + $0x28] sm:$0xff]
    %v162 = vld [vmem:[#allocation7 + $0x30] sm:$0xff]
    %v163 = vld [vmem:[#allocation7 + $0x38] sm:$0xff]
    %v164 = vld [vmem:[#allocation8] sm:$0x3]
    %v166 = vperm.slane %v164, 0
    %v167 = vperm.slane %v164, 1
    %vm170 = vcmask 261120
    %v172 = vsel %vm170, %v155, 0
    %174 = vmatpush.msra.mxu0 0.0
    %175 = vmatpush.msra.mxu0 0.0
    %176 = vmatpush.msra.mxu0 0.0
    %177 = vmatpush.msra.mxu0 0.0
    %178 = vmatpush.msra.mxu0 0.0
    %179 = vmatpush.msra.mxu0 0.0
    %180 = vmatpush.msra.mxu0 0.0
    %181 = vmatpush.msra.mxu0 0.0
    %182 = vmatpush.msra.mxu0 0.0
    %183 = vmatpush.msra.mxu0 0.0
    %184 = vmatpush.msra.mxu0 0.0
    %185 = vmatpush.msra.mxu0 0.0
    %186 = vmatpush.msra.mxu0 %v162
    %187 = vmatpush.msra.mxu0 %v160
    %188 = vmatpush.msra.mxu0 %v158
    %189 = vmatpush.msra.mxu0 %v156
    %190 = vmatmul.f32.gmra.mxu0 %v172
    %v191 = vpop.f32.mrf.mxu0
    %v192 = vadd.f32 %v166, %v191
    %193 = vdwg.mxu0
    %194 = vmatpush.msra.mxu0 0.0
    %195 = vmatpush.msra.mxu0 0.0
    %196 = vmatpush.msra.mxu0 0.0
    %197 = vmatpush.msra.mxu0 0.0
    %198 = vmatpush.msra.mxu0 0.0
    %199 = vmatpush.msra.mxu0 0.0
    %200 = vmatpush.msra.mxu0 0.0
    %201 = vmatpush.msra.mxu0 0.0
    %202 = vmatpush.msra.mxu0 0.0
    %203 = vmatpush.msra.mxu0 0.0
    %204 = vmatpush.msra.mxu0 0.0
    %205 = vmatpush.msra.mxu0 0.0
    %206 = vmatpush.msra.mxu0 %v163
    %207 = vmatpush.msra.mxu0 %v161
    %208 = vmatpush.msra.mxu0 %v159
    %209 = vmatpush.msra.mxu0 %v157
    %210 = vmatmul.f32.gmra.mxu0 %v172
    %v211 = vpop.f32.mrf.mxu0
    %v212 = vadd.f32 %v167, %v211
    %213 = vdwg.mxu0
    %v214 = vld [vmem:[#allocation5] ss:$8 sm:$0x3]
    %vm215 = vcmp.gt.f32.partialorder %v192, 0.0
    %vm216 = vcmp.gt.f32.partialorder %v212, 0.0
    %v218 = vperm.slane %v214, 0
    %v219 = vperm.slane %v214, 1
    %v222 = vmul.f32 %v218, %v192
    %v223 = vmul.f32 %v219, %v212
    %v224 = vsel %vm215, %v192, %v222
    %v225 = vsel %vm216, %v212, %v223
    %v226 = vld [vmem:[#allocation10] sm:$0xff]
    %v227 = vld [vmem:[#allocation10 + $0x8] sm:$0xff]
    %v228 = vld [vmem:[#allocation10 + $0x10] sm:$0xff]
    %v229 = vld [vmem:[#allocation10 + $0x18] sm:$0xff]
    %v230 = vld [vmem:[#allocation10 + $0x20] sm:$0xff]
    %v231 = vld [vmem:[#allocation10 + $0x28] sm:$0xff]
    %v232 = vld [vmem:[#allocation10 + $0x30] sm:$0xff]
    %v233 = vld [vmem:[#allocation10 + $0x38] sm:$0xff]
    %v234 = vld [vmem:[#allocation10 + $0x40] sm:$0xff]
    %v235 = vld [vmem:[#allocation10 + $0x48] sm:$0xff]
    %v236 = vld [vmem:[#allocation10 + $0x50] sm:$0xff]
    %v237 = vld [vmem:[#allocation10 + $0x58] sm:$0xff]
    %v238 = vld [vmem:[#allocation10 + $0x60] sm:$0xff]
    %v239 = vld [vmem:[#allocation10 + $0x68] sm:$0xff]
    %v240 = vld [vmem:[#allocation10 + $0x70] sm:$0xff]
    %v241 = vld [vmem:[#allocation10 + $0x78] sm:$0xff]
    %v242 = vld [vmem:[#allocation10 + $0x80] sm:$0xff]
    %v243 = vld [vmem:[#allocation10 + $0x88] sm:$0xff]
    %v244 = vld [vmem:[#allocation10 + $0x90] sm:$0xff]
    %v245 = vld [vmem:[#allocation10 + $0x98] sm:$0xff]
    %v246 = vld [vmem:[#allocation10 + $0xa0] sm:$0xff]
    %v247 = vld [vmem:[#allocation10 + $0xa8] sm:$0xff]
    %v248 = vld [vmem:[#allocation10 + $0xb0] sm:$0xff]
    %v249 = vld [vmem:[#allocation10 + $0xb8] sm:$0xff]
    %v250 = vld [vmem:[#allocation10 + $0xc0] sm:$0xff]
    %v251 = vld [vmem:[#allocation10 + $0xc8] sm:$0xff]
    %v252 = vld [vmem:[#allocation10 + $0xd0] sm:$0xff]
    %v253 = vld [vmem:[#allocation10 + $0xd8] sm:$0xff]
    %v254 = vld [vmem:[#allocation10 + $0xe0] sm:$0xff]
    %v255 = vld [vmem:[#allocation10 + $0xe8] sm:$0xff]
    %v256 = vld [vmem:[#allocation10 + $0xf0] sm:$0xff]
    %v257 = vld [vmem:[#allocation10 + $0xf8] sm:$0xff]
    %v258 = vld [vmem:[#allocation10 + $0x100] sm:$0xff]
    %v259 = vld [vmem:[#allocation10 + $0x108] sm:$0xff]
    %v260 = vld [vmem:[#allocation10 + $0x110] sm:$0xff]
    %v261 = vld [vmem:[#allocation10 + $0x118] sm:$0xff]
    %v262 = vld [vmem:[#allocation10 + $0x120] sm:$0xff]
    %v263 = vld [vmem:[#allocation10 + $0x128] sm:$0xff]
    %v264 = vld [vmem:[#allocation10 + $0x130] sm:$0xff]
    %v265 = vld [vmem:[#allocation10 + $0x138] sm:$0xff]
    %v266 = vld [vmem:[#allocation10 + $0x140] sm:$0xff]
    %v267 = vld [vmem:[#allocation10 + $0x148] sm:$0xff]
    %v268 = vld [vmem:[#allocation10 + $0x150] sm:$0xff]
    %v269 = vld [vmem:[#allocation10 + $0x158] sm:$0xff]
    %v270 = vld [vmem:[#allocation10 + $0x160] sm:$0xff]
    %v271 = vld [vmem:[#allocation10 + $0x168] sm:$0xff]
    %v272 = vld [vmem:[#allocation10 + $0x170] sm:$0xff]
    %v273 = vld [vmem:[#allocation10 + $0x178] sm:$0xff]
    %v274 = vld [vmem:[#allocation10 + $0x180] sm:$0xff]
    %v275 = vld [vmem:[#allocation10 + $0x188] sm:$0xff]
    %v276 = vld [vmem:[#allocation10 + $0x190] sm:$0xff]
    %v277 = vld [vmem:[#allocation10 + $0x198] sm:$0xff]
    %v278 = vld [vmem:[#allocation10 + $0x1a0] sm:$0xff]
    %v279 = vld [vmem:[#allocation10 + $0x1a8] sm:$0xff]
    %v280 = vld [vmem:[#allocation10 + $0x1b0] sm:$0xff]
    %v281 = vld [vmem:[#allocation10 + $0x1b8] sm:$0xff]
    %v282 = vld [vmem:[#allocation10 + $0x1c0] sm:$0xff]
    %v283 = vld [vmem:[#allocation10 + $0x1c8] sm:$0xff]
    %v284 = vld [vmem:[#allocation10 + $0x1d0] sm:$0xff]
    %v285 = vld [vmem:[#allocation10 + $0x1d8] sm:$0xff]
    %v286 = vld [vmem:[#allocation10 + $0x1e0] sm:$0xff]
    %v287 = vld [vmem:[#allocation10 + $0x1e8] sm:$0xff]
    %v288 = vld [vmem:[#allocation10 + $0x1f0] sm:$0xff]
    %v289 = vld [vmem:[#allocation10 + $0x1f8] sm:$0xff]
    %v290 = vld [vmem:[#allocation11] sm:$0x3]
    %v292 = vperm.slane %v290, 0
    %v293 = vperm.slane %v290, 1
    %296 = vmatpush.msra.mxu0 %v256
    %297 = vmatpush.msra.mxu0 %v254
    %298 = vmatpush.msra.mxu0 %v252
    %299 = vmatpush.msra.mxu0 %v250
    %300 = vmatpush.msra.mxu0 %v248
    %301 = vmatpush.msra.mxu0 %v246
    %302 = vmatpush.msra.mxu0 %v244
    %303 = vmatpush.msra.mxu0 %v242
    %304 = vmatpush.msra.mxu0 %v240
    %305 = vmatpush.msra.mxu0 %v238
    %306 = vmatpush.msra.mxu0 %v236
    %307 = vmatpush.msra.mxu0 %v234
    %308 = vmatpush.msra.mxu0 %v232
    %309 = vmatpush.msra.mxu0 %v230
    %310 = vmatpush.msra.mxu0 %v228
    %311 = vmatpush.msra.mxu0 %v226
    %312 = vmatmul.f32.gmra.mxu0 %v224
    %v313 = vpop.f32.mrf.mxu0
    %v314 = vadd.f32 %v292, %v313
    %315 = vdwg.mxu0
    %316 = vmatpush.msra.mxu0 %v288
    %317 = vmatpush.msra.mxu0 %v286
    %318 = vmatpush.msra.mxu0 %v284
    %319 = vmatpush.msra.mxu0 %v282
    %320 = vmatpush.msra.mxu0 %v280
    %321 = vmatpush.msra.mxu0 %v278
    %322 = vmatpush.msra.mxu0 %v276
    %323 = vmatpush.msra.mxu0 %v274
    %324 = vmatpush.msra.mxu0 %v272
    %325 = vmatpush.msra.mxu0 %v270
    %326 = vmatpush.msra.mxu0 %v268
    %327 = vmatpush.msra.mxu0 %v266
    %328 = vmatpush.msra.mxu0 %v264
    %329 = vmatpush.msra.mxu0 %v262
    %330 = vmatpush.msra.mxu0 %v260
    %331 = vmatpush.msra.mxu0 %v258
    %332 = vmatmul.f32.gmra.mxu0 %v225
    %v333 = vpop.f32.mrf.mxu0
    %v334 = vadd.f32 %v314, %v333
    %335 = vdwg.mxu0
    %336 = vmatpush.msra.mxu0 %v257
    %337 = vmatpush.msra.mxu0 %v255
    %338 = vmatpush.msra.mxu0 %v253
    %339 = vmatpush.msra.mxu0 %v251
    %340 = vmatpush.msra.mxu0 %v249
    %341 = vmatpush.msra.mxu0 %v247
    %342 = vmatpush.msra.mxu0 %v245
    %343 = vmatpush.msra.mxu0 %v243
    %344 = vmatpush.msra.mxu0 %v241
    %345 = vmatpush.msra.mxu0 %v239
    %346 = vmatpush.msra.mxu0 %v237
    %347 = vmatpush.msra.mxu0 %v235
    %348 = vmatpush.msra.mxu0 %v233
    %349 = vmatpush.msra.mxu0 %v231
    %350 = vmatpush.msra.mxu0 %v229
    %351 = vmatpush.msra.mxu0 %v227
    %352 = vmatmul.f32.gmra.mxu0 %v224
    %v353 = vpop.f32.mrf.mxu0
    %v354 = vadd.f32 %v293, %v353
    %355 = vdwg.mxu0
    %356 = vmatpush.msra.mxu0 %v289
    %357 = vmatpush.msra.mxu0 %v287
    %358 = vmatpush.msra.mxu0 %v285
    %359 = vmatpush.msra.mxu0 %v283
    %360 = vmatpush.msra.mxu0 %v281
    %361 = vmatpush.msra.mxu0 %v279
    %362 = vmatpush.msra.mxu0 %v277
    %363 = vmatpush.msra.mxu0 %v275
    %364 = vmatpush.msra.mxu0 %v273
    %365 = vmatpush.msra.mxu0 %v271
    %366 = vmatpush.msra.mxu0 %v269
    %367 = vmatpush.msra.mxu0 %v267
    %368 = vmatpush.msra.mxu0 %v265
    %369 = vmatpush.msra.mxu0 %v263
    %370 = vmatpush.msra.mxu0 %v261
    %371 = vmatpush.msra.mxu0 %v259
    %372 = vmatmul.f32.gmra.mxu0 %v225
    %v373 = vpop.f32.mrf.mxu0
    %v374 = vadd.f32 %v354, %v373
    %375 = vdwg.mxu0
    %s376 = scalar_lea.vmem [#allocation5], 1
    %v377 = vld [vmem:[%s376] ss:$8 sm:$0x3]
    %vm378 = vcmp.gt.f32.partialorder %v334, 0.0
    %vm379 = vcmp.gt.f32.partialorder %v374, 0.0
    %v381 = vperm.slane %v377, 0
    %v382 = vperm.slane %v377, 1
    %v385 = vmul.f32 %v381, %v334
    %v386 = vmul.f32 %v382, %v374
    %v387 = vsel %vm378, %v334, %v385
    %v388 = vsel %vm379, %v374, %v386
    %v389 = vld [vmem:[#allocation13] sm:$0xff]
    %v390 = vld [vmem:[#allocation13 + $0x8] sm:$0xff]
    %v391 = vld [vmem:[#allocation13 + $0x10] sm:$0xff]
    %v392 = vld [vmem:[#allocation13 + $0x18] sm:$0xff]
    %v393 = vld [vmem:[#allocation13 + $0x20] sm:$0xff]
    %v394 = vld [vmem:[#allocation13 + $0x28] sm:$0xff]
    %v395 = vld [vmem:[#allocation13 + $0x30] sm:$0xff]
    %v396 = vld [vmem:[#allocation13 + $0x38] sm:$0xff]
    %v397 = vld [vmem:[#allocation13 + $0x40] sm:$0xff]
    %v398 = vld [vmem:[#allocation13 + $0x48] sm:$0xff]
    %v399 = vld [vmem:[#allocation13 + $0x50] sm:$0xff]
    %v400 = vld [vmem:[#allocation13 + $0x58] sm:$0xff]
    %v401 = vld [vmem:[#allocation13 + $0x60] sm:$0xff]
    %v402 = vld [vmem:[#allocation13 + $0x68] sm:$0xff]
    %v403 = vld [vmem:[#allocation13 + $0x70] sm:$0xff]
    %v404 = vld [vmem:[#allocation13 + $0x78] sm:$0xff]
    %v405 = vld [vmem:[#allocation13 + $0x80] sm:$0xff]
    %v406 = vld [vmem:[#allocation13 + $0x88] sm:$0xff]
    %v407 = vld [vmem:[#allocation13 + $0x90] sm:$0xff]
    %v408 = vld [vmem:[#allocation13 + $0x98] sm:$0xff]
    %v409 = vld [vmem:[#allocation13 + $0xa0] sm:$0xff]
    %v410 = vld [vmem:[#allocation13 + $0xa8] sm:$0xff]
    %v411 = vld [vmem:[#allocation13 + $0xb0] sm:$0xff]
    %v412 = vld [vmem:[#allocation13 + $0xb8] sm:$0xff]
    %v413 = vld [vmem:[#allocation13 + $0xc0] sm:$0xff]
    %v414 = vld [vmem:[#allocation13 + $0xc8] sm:$0xff]
    %v415 = vld [vmem:[#allocation13 + $0xd0] sm:$0xff]
    %v416 = vld [vmem:[#allocation13 + $0xd8] sm:$0xff]
    %v417 = vld [vmem:[#allocation13 + $0xe0] sm:$0xff]
    %v418 = vld [vmem:[#allocation13 + $0xe8] sm:$0xff]
    %v419 = vld [vmem:[#allocation13 + $0xf0] sm:$0xff]
    %v420 = vld [vmem:[#allocation13 + $0xf8] sm:$0xff]
    %v421 = vld [vmem:[#allocation13 + $0x100] sm:$0xff]
    %v422 = vld [vmem:[#allocation13 + $0x108] sm:$0xff]
    %v423 = vld [vmem:[#allocation13 + $0x110] sm:$0xff]
    %v424 = vld [vmem:[#allocation13 + $0x118] sm:$0xff]
    %v425 = vld [vmem:[#allocation13 + $0x120] sm:$0xff]
    %v426 = vld [vmem:[#allocation13 + $0x128] sm:$0xff]
    %v427 = vld [vmem:[#allocation13 + $0x130] sm:$0xff]
    %v428 = vld [vmem:[#allocation13 + $0x138] sm:$0xff]
    %v429 = vld [vmem:[#allocation13 + $0x140] sm:$0xff]
    %v430 = vld [vmem:[#allocation13 + $0x148] sm:$0xff]
    %v431 = vld [vmem:[#allocation13 + $0x150] sm:$0xff]
    %v432 = vld [vmem:[#allocation13 + $0x158] sm:$0xff]
    %v433 = vld [vmem:[#allocation13 + $0x160] sm:$0xff]
    %v434 = vld [vmem:[#allocation13 + $0x168] sm:$0xff]
    %v435 = vld [vmem:[#allocation13 + $0x170] sm:$0xff]
    %v436 = vld [vmem:[#allocation13 + $0x178] sm:$0xff]
    %v437 = vld [vmem:[#allocation13 + $0x180] sm:$0xff]
    %v438 = vld [vmem:[#allocation13 + $0x188] sm:$0xff]
    %v439 = vld [vmem:[#allocation13 + $0x190] sm:$0xff]
    %v440 = vld [vmem:[#allocation13 + $0x198] sm:$0xff]
    %v441 = vld [vmem:[#allocation13 + $0x1a0] sm:$0xff]
    %v442 = vld [vmem:[#allocation13 + $0x1a8] sm:$0xff]
    %v443 = vld [vmem:[#allocation13 + $0x1b0] sm:$0xff]
    %v444 = vld [vmem:[#allocation13 + $0x1b8] sm:$0xff]
    %v445 = vld [vmem:[#allocation13 + $0x1c0] sm:$0xff]
    %v446 = vld [vmem:[#allocation13 + $0x1c8] sm:$0xff]
    %v447 = vld [vmem:[#allocation13 + $0x1d0] sm:$0xff]
    %v448 = vld [vmem:[#allocation13 + $0x1d8] sm:$0xff]
    %v449 = vld [vmem:[#allocation13 + $0x1e0] sm:$0xff]
    %v450 = vld [vmem:[#allocation13 + $0x1e8] sm:$0xff]
    %v451 = vld [vmem:[#allocation13 + $0x1f0] sm:$0xff]
    %v452 = vld [vmem:[#allocation13 + $0x1f8] sm:$0xff]
    %v453 = vld [vmem:[%s7] sm:$0x3]
    %v455 = vperm.slane %v453, 0
    %v456 = vperm.slane %v453, 1
    %459 = vmatpush.msra.mxu0 %v419
    %460 = vmatpush.msra.mxu0 %v417
    %461 = vmatpush.msra.mxu0 %v415
    %462 = vmatpush.msra.mxu0 %v413
    %463 = vmatpush.msra.mxu0 %v411
    %464 = vmatpush.msra.mxu0 %v409
    %465 = vmatpush.msra.mxu0 %v407
    %466 = vmatpush.msra.mxu0 %v405
    %467 = vmatpush.msra.mxu0 %v403
    %468 = vmatpush.msra.mxu0 %v401
    %469 = vmatpush.msra.mxu0 %v399
    %470 = vmatpush.msra.mxu0 %v397
    %471 = vmatpush.msra.mxu0 %v395
    %472 = vmatpush.msra.mxu0 %v393
    %473 = vmatpush.msra.mxu0 %v391
    %474 = vmatpush.msra.mxu0 %v389
    %475 = vmatmul.f32.gmra.mxu0 %v387
    %v476 = vpop.f32.mrf.mxu0
    %v477 = vadd.f32 %v455, %v476
    %478 = vdwg.mxu0
    %479 = vmatpush.msra.mxu0 %v451
    %480 = vmatpush.msra.mxu0 %v449
    %481 = vmatpush.msra.mxu0 %v447
    %482 = vmatpush.msra.mxu0 %v445
    %483 = vmatpush.msra.mxu0 %v443
    %484 = vmatpush.msra.mxu0 %v441
    %485 = vmatpush.msra.mxu0 %v439
    %486 = vmatpush.msra.mxu0 %v437
    %487 = vmatpush.msra.mxu0 %v435
    %488 = vmatpush.msra.mxu0 %v433
    %489 = vmatpush.msra.mxu0 %v431
    %490 = vmatpush.msra.mxu0 %v429
    %491 = vmatpush.msra.mxu0 %v427
    %492 = vmatpush.msra.mxu0 %v425
    %493 = vmatpush.msra.mxu0 %v423
    %494 = vmatpush.msra.mxu0 %v421
    %495 = vmatmul.f32.gmra.mxu0 %v388
    %v496 = vpop.f32.mrf.mxu0
    %v497 = vadd.f32 %v477, %v496
    %498 = vdwg.mxu0
    %499 = vmatpush.msra.mxu0 %v420
    %500 = vmatpush.msra.mxu0 %v418
    %501 = vmatpush.msra.mxu0 %v416
    %502 = vmatpush.msra.mxu0 %v414
    %503 = vmatpush.msra.mxu0 %v412
    %504 = vmatpush.msra.mxu0 %v410
    %505 = vmatpush.msra.mxu0 %v408
    %506 = vmatpush.msra.mxu0 %v406
    %507 = vmatpush.msra.mxu0 %v404
    %508 = vmatpush.msra.mxu0 %v402
    %509 = vmatpush.msra.mxu0 %v400
    %510 = vmatpush.msra.mxu0 %v398
    %511 = vmatpush.msra.mxu0 %v396
    %512 = vmatpush.msra.mxu0 %v394
    %513 = vmatpush.msra.mxu0 %v392
    %514 = vmatpush.msra.mxu0 %v390
    %515 = vmatmul.f32.gmra.mxu0 %v387
    %v516 = vpop.f32.mrf.mxu0
    %v517 = vadd.f32 %v456, %v516
    %518 = vdwg.mxu0
    %519 = vmatpush.msra.mxu0 %v452
    %520 = vmatpush.msra.mxu0 %v450
    %521 = vmatpush.msra.mxu0 %v448
    %522 = vmatpush.msra.mxu0 %v446
    %523 = vmatpush.msra.mxu0 %v444
    %524 = vmatpush.msra.mxu0 %v442
    %525 = vmatpush.msra.mxu0 %v440
    %526 = vmatpush.msra.mxu0 %v438
    %527 = vmatpush.msra.mxu0 %v436
    %528 = vmatpush.msra.mxu0 %v434
    %529 = vmatpush.msra.mxu0 %v432
    %530 = vmatpush.msra.mxu0 %v430
    %531 = vmatpush.msra.mxu0 %v428
    %532 = vmatpush.msra.mxu0 %v426
    %533 = vmatpush.msra.mxu0 %v424
    %534 = vmatpush.msra.mxu0 %v422
    %535 = vmatmul.f32.gmra.mxu0 %v388
    %v536 = vpop.f32.mrf.mxu0
    %v537 = vadd.f32 %v517, %v536
    %538 = vdwg.mxu0
    %s539 = scalar_lea.vmem [#allocation5], 2
    %v540 = vld [vmem:[%s539] ss:$8 sm:$0x3]
    %vm541 = vcmp.gt.f32.partialorder %v497, 0.0
    %vm542 = vcmp.gt.f32.partialorder %v537, 0.0
    %v544 = vperm.slane %v540, 0
    %v545 = vperm.slane %v540, 1
    %v548 = vmul.f32 %v544, %v497
    %v549 = vmul.f32 %v545, %v537
    %v550 = vsel %vm541, %v497, %v548
    %v551 = vsel %vm542, %v537, %v549
    %v552 = vadd.f32 %v224, %v550
    %v553 = vadd.f32 %v225, %v551
    %s554 = scalar_lea.vmem [#allocation10], 512
    %v555 = vld [vmem:[%s554] sm:$0xff]
    %v556 = vld [vmem:[%s554 + $0x8] sm:$0xff]
    %v557 = vld [vmem:[%s554 + $0x10] sm:$0xff]
    %v558 = vld [vmem:[%s554 + $0x18] sm:$0xff]
    %v559 = vld [vmem:[%s554 + $0x20] sm:$0xff]
    %v560 = vld [vmem:[%s554 + $0x28] sm:$0xff]
    %v561 = vld [vmem:[%s554 + $0x30] sm:$0xff]
    %v562 = vld [vmem:[%s554 + $0x38] sm:$0xff]
    %v563 = vld [vmem:[%s554 + $0x40] sm:$0xff]
    %v564 = vld [vmem:[%s554 + $0x48] sm:$0xff]
    %v565 = vld [vmem:[%s554 + $0x50] sm:$0xff]
    %v566 = vld [vmem:[%s554 + $0x58] sm:$0xff]
    %v567 = vld [vmem:[%s554 + $0x60] sm:$0xff]
    %v568 = vld [vmem:[%s554 + $0x68] sm:$0xff]
    %v569 = vld [vmem:[%s554 + $0x70] sm:$0xff]
    %v570 = vld [vmem:[%s554 + $0x78] sm:$0xff]
    %v571 = vld [vmem:[%s554 + $0x80] sm:$0xff]
    %v572 = vld [vmem:[%s554 + $0x88] sm:$0xff]
    %v573 = vld [vmem:[%s554 + $0x90] sm:$0xff]
    %v574 = vld [vmem:[%s554 + $0x98] sm:$0xff]
    %v575 = vld [vmem:[%s554 + $0xa0] sm:$0xff]
    %v576 = vld [vmem:[%s554 + $0xa8] sm:$0xff]
    %v577 = vld [vmem:[%s554 + $0xb0] sm:$0xff]
    %v578 = vld [vmem:[%s554 + $0xb8] sm:$0xff]
    %v579 = vld [vmem:[%s554 + $0xc0] sm:$0xff]
    %v580 = vld [vmem:[%s554 + $0xc8] sm:$0xff]
    %v581 = vld [vmem:[%s554 + $0xd0] sm:$0xff]
    %v582 = vld [vmem:[%s554 + $0xd8] sm:$0xff]
    %v583 = vld [vmem:[%s554 + $0xe0] sm:$0xff]
    %v584 = vld [vmem:[%s554 + $0xe8] sm:$0xff]
    %v585 = vld [vmem:[%s554 + $0xf0] sm:$0xff]
    %v586 = vld [vmem:[%s554 + $0xf8] sm:$0xff]
    %v587 = vld [vmem:[%s554 + $0x100] sm:$0xff]
    %v588 = vld [vmem:[%s554 + $0x108] sm:$0xff]
    %v589 = vld [vmem:[%s554 + $0x110] sm:$0xff]
    %v590 = vld [vmem:[%s554 + $0x118] sm:$0xff]
    %v591 = vld [vmem:[%s554 + $0x120] sm:$0xff]
    %v592 = vld [vmem:[%s554 + $0x128] sm:$0xff]
    %v593 = vld [vmem:[%s554 + $0x130] sm:$0xff]
    %v594 = vld [vmem:[%s554 + $0x138] sm:$0xff]
    %v595 = vld [vmem:[%s554 + $0x140] sm:$0xff]
    %v596 = vld [vmem:[%s554 + $0x148] sm:$0xff]
    %v597 = vld [vmem:[%s554 + $0x150] sm:$0xff]
    %v598 = vld [vmem:[%s554 + $0x158] sm:$0xff]
    %v599 = vld [vmem:[%s554 + $0x160] sm:$0xff]
    %v600 = vld [vmem:[%s554 + $0x168] sm:$0xff]
    %v601 = vld [vmem:[%s554 + $0x170] sm:$0xff]
    %v602 = vld [vmem:[%s554 + $0x178] sm:$0xff]
    %v603 = vld [vmem:[%s554 + $0x180] sm:$0xff]
    %v604 = vld [vmem:[%s554 + $0x188] sm:$0xff]
    %v605 = vld [vmem:[%s554 + $0x190] sm:$0xff]
    %v606 = vld [vmem:[%s554 + $0x198] sm:$0xff]
    %v607 = vld [vmem:[%s554 + $0x1a0] sm:$0xff]
    %v608 = vld [vmem:[%s554 + $0x1a8] sm:$0xff]
    %v609 = vld [vmem:[%s554 + $0x1b0] sm:$0xff]
    %v610 = vld [vmem:[%s554 + $0x1b8] sm:$0xff]
    %v611 = vld [vmem:[%s554 + $0x1c0] sm:$0xff]
    %v612 = vld [vmem:[%s554 + $0x1c8] sm:$0xff]
    %v613 = vld [vmem:[%s554 + $0x1d0] sm:$0xff]
    %v614 = vld [vmem:[%s554 + $0x1d8] sm:$0xff]
    %v615 = vld [vmem:[%s554 + $0x1e0] sm:$0xff]
    %v616 = vld [vmem:[%s554 + $0x1e8] sm:$0xff]
    %v617 = vld [vmem:[%s554 + $0x1f0] sm:$0xff]
    %v618 = vld [vmem:[%s554 + $0x1f8] sm:$0xff]
    %s619 = scalar_lea.vmem [#allocation11], 2
    %v620 = vld [vmem:[%s619] sm:$0x3]
    %v622 = vperm.slane %v620, 0
    %v623 = vperm.slane %v620, 1
    %626 = vmatpush.msra.mxu0 %v585
    %627 = vmatpush.msra.mxu0 %v583
    %628 = vmatpush.msra.mxu0 %v581
    %629 = vmatpush.msra.mxu0 %v579
    %630 = vmatpush.msra.mxu0 %v577
    %631 = vmatpush.msra.mxu0 %v575
    %632 = vmatpush.msra.mxu0 %v573
    %633 = vmatpush.msra.mxu0 %v571
    %634 = vmatpush.msra.mxu0 %v569
    %635 = vmatpush.msra.mxu0 %v567
    %636 = vmatpush.msra.mxu0 %v565
    %637 = vmatpush.msra.mxu0 %v563
    %638 = vmatpush.msra.mxu0 %v561
    %639 = vmatpush.msra.mxu0 %v559
    %640 = vmatpush.msra.mxu0 %v557
    %641 = vmatpush.msra.mxu0 %v555
    %642 = vmatmul.f32.gmra.mxu0 %v552
    %v643 = vpop.f32.mrf.mxu0
    %v644 = vadd.f32 %v622, %v643
    %645 = vdwg.mxu0
    %646 = vmatpush.msra.mxu0 %v617
    %647 = vmatpush.msra.mxu0 %v615
    %648 = vmatpush.msra.mxu0 %v613
    %649 = vmatpush.msra.mxu0 %v611
    %650 = vmatpush.msra.mxu0 %v609
    %651 = vmatpush.msra.mxu0 %v607
    %652 = vmatpush.msra.mxu0 %v605
    %653 = vmatpush.msra.mxu0 %v603
    %654 = vmatpush.msra.mxu0 %v601
    %655 = vmatpush.msra.mxu0 %v599
    %656 = vmatpush.msra.mxu0 %v597
    %657 = vmatpush.msra.mxu0 %v595
    %658 = vmatpush.msra.mxu0 %v593
    %659 = vmatpush.msra.mxu0 %v591
    %660 = vmatpush.msra.mxu0 %v589
    %661 = vmatpush.msra.mxu0 %v587
    %662 = vmatmul.f32.gmra.mxu0 %v553
    %v663 = vpop.f32.mrf.mxu0
    %v664 = vadd.f32 %v644, %v663
    %665 = vdwg.mxu0
    %666 = vmatpush.msra.mxu0 %v586
    %667 = vmatpush.msra.mxu0 %v584
    %668 = vmatpush.msra.mxu0 %v582
    %669 = vmatpush.msra.mxu0 %v580
    %670 = vmatpush.msra.mxu0 %v578
    %671 = vmatpush.msra.mxu0 %v576
    %672 = vmatpush.msra.mxu0 %v574
    %673 = vmatpush.msra.mxu0 %v572
    %674 = vmatpush.msra.mxu0 %v570
    %675 = vmatpush.msra.mxu0 %v568
    %676 = vmatpush.msra.mxu0 %v566
    %677 = vmatpush.msra.mxu0 %v564
    %678 = vmatpush.msra.mxu0 %v562
    %679 = vmatpush.msra.mxu0 %v560
    %680 = vmatpush.msra.mxu0 %v558
    %681 = vmatpush.msra.mxu0 %v556
    %682 = vmatmul.f32.gmra.mxu0 %v552
    %v683 = vpop.f32.mrf.mxu0
    %v684 = vadd.f32 %v623, %v683
    %685 = vdwg.mxu0
    %686 = vmatpush.msra.mxu0 %v618
    %687 = vmatpush.msra.mxu0 %v616
    %688 = vmatpush.msra.mxu0 %v614
    %689 = vmatpush.msra.mxu0 %v612
    %690 = vmatpush.msra.mxu0 %v610
    %691 = vmatpush.msra.mxu0 %v608
    %692 = vmatpush.msra.mxu0 %v606
    %693 = vmatpush.msra.mxu0 %v604
    %694 = vmatpush.msra.mxu0 %v602
    %695 = vmatpush.msra.mxu0 %v600
    %696 = vmatpush.msra.mxu0 %v598
    %697 = vmatpush.msra.mxu0 %v596
    %698 = vmatpush.msra.mxu0 %v594
    %699 = vmatpush.msra.mxu0 %v592
    %700 = vmatpush.msra.mxu0 %v590
    %701 = vmatpush.msra.mxu0 %v588
    %702 = vmatmul.f32.gmra.mxu0 %v553
    %v703 = vpop.f32.mrf.mxu0
    %v704 = vadd.f32 %v684, %v703
    %705 = vdwg.mxu0
    %s706 = scalar_lea.vmem [#allocation5], 3
    %v707 = vld [vmem:[%s706] ss:$8 sm:$0x3]
    %vm708 = vcmp.gt.f32.partialorder %v664, 0.0
    %vm709 = vcmp.gt.f32.partialorder %v704, 0.0
    %v711 = vperm.slane %v707, 0
    %v712 = vperm.slane %v707, 1
    %v715 = vmul.f32 %v711, %v664
    %v716 = vmul.f32 %v712, %v704
    %v717 = vsel %vm708, %v664, %v715
    %v718 = vsel %vm709, %v704, %v716
    %s719 = scalar_lea.vmem [#allocation13], 512
    %v720 = vld [vmem:[%s719] sm:$0xff]
    %v721 = vld [vmem:[%s719 + $0x8] sm:$0xff]
    %v722 = vld [vmem:[%s719 + $0x10] sm:$0xff]
    %v723 = vld [vmem:[%s719 + $0x18] sm:$0xff]
    %v724 = vld [vmem:[%s719 + $0x20] sm:$0xff]
    %v725 = vld [vmem:[%s719 + $0x28] sm:$0xff]
    %v726 = vld [vmem:[%s719 + $0x30] sm:$0xff]
    %v727 = vld [vmem:[%s719 + $0x38] sm:$0xff]
    %v728 = vld [vmem:[%s719 + $0x40] sm:$0xff]
    %v729 = vld [vmem:[%s719 + $0x48] sm:$0xff]
    %v730 = vld [vmem:[%s719 + $0x50] sm:$0xff]
    %v731 = vld [vmem:[%s719 + $0x58] sm:$0xff]
    %v732 = vld [vmem:[%s719 + $0x60] sm:$0xff]
    %v733 = vld [vmem:[%s719 + $0x68] sm:$0xff]
    %v734 = vld [vmem:[%s719 + $0x70] sm:$0xff]
    %v735 = vld [vmem:[%s719 + $0x78] sm:$0xff]
    %v736 = vld [vmem:[%s719 + $0x80] sm:$0xff]
    %v737 = vld [vmem:[%s719 + $0x88] sm:$0xff]
    %v738 = vld [vmem:[%s719 + $0x90] sm:$0xff]
    %v739 = vld [vmem:[%s719 + $0x98] sm:$0xff]
    %v740 = vld [vmem:[%s719 + $0xa0] sm:$0xff]
    %v741 = vld [vmem:[%s719 + $0xa8] sm:$0xff]
    %v742 = vld [vmem:[%s719 + $0xb0] sm:$0xff]
    %v743 = vld [vmem:[%s719 + $0xb8] sm:$0xff]
    %v744 = vld [vmem:[%s719 + $0xc0] sm:$0xff]
    %v745 = vld [vmem:[%s719 + $0xc8] sm:$0xff]
    %v746 = vld [vmem:[%s719 + $0xd0] sm:$0xff]
    %v747 = vld [vmem:[%s719 + $0xd8] sm:$0xff]
    %v748 = vld [vmem:[%s719 + $0xe0] sm:$0xff]
    %v749 = vld [vmem:[%s719 + $0xe8] sm:$0xff]
    %v750 = vld [vmem:[%s719 + $0xf0] sm:$0xff]
    %v751 = vld [vmem:[%s719 + $0xf8] sm:$0xff]
    %v752 = vld [vmem:[%s719 + $0x100] sm:$0xff]
    %v753 = vld [vmem:[%s719 + $0x108] sm:$0xff]
    %v754 = vld [vmem:[%s719 + $0x110] sm:$0xff]
    %v755 = vld [vmem:[%s719 + $0x118] sm:$0xff]
    %v756 = vld [vmem:[%s719 + $0x120] sm:$0xff]
    %v757 = vld [vmem:[%s719 + $0x128] sm:$0xff]
    %v758 = vld [vmem:[%s719 + $0x130] sm:$0xff]
    %v759 = vld [vmem:[%s719 + $0x138] sm:$0xff]
    %v760 = vld [vmem:[%s719 + $0x140] sm:$0xff]
    %v761 = vld [vmem:[%s719 + $0x148] sm:$0xff]
    %v762 = vld [vmem:[%s719 + $0x150] sm:$0xff]
    %v763 = vld [vmem:[%s719 + $0x158] sm:$0xff]
    %v764 = vld [vmem:[%s719 + $0x160] sm:$0xff]
    %v765 = vld [vmem:[%s719 + $0x168] sm:$0xff]
    %v766 = vld [vmem:[%s719 + $0x170] sm:$0xff]
    %v767 = vld [vmem:[%s719 + $0x178] sm:$0xff]
    %v768 = vld [vmem:[%s719 + $0x180] sm:$0xff]
    %v769 = vld [vmem:[%s719 + $0x188] sm:$0xff]
    %v770 = vld [vmem:[%s719 + $0x190] sm:$0xff]
    %v771 = vld [vmem:[%s719 + $0x198] sm:$0xff]
    %v772 = vld [vmem:[%s719 + $0x1a0] sm:$0xff]
    %v773 = vld [vmem:[%s719 + $0x1a8] sm:$0xff]
    %v774 = vld [vmem:[%s719 + $0x1b0] sm:$0xff]
    %v775 = vld [vmem:[%s719 + $0x1b8] sm:$0xff]
    %v776 = vld [vmem:[%s719 + $0x1c0] sm:$0xff]
    %v777 = vld [vmem:[%s719 + $0x1c8] sm:$0xff]
    %v778 = vld [vmem:[%s719 + $0x1d0] sm:$0xff]
    %v779 = vld [vmem:[%s719 + $0x1d8] sm:$0xff]
    %v780 = vld [vmem:[%s719 + $0x1e0] sm:$0xff]
    %v781 = vld [vmem:[%s719 + $0x1e8] sm:$0xff]
    %v782 = vld [vmem:[%s719 + $0x1f0] sm:$0xff]
    %v783 = vld [vmem:[%s719 + $0x1f8] sm:$0xff]
    %s784 = scalar_lea.vmem %s7, 2
    %v785 = vld [vmem:[%s784] sm:$0x3]
    %v787 = vperm.slane %v785, 0
    %v788 = vperm.slane %v785, 1
    %791 = vmatpush.msra.mxu0 %v750
    %792 = vmatpush.msra.mxu0 %v748
    %793 = vmatpush.msra.mxu0 %v746
    %794 = vmatpush.msra.mxu0 %v744
    %795 = vmatpush.msra.mxu0 %v742
    %796 = vmatpush.msra.mxu0 %v740
    %797 = vmatpush.msra.mxu0 %v738
    %798 = vmatpush.msra.mxu0 %v736
    %799 = vmatpush.msra.mxu0 %v734
    %800 = vmatpush.msra.mxu0 %v732
    %801 = vmatpush.msra.mxu0 %v730
    %802 = vmatpush.msra.mxu0 %v728
    %803 = vmatpush.msra.mxu0 %v726
    %804 = vmatpush.msra.mxu0 %v724
    %805 = vmatpush.msra.mxu0 %v722
    %806 = vmatpush.msra.mxu0 %v720
    %807 = vmatmul.f32.gmra.mxu0 %v717
    %v808 = vpop.f32.mrf.mxu0
    %v809 = vadd.f32 %v787, %v808
    %810 = vdwg.mxu0
    %811 = vmatpush.msra.mxu0 %v782
    %812 = vmatpush.msra.mxu0 %v780
    %813 = vmatpush.msra.mxu0 %v778
    %814 = vmatpush.msra.mxu0 %v776
    %815 = vmatpush.msra.mxu0 %v774
    %816 = vmatpush.msra.mxu0 %v772
    %817 = vmatpush.msra.mxu0 %v770
    %818 = vmatpush.msra.mxu0 %v768
    %819 = vmatpush.msra.mxu0 %v766
    %820 = vmatpush.msra.mxu0 %v764
    %821 = vmatpush.msra.mxu0 %v762
    %822 = vmatpush.msra.mxu0 %v760
    %823 = vmatpush.msra.mxu0 %v758
    %824 = vmatpush.msra.mxu0 %v756
    %825 = vmatpush.msra.mxu0 %v754
    %826 = vmatpush.msra.mxu0 %v752
    %827 = vmatmul.f32.gmra.mxu0 %v718
    %v828 = vpop.f32.mrf.mxu0
    %v829 = vadd.f32 %v809, %v828
    %830 = vdwg.mxu0
    %831 = vmatpush.msra.mxu0 %v751
    %832 = vmatpush.msra.mxu0 %v749
    %833 = vmatpush.msra.mxu0 %v747
    %834 = vmatpush.msra.mxu0 %v745
    %835 = vmatpush.msra.mxu0 %v743
    %836 = vmatpush.msra.mxu0 %v741
    %837 = vmatpush.msra.mxu0 %v739
    %838 = vmatpush.msra.mxu0 %v737
    %839 = vmatpush.msra.mxu0 %v735
    %840 = vmatpush.msra.mxu0 %v733
    %841 = vmatpush.msra.mxu0 %v731
    %842 = vmatpush.msra.mxu0 %v729
    %843 = vmatpush.msra.mxu0 %v727
    %844 = vmatpush.msra.mxu0 %v725
    %845 = vmatpush.msra.mxu0 %v723
    %846 = vmatpush.msra.mxu0 %v721
    %847 = vmatmul.f32.gmra.mxu0 %v717
    %v848 = vpop.f32.mrf.mxu0
    %v849 = vadd.f32 %v788, %v848
    %850 = vdwg.mxu0
    %851 = vmatpush.msra.mxu0 %v783
    %852 = vmatpush.msra.mxu0 %v781
    %853 = vmatpush.msra.mxu0 %v779
    %854 = vmatpush.msra.mxu0 %v777
    %855 = vmatpush.msra.mxu0 %v775
    %856 = vmatpush.msra.mxu0 %v773
    %857 = vmatpush.msra.mxu0 %v771
    %858 = vmatpush.msra.mxu0 %v769
    %859 = vmatpush.msra.mxu0 %v767
    %860 = vmatpush.msra.mxu0 %v765
    %861 = vmatpush.msra.mxu0 %v763
    %862 = vmatpush.msra.mxu0 %v761
    %863 = vmatpush.msra.mxu0 %v759
    %864 = vmatpush.msra.mxu0 %v757
    %865 = vmatpush.msra.mxu0 %v755
    %866 = vmatpush.msra.mxu0 %v753
    %867 = vmatmul.f32.gmra.mxu0 %v718
    %v868 = vpop.f32.mrf.mxu0
    %v869 = vadd.f32 %v849, %v868
    %870 = vdwg.mxu0
    %s871 = scalar_lea.vmem [#allocation5], 4
    %v872 = vld [vmem:[%s871] ss:$8 sm:$0x3]
    %vm873 = vcmp.gt.f32.partialorder %v829, 0.0
    %vm874 = vcmp.gt.f32.partialorder %v869, 0.0
    %v876 = vperm.slane %v872, 0
    %v877 = vperm.slane %v872, 1
    %v880 = vmul.f32 %v876, %v829
    %v881 = vmul.f32 %v877, %v869
    %v882 = vsel %vm873, %v829, %v880
    %v883 = vsel %vm874, %v869, %v881
    %v884 = vadd.f32 %v552, %v882
    %v885 = vadd.f32 %v553, %v883
    %s886 = scalar_lea.vmem [#allocation10], 1024
    %v887 = vld [vmem:[%s886] sm:$0xff]
    %v888 = vld [vmem:[%s886 + $0x8] sm:$0xff]
    %v889 = vld [vmem:[%s886 + $0x10] sm:$0xff]
    %v890 = vld [vmem:[%s886 + $0x18] sm:$0xff]
    %v891 = vld [vmem:[%s886 + $0x20] sm:$0xff]
    %v892 = vld [vmem:[%s886 + $0x28] sm:$0xff]
    %v893 = vld [vmem:[%s886 + $0x30] sm:$0xff]
    %v894 = vld [vmem:[%s886 + $0x38] sm:$0xff]
    %v895 = vld [vmem:[%s886 + $0x40] sm:$0xff]
    %v896 = vld [vmem:[%s886 + $0x48] sm:$0xff]
    %v897 = vld [vmem:[%s886 + $0x50] sm:$0xff]
    %v898 = vld [vmem:[%s886 + $0x58] sm:$0xff]
    %v899 = vld [vmem:[%s886 + $0x60] sm:$0xff]
    %v900 = vld [vmem:[%s886 + $0x68] sm:$0xff]
    %v901 = vld [vmem:[%s886 + $0x70] sm:$0xff]
    %v902 = vld [vmem:[%s886 + $0x78] sm:$0xff]
    %v903 = vld [vmem:[%s886 + $0x80] sm:$0xff]
    %v904 = vld [vmem:[%s886 + $0x88] sm:$0xff]
    %v905 = vld [vmem:[%s886 + $0x90] sm:$0xff]
    %v906 = vld [vmem:[%s886 + $0x98] sm:$0xff]
    %v907 = vld [vmem:[%s886 + $0xa0] sm:$0xff]
    %v908 = vld [vmem:[%s886 + $0xa8] sm:$0xff]
    %v909 = vld [vmem:[%s886 + $0xb0] sm:$0xff]
    %v910 = vld [vmem:[%s886 + $0xb8] sm:$0xff]
    %v911 = vld [vmem:[%s886 + $0xc0] sm:$0xff]
    %v912 = vld [vmem:[%s886 + $0xc8] sm:$0xff]
    %v913 = vld [vmem:[%s886 + $0xd0] sm:$0xff]
    %v914 = vld [vmem:[%s886 + $0xd8] sm:$0xff]
    %v915 = vld [vmem:[%s886 + $0xe0] sm:$0xff]
    %v916 = vld [vmem:[%s886 + $0xe8] sm:$0xff]
    %v917 = vld [vmem:[%s886 + $0xf0] sm:$0xff]
    %v918 = vld [vmem:[%s886 + $0xf8] sm:$0xff]
    %v919 = vld [vmem:[%s886 + $0x100] sm:$0xff]
    %v920 = vld [vmem:[%s886 + $0x108] sm:$0xff]
    %v921 = vld [vmem:[%s886 + $0x110] sm:$0xff]
    %v922 = vld [vmem:[%s886 + $0x118] sm:$0xff]
    %v923 = vld [vmem:[%s886 + $0x120] sm:$0xff]
    %v924 = vld [vmem:[%s886 + $0x128] sm:$0xff]
    %v925 = vld [vmem:[%s886 + $0x130] sm:$0xff]
    %v926 = vld [vmem:[%s886 + $0x138] sm:$0xff]
    %v927 = vld [vmem:[%s886 + $0x140] sm:$0xff]
    %v928 = vld [vmem:[%s886 + $0x148] sm:$0xff]
    %v929 = vld [vmem:[%s886 + $0x150] sm:$0xff]
    %v930 = vld [vmem:[%s886 + $0x158] sm:$0xff]
    %v931 = vld [vmem:[%s886 + $0x160] sm:$0xff]
    %v932 = vld [vmem:[%s886 + $0x168] sm:$0xff]
    %v933 = vld [vmem:[%s886 + $0x170] sm:$0xff]
    %v934 = vld [vmem:[%s886 + $0x178] sm:$0xff]
    %v935 = vld [vmem:[%s886 + $0x180] sm:$0xff]
    %v936 = vld [vmem:[%s886 + $0x188] sm:$0xff]
    %v937 = vld [vmem:[%s886 + $0x190] sm:$0xff]
    %v938 = vld [vmem:[%s886 + $0x198] sm:$0xff]
    %v939 = vld [vmem:[%s886 + $0x1a0] sm:$0xff]
    %v940 = vld [vmem:[%s886 + $0x1a8] sm:$0xff]
    %v941 = vld [vmem:[%s886 + $0x1b0] sm:$0xff]
    %v942 = vld [vmem:[%s886 + $0x1b8] sm:$0xff]
    %v943 = vld [vmem:[%s886 + $0x1c0] sm:$0xff]
    %v944 = vld [vmem:[%s886 + $0x1c8] sm:$0xff]
    %v945 = vld [vmem:[%s886 + $0x1d0] sm:$0xff]
    %v946 = vld [vmem:[%s886 + $0x1d8] sm:$0xff]
    %v947 = vld [vmem:[%s886 + $0x1e0] sm:$0xff]
    %v948 = vld [vmem:[%s886 + $0x1e8] sm:$0xff]
    %v949 = vld [vmem:[%s886 + $0x1f0] sm:$0xff]
    %v950 = vld [vmem:[%s886 + $0x1f8] sm:$0xff]
    %s951 = scalar_lea.vmem [#allocation11], 4
    %v952 = vld [vmem:[%s951] sm:$0x3]
    %v954 = vperm.slane %v952, 0
    %v955 = vperm.slane %v952, 1
    %958 = vmatpush.msra.mxu0 %v917
    %959 = vmatpush.msra.mxu0 %v915
    %960 = vmatpush.msra.mxu0 %v913
    %961 = vmatpush.msra.mxu0 %v911
    %962 = vmatpush.msra.mxu0 %v909
    %963 = vmatpush.msra.mxu0 %v907
    %964 = vmatpush.msra.mxu0 %v905
    %965 = vmatpush.msra.mxu0 %v903
    %966 = vmatpush.msra.mxu0 %v901
    %967 = vmatpush.msra.mxu0 %v899
    %968 = vmatpush.msra.mxu0 %v897
    %969 = vmatpush.msra.mxu0 %v895
    %970 = vmatpush.msra.mxu0 %v893
    %971 = vmatpush.msra.mxu0 %v891
    %972 = vmatpush.msra.mxu0 %v889
    %973 = vmatpush.msra.mxu0 %v887
    %974 = vmatmul.f32.gmra.mxu0 %v884
    %v975 = vpop.f32.mrf.mxu0
    %v976 = vadd.f32 %v954, %v975
    %977 = vdwg.mxu0
    %978 = vmatpush.msra.mxu0 %v949
    %979 = vmatpush.msra.mxu0 %v947
    %980 = vmatpush.msra.mxu0 %v945
    %981 = vmatpush.msra.mxu0 %v943
    %982 = vmatpush.msra.mxu0 %v941
    %983 = vmatpush.msra.mxu0 %v939
    %984 = vmatpush.msra.mxu0 %v937
    %985 = vmatpush.msra.mxu0 %v935
    %986 = vmatpush.msra.mxu0 %v933
    %987 = vmatpush.msra.mxu0 %v931
    %988 = vmatpush.msra.mxu0 %v929
    %989 = vmatpush.msra.mxu0 %v927
    %990 = vmatpush.msra.mxu0 %v925
    %991 = vmatpush.msra.mxu0 %v923
    %992 = vmatpush.msra.mxu0 %v921
    %993 = vmatpush.msra.mxu0 %v919
    %994 = vmatmul.f32.gmra.mxu0 %v885
    %v995 = vpop.f32.mrf.mxu0
    %v996 = vadd.f32 %v976, %v995
    %997 = vdwg.mxu0
    %998 = vmatpush.msra.mxu0 %v918
    %999 = vmatpush.msra.mxu0 %v916
    %1000 = vmatpush.msra.mxu0 %v914
    %1001 = vmatpush.msra.mxu0 %v912
    %1002 = vmatpush.msra.mxu0 %v910
    %1003 = vmatpush.msra.mxu0 %v908
    %1004 = vmatpush.msra.mxu0 %v906
    %1005 = vmatpush.msra.mxu0 %v904
    %1006 = vmatpush.msra.mxu0 %v902
    %1007 = vmatpush.msra.mxu0 %v900
    %1008 = vmatpush.msra.mxu0 %v898
    %1009 = vmatpush.msra.mxu0 %v896
    %1010 = vmatpush.msra.mxu0 %v894
    %1011 = vmatpush.msra.mxu0 %v892
    %1012 = vmatpush.msra.mxu0 %v890
    %1013 = vmatpush.msra.mxu0 %v888
    %1014 = vmatmul.f32.gmra.mxu0 %v884
    %v1015 = vpop.f32.mrf.mxu0
    %v1016 = vadd.f32 %v955, %v1015
    %1017 = vdwg.mxu0
    %1018 = vmatpush.msra.mxu0 %v950
    %1019 = vmatpush.msra.mxu0 %v948
    %1020 = vmatpush.msra.mxu0 %v946
    %1021 = vmatpush.msra.mxu0 %v944
    %1022 = vmatpush.msra.mxu0 %v942
    %1023 = vmatpush.msra.mxu0 %v940
    %1024 = vmatpush.msra.mxu0 %v938
    %1025 = vmatpush.msra.mxu0 %v936
    %1026 = vmatpush.msra.mxu0 %v934
    %1027 = vmatpush.msra.mxu0 %v932
    %1028 = vmatpush.msra.mxu0 %v930
    %1029 = vmatpush.msra.mxu0 %v928
    %1030 = vmatpush.msra.mxu0 %v926
    %1031 = vmatpush.msra.mxu0 %v924
    %1032 = vmatpush.msra.mxu0 %v922
    %1033 = vmatpush.msra.mxu0 %v920
    %1034 = vmatmul.f32.gmra.mxu0 %v885
    %v1035 = vpop.f32.mrf.mxu0
    %v1036 = vadd.f32 %v1016, %v1035
    %1037 = vdwg.mxu0
    %s1038 = scalar_lea.vmem [#allocation5], 5
    %v1039 = vld [vmem:[%s1038] ss:$8 sm:$0x3]
    %vm1040 = vcmp.gt.f32.partialorder %v996, 0.0
    %vm1041 = vcmp.gt.f32.partialorder %v1036, 0.0
    %v1043 = vperm.slane %v1039, 0
    %v1044 = vperm.slane %v1039, 1
    %v1047 = vmul.f32 %v1043, %v996
    %v1048 = vmul.f32 %v1044, %v1036
    %v1049 = vsel %vm1040, %v996, %v1047
    %v1050 = vsel %vm1041, %v1036, %v1048
    %s1051 = scalar_lea.vmem [#allocation13], 1024
    %v1052 = vld [vmem:[%s1051] sm:$0xff]
    %v1053 = vld [vmem:[%s1051 + $0x8] sm:$0xff]
    %v1054 = vld [vmem:[%s1051 + $0x10] sm:$0xff]
    %v1055 = vld [vmem:[%s1051 + $0x18] sm:$0xff]
    %v1056 = vld [vmem:[%s1051 + $0x20] sm:$0xff]
    %v1057 = vld [vmem:[%s1051 + $0x28] sm:$0xff]
    %v1058 = vld [vmem:[%s1051 + $0x30] sm:$0xff]
    %v1059 = vld [vmem:[%s1051 + $0x38] sm:$0xff]
    %v1060 = vld [vmem:[%s1051 + $0x40] sm:$0xff]
    %v1061 = vld [vmem:[%s1051 + $0x48] sm:$0xff]
    %v1062 = vld [vmem:[%s1051 + $0x50] sm:$0xff]
    %v1063 = vld [vmem:[%s1051 + $0x58] sm:$0xff]
    %v1064 = vld [vmem:[%s1051 + $0x60] sm:$0xff]
    %v1065 = vld [vmem:[%s1051 + $0x68] sm:$0xff]
    %v1066 = vld [vmem:[%s1051 + $0x70] sm:$0xff]
    %v1067 = vld [vmem:[%s1051 + $0x78] sm:$0xff]
    %v1068 = vld [vmem:[%s1051 + $0x80] sm:$0xff]
    %v1069 = vld [vmem:[%s1051 + $0x88] sm:$0xff]
    %v1070 = vld [vmem:[%s1051 + $0x90] sm:$0xff]
    %v1071 = vld [vmem:[%s1051 + $0x98] sm:$0xff]
    %v1072 = vld [vmem:[%s1051 + $0xa0] sm:$0xff]
    %v1073 = vld [vmem:[%s1051 + $0xa8] sm:$0xff]
    %v1074 = vld [vmem:[%s1051 + $0xb0] sm:$0xff]
    %v1075 = vld [vmem:[%s1051 + $0xb8] sm:$0xff]
    %v1076 = vld [vmem:[%s1051 + $0xc0] sm:$0xff]
    %v1077 = vld [vmem:[%s1051 + $0xc8] sm:$0xff]
    %v1078 = vld [vmem:[%s1051 + $0xd0] sm:$0xff]
    %v1079 = vld [vmem:[%s1051 + $0xd8] sm:$0xff]
    %v1080 = vld [vmem:[%s1051 + $0xe0] sm:$0xff]
    %v1081 = vld [vmem:[%s1051 + $0xe8] sm:$0xff]
    %v1082 = vld [vmem:[%s1051 + $0xf0] sm:$0xff]
    %v1083 = vld [vmem:[%s1051 + $0xf8] sm:$0xff]
    %v1084 = vld [vmem:[%s1051 + $0x100] sm:$0xff]
    %v1085 = vld [vmem:[%s1051 + $0x108] sm:$0xff]
    %v1086 = vld [vmem:[%s1051 + $0x110] sm:$0xff]
    %v1087 = vld [vmem:[%s1051 + $0x118] sm:$0xff]
    %v1088 = vld [vmem:[%s1051 + $0x120] sm:$0xff]
    %v1089 = vld [vmem:[%s1051 + $0x128] sm:$0xff]
    %v1090 = vld [vmem:[%s1051 + $0x130] sm:$0xff]
    %v1091 = vld [vmem:[%s1051 + $0x138] sm:$0xff]
    %v1092 = vld [vmem:[%s1051 + $0x140] sm:$0xff]
    %v1093 = vld [vmem:[%s1051 + $0x148] sm:$0xff]
    %v1094 = vld [vmem:[%s1051 + $0x150] sm:$0xff]
    %v1095 = vld [vmem:[%s1051 + $0x158] sm:$0xff]
    %v1096 = vld [vmem:[%s1051 + $0x160] sm:$0xff]
    %v1097 = vld [vmem:[%s1051 + $0x168] sm:$0xff]
    %v1098 = vld [vmem:[%s1051 + $0x170] sm:$0xff]
    %v1099 = vld [vmem:[%s1051 + $0x178] sm:$0xff]
    %v1100 = vld [vmem:[%s1051 + $0x180] sm:$0xff]
    %v1101 = vld [vmem:[%s1051 + $0x188] sm:$0xff]
    %v1102 = vld [vmem:[%s1051 + $0x190] sm:$0xff]
    %v1103 = vld [vmem:[%s1051 + $0x198] sm:$0xff]
    %v1104 = vld [vmem:[%s1051 + $0x1a0] sm:$0xff]
    %v1105 = vld [vmem:[%s1051 + $0x1a8] sm:$0xff]
    %v1106 = vld [vmem:[%s1051 + $0x1b0] sm:$0xff]
    %v1107 = vld [vmem:[%s1051 + $0x1b8] sm:$0xff]
    %v1108 = vld [vmem:[%s1051 + $0x1c0] sm:$0xff]
    %v1109 = vld [vmem:[%s1051 + $0x1c8] sm:$0xff]
    %v1110 = vld [vmem:[%s1051 + $0x1d0] sm:$0xff]
    %v1111 = vld [vmem:[%s1051 + $0x1d8] sm:$0xff]
    %v1112 = vld [vmem:[%s1051 + $0x1e0] sm:$0xff]
    %v1113 = vld [vmem:[%s1051 + $0x1e8] sm:$0xff]
    %v1114 = vld [vmem:[%s1051 + $0x1f0] sm:$0xff]
    %v1115 = vld [vmem:[%s1051 + $0x1f8] sm:$0xff]
    %s1116 = scalar_lea.vmem %s7, 4
    %v1117 = vld [vmem:[%s1116] sm:$0x3]
    %v1119 = vperm.slane %v1117, 0
    %v1120 = vperm.slane %v1117, 1
    %1123 = vmatpush.msra.mxu0 %v1082
    %1124 = vmatpush.msra.mxu0 %v1080
    %1125 = vmatpush.msra.mxu0 %v1078
    %1126 = vmatpush.msra.mxu0 %v1076
    %1127 = vmatpush.msra.mxu0 %v1074
    %1128 = vmatpush.msra.mxu0 %v1072
    %1129 = vmatpush.msra.mxu0 %v1070
    %1130 = vmatpush.msra.mxu0 %v1068
    %1131 = vmatpush.msra.mxu0 %v1066
    %1132 = vmatpush.msra.mxu0 %v1064
    %1133 = vmatpush.msra.mxu0 %v1062
    %1134 = vmatpush.msra.mxu0 %v1060
    %1135 = vmatpush.msra.mxu0 %v1058
    %1136 = vmatpush.msra.mxu0 %v1056
    %1137 = vmatpush.msra.mxu0 %v1054
    %1138 = vmatpush.msra.mxu0 %v1052
    %1139 = vmatmul.f32.gmra.mxu0 %v1049
    %v1140 = vpop.f32.mrf.mxu0
    %v1141 = vadd.f32 %v1119, %v1140
    %1142 = vdwg.mxu0
    %1143 = vmatpush.msra.mxu0 %v1114
    %1144 = vmatpush.msra.mxu0 %v1112
    %1145 = vmatpush.msra.mxu0 %v1110
    %1146 = vmatpush.msra.mxu0 %v1108
    %1147 = vmatpush.msra.mxu0 %v1106
    %1148 = vmatpush.msra.mxu0 %v1104
    %1149 = vmatpush.msra.mxu0 %v1102
    %1150 = vmatpush.msra.mxu0 %v1100
    %1151 = vmatpush.msra.mxu0 %v1098
    %1152 = vmatpush.msra.mxu0 %v1096
    %1153 = vmatpush.msra.mxu0 %v1094
    %1154 = vmatpush.msra.mxu0 %v1092
    %1155 = vmatpush.msra.mxu0 %v1090
    %1156 = vmatpush.msra.mxu0 %v1088
    %1157 = vmatpush.msra.mxu0 %v1086
    %1158 = vmatpush.msra.mxu0 %v1084
    %1159 = vmatmul.f32.gmra.mxu0 %v1050
    %v1160 = vpop.f32.mrf.mxu0
    %v1161 = vadd.f32 %v1141, %v1160
    %1162 = vdwg.mxu0
    %1163 = vmatpush.msra.mxu0 %v1083
    %1164 = vmatpush.msra.mxu0 %v1081
    %1165 = vmatpush.msra.mxu0 %v1079
    %1166 = vmatpush.msra.mxu0 %v1077
    %1167 = vmatpush.msra.mxu0 %v1075
    %1168 = vmatpush.msra.mxu0 %v1073
    %1169 = vmatpush.msra.mxu0 %v1071
    %1170 = vmatpush.msra.mxu0 %v1069
    %1171 = vmatpush.msra.mxu0 %v1067
    %1172 = vmatpush.msra.mxu0 %v1065
    %1173 = vmatpush.msra.mxu0 %v1063
    %1174 = vmatpush.msra.mxu0 %v1061
    %1175 = vmatpush.msra.mxu0 %v1059
    %1176 = vmatpush.msra.mxu0 %v1057
    %1177 = vmatpush.msra.mxu0 %v1055
    %1178 = vmatpush.msra.mxu0 %v1053
    %1179 = vmatmul.f32.gmra.mxu0 %v1049
    %v1180 = vpop.f32.mrf.mxu0
    %v1181 = vadd.f32 %v1120, %v1180
    %1182 = vdwg.mxu0
    %1183 = vmatpush.msra.mxu0 %v1115
    %1184 = vmatpush.msra.mxu0 %v1113
    %1185 = vmatpush.msra.mxu0 %v1111
    %1186 = vmatpush.msra.mxu0 %v1109
    %1187 = vmatpush.msra.mxu0 %v1107
    %1188 = vmatpush.msra.mxu0 %v1105
    %1189 = vmatpush.msra.mxu0 %v1103
    %1190 = vmatpush.msra.mxu0 %v1101
    %1191 = vmatpush.msra.mxu0 %v1099
    %1192 = vmatpush.msra.mxu0 %v1097
    %1193 = vmatpush.msra.mxu0 %v1095
    %1194 = vmatpush.msra.mxu0 %v1093
    %1195 = vmatpush.msra.mxu0 %v1091
    %1196 = vmatpush.msra.mxu0 %v1089
    %1197 = vmatpush.msra.mxu0 %v1087
    %1198 = vmatpush.msra.mxu0 %v1085
    %1199 = vmatmul.f32.gmra.mxu0 %v1050
    %v1200 = vpop.f32.mrf.mxu0
    %v1201 = vadd.f32 %v1181, %v1200
    %1202 = vdwg.mxu0
    %s1203 = scalar_lea.vmem [#allocation5], 6
    %v1204 = vld [vmem:[%s1203] ss:$8 sm:$0x3]
    %vm1205 = vcmp.gt.f32.partialorder %v1161, 0.0
    %vm1206 = vcmp.gt.f32.partialorder %v1201, 0.0
    %v1208 = vperm.slane %v1204, 0
    %v1209 = vperm.slane %v1204, 1
    %v1212 = vmul.f32 %v1208, %v1161
    %v1213 = vmul.f32 %v1209, %v1201
    %v1214 = vsel %vm1205, %v1161, %v1212
    %v1215 = vsel %vm1206, %v1201, %v1213
    %v1216 = vadd.f32 %v884, %v1214
    %v1217 = vadd.f32 %v885, %v1215
    %v1218 = vld [vmem:[#allocation14] sm:$0xff]
    %v1219 = vld [vmem:[#allocation14 + $0x8] sm:$0xff]
    %v1220 = vld [vmem:[#allocation14 + $0x10] sm:$0xff]
    %v1221 = vld [vmem:[#allocation14 + $0x18] sm:$0xff]
    %v1222 = vld [vmem:[#allocation14 + $0x20] sm:$0xff]
    %v1223 = vld [vmem:[#allocation14 + $0x28] sm:$0xff]
    %v1224 = vld [vmem:[#allocation14 + $0x30] sm:$0xff]
    %v1225 = vld [vmem:[#allocation14 + $0x38] sm:$0xff]
    %v1226 = vld [vmem:[#allocation14 + $0x40] sm:$0xff]
    %v1227 = vld [vmem:[#allocation14 + $0x48] sm:$0xff]
    %v1228 = vld [vmem:[#allocation14 + $0x50] sm:$0xff]
    %v1229 = vld [vmem:[#allocation14 + $0x58] sm:$0xff]
    %v1230 = vld [vmem:[#allocation14 + $0x60] sm:$0xff]
    %v1231 = vld [vmem:[#allocation14 + $0x68] sm:$0xff]
    %v1232 = vld [vmem:[#allocation14 + $0x70] sm:$0xff]
    %v1233 = vld [vmem:[#allocation14 + $0x78] sm:$0xff]
    %v1234 = vld [vmem:[#allocation14 + $0x80] sm:$0xff]
    %v1235 = vld [vmem:[#allocation14 + $0x88] sm:$0xff]
    %v1236 = vld [vmem:[#allocation14 + $0x90] sm:$0xff]
    %v1237 = vld [vmem:[#allocation14 + $0x98] sm:$0xff]
    %v1238 = vld [vmem:[#allocation14 + $0xa0] sm:$0xff]
    %v1239 = vld [vmem:[#allocation14 + $0xa8] sm:$0xff]
    %v1240 = vld [vmem:[#allocation14 + $0xb0] sm:$0xff]
    %v1241 = vld [vmem:[#allocation14 + $0xb8] sm:$0xff]
    %v1242 = vld [vmem:[#allocation14 + $0xc0] sm:$0xff]
    %v1243 = vld [vmem:[#allocation14 + $0xc8] sm:$0xff]
    %v1244 = vld [vmem:[#allocation14 + $0xd0] sm:$0xff]
    %v1245 = vld [vmem:[#allocation14 + $0xd8] sm:$0xff]
    %v1246 = vld [vmem:[#allocation14 + $0xe0] sm:$0xff]
    %v1247 = vld [vmem:[#allocation14 + $0xe8] sm:$0xff]
    %v1248 = vld [vmem:[#allocation14 + $0xf0] sm:$0xff]
    %v1249 = vld [vmem:[#allocation14 + $0xf8] sm:$0xff]
    %v1250 = vld [vmem:[%s9] sm:$0x1]
    %v1252 = vperm.slane %v1250, 0
    %1254 = vmatpush.msra.mxu0 %v1233
    %1255 = vmatpush.msra.mxu0 %v1232
    %1256 = vmatpush.msra.mxu0 %v1231
    %1257 = vmatpush.msra.mxu0 %v1230
    %1258 = vmatpush.msra.mxu0 %v1229
    %1259 = vmatpush.msra.mxu0 %v1228
    %1260 = vmatpush.msra.mxu0 %v1227
    %1261 = vmatpush.msra.mxu0 %v1226
    %1262 = vmatpush.msra.mxu0 %v1225
    %1263 = vmatpush.msra.mxu0 %v1224
    %1264 = vmatpush.msra.mxu0 %v1223
    %1265 = vmatpush.msra.mxu0 %v1222
    %1266 = vmatpush.msra.mxu0 %v1221
    %1267 = vmatpush.msra.mxu0 %v1220
    %1268 = vmatpush.msra.mxu0 %v1219
    %1269 = vmatpush.msra.mxu0 %v1218
    %1270 = vmatmul.f32.gmra.mxu0 %v1216
    %v1271 = vpop.f32.mrf.mxu0
    %v1272 = vadd.f32 %v1252, %v1271
    %1273 = vdwg.mxu0
    %1274 = vmatpush.msra.mxu0 %v1249
    %1275 = vmatpush.msra.mxu0 %v1248
    %1276 = vmatpush.msra.mxu0 %v1247
    %1277 = vmatpush.msra.mxu0 %v1246
    %1278 = vmatpush.msra.mxu0 %v1245
    %1279 = vmatpush.msra.mxu0 %v1244
    %1280 = vmatpush.msra.mxu0 %v1243
    %1281 = vmatpush.msra.mxu0 %v1242
    %1282 = vmatpush.msra.mxu0 %v1241
    %1283 = vmatpush.msra.mxu0 %v1240
    %1284 = vmatpush.msra.mxu0 %v1239
    %1285 = vmatpush.msra.mxu0 %v1238
    %1286 = vmatpush.msra.mxu0 %v1237
    %1287 = vmatpush.msra.mxu0 %v1236
    %1288 = vmatpush.msra.mxu0 %v1235
    %1289 = vmatpush.msra.mxu0 %v1234
    %1290 = vmatmul.f32.gmra.mxu0 %v1217
    %v1291 = vpop.f32.mrf.mxu0
    %v1292 = vadd.f32 %v1272, %v1291
    %1293 = vdwg.mxu0
    %1294 = vst [vmem:[#allocation16] sm:$0xff] %v1292
    // Predicated region
    $region74: #{tpu_custom_call.1} parent=1 // pred_check
      _
    $region75: #{tpu_custom_call.1} parent=1 // pred_check_branch
      %1296 = sbr.rel (0) target = $region77
    $region76: #{tpu_custom_call.1} parent=1 // pred_region
      %1298 = vsyncadd [#allocation4], 0
      %s1300 = sshll.u32 [#allocation16], 4
      %s1301 = int_to_ptr.vmem [resolvable:$true] %s1300
      %s1302 = sshll.u32 %s10, 4
      %s1303 = int_to_ptr.hbm [resolvable:$true] %s1302
      %1305 = dma.vmem_to_hbm [thread:$0]  %s1301, 128, %s1303, [#allocation4]
    $region77: #{tpu_custom_call.1} parent=1 // pred_fallthru
      _
    // Predicated region
    $region78: #{tpu_custom_call.1} parent=1 // pred_check
      _
    $region79: #{tpu_custom_call.1} parent=1 // pred_check_branch
      %1307 = sbr.rel (0) target = $region81
    $region80: #{tpu_custom_call.1} parent=1 // pred_region
      %1309 = dma.done [#allocation4], 128
    $region81: #{tpu_custom_call.1} parent=1 // pred_fallthru
      _
    %1310 = vsyncpa [#allocation3], 1
    %1311 = vsyncpa [#allocation6], 1
    %1312 = vsyncpa [#allocation9], 1
    %1313 = vsyncpa [#allocation12], 1
    %1314 = vsyncpa [#allocation15], 1
    %1315 = vsyncpa [#allocation4], 1

// kernel: tpu_custom_call.1
$region0: #{tpu_custom_call.1}
  #allocation0 [shape = 'u32[]', space=smem, size = 0x4, offset = 0x4, fixed_abs, tag = 'smem constant byte address 0x4 - core index']
  #allocation1 [shape = 'u32[72,128]{1,0:T(1,128)}', space=vmem, size = 0x9000, scoped, tag = 'internal scratch']
  %s0 = inlined_call_operand.hbm [shape: f32[8,32], index: 0, kind: input, shape index: {}]
  %s1 = inlined_call_operand.hbm [shape: f32[7,256], index: 1, kind: input, shape index: {}]
  %s2 = inlined_call_operand.hbm [shape: f32[32,256], index: 2, kind: input, shape index: {}]
  %s3 = inlined_call_operand.hbm [shape: f32[1,256], index: 3, kind: input, shape index: {}]
  %s4 = inlined_call_operand.hbm [shape: f32[3,256,256], index: 4, kind: input, shape index: {}]
  %s5 = inlined_call_operand.hbm [shape: f32[3,1,256], index: 5, kind: input, shape index: {}]
  %s6 = inlined_call_operand.hbm [shape: f32[3,256,256], index: 6, kind: input, shape index: {}]
  %s7 = inlined_call_operand.vmem [shape: f32[3,1,256], index: 7, kind: input, shape index: {}]
  %s8 = inlined_call_operand.hbm [shape: f32[256,128], index: 8, kind: input, shape index: {}]
  %s9 = inlined_call_operand.vmem [shape: f32[1,128], index: 9, kind: input, shape index: {}]
  %s10 = inlined_call_operand.hbm [shape: f32[8,128], index: 10, kind: output, shape index: {}]
  %s11 = sld [smem:[#allocation0]]
  $region82: #{tpu_custom_call.1} parent=0
    _
  %s13 = ssub.s32 1, %s11
  %s14 = scalar_select 0, %s13, %s11
  $region1: #{tpu_custom_call.1} parent=0
    #allocation2 [shape = 'u8[4096]{0}', space=vmem, size = 0x1000, scoped, tag = 'input window, operand 0, single buffered']
    #allocation3 [shape = 's32[1]{0}', space=sflag, size = 0x4, scoped, tag = 'scoped memory for tpu_custom_call.1']
    #allocation4 [shape = 's32[1]{0}', space=sflag, size = 0x4, scoped, tag = 'scoped memory for tpu_custom_call.1']
    #allocation5 [shape = 'u8[8192]{0}', space=vmem, size = 0x2000, scoped, tag = 'input window, operand 1, single buffered']
    #allocation6 [shape = 's32[1]{0}', space=sflag, size = 0x4, scoped, tag = 'scoped memory for tpu_custom_call.1']
    #allocation7 [shape = 'u8[32768]{0}', space=vmem, size = 0x8000, scoped, tag = 'input window, operand 2, single buffered']
    #allocation8 [shape = 'u8[1024]{0}', space=vmem, size = 0x400, scoped, tag = 'input window, operand 3, single buffered']
    #allocation9 [shape = 's32[1]{0}', space=sflag, size = 0x4, scoped, tag = 'scoped memory for tpu_custom_call.1']
    #allocation10 [shape = 'u8[786432]{0}', space=vmem, size = 0xc0000, scoped, tag = 'input window, operand 4, single buffered']
    #allocation11 [shape = 'u8[3072]{0}', space=vmem, size = 0xc00, scoped, tag = 'input window, operand 5, single buffered']
    #allocation12 [shape = 's32[1]{0}', space=sflag, size = 0x4, scoped, tag = 'scoped memory for tpu_custom_call.1']
    #allocation13 [shape = 'u8[786432]{0}', space=vmem, size = 0xc0000, scoped, tag = 'input window, operand 6, single buffered']
    #allocation14 [shape = 'u8[131072]{0}', space=vmem, size = 0x20000, scoped, tag = 'input window, operand 8, single buffered']
    #allocation15 [shape = 's32[1]{0}', space=sflag, size = 0x4, scoped, tag = 'scoped memory for tpu_custom_call.1']
    #allocation16 [shape = 'u8[4096]{0}', space=vmem, size = 0x1000, scoped, tag = 'output window, operand 0, single buffered']
    %15 = vsyncpa [#allocation3], 0
    %16 = vsyncpa [#allocation6], 0
    %17 = vsyncpa [#allocation9], 0
    %18 = vsyncpa [#allocation12], 0
    %19 = vsyncpa [#allocation15], 0
    %20 = vsyncpa [#allocation4], 0
    // Predicated region
    $region2: #{tpu_custom_call.1} parent=1 // pred_check
      _
    $region3: #{tpu_custom_call.1} parent=1 // pred_check_branch
      %22 = sbr.rel (0) target = $region5
    $region4: #{tpu_custom_call.1} parent=1 // pred_region
      %24 = vsyncadd [#allocation3], 0
      %s26 = sshll.u32 %s0, 4
      %s27 = int_to_ptr.hbm [resolvable:$true] %s26
      %s28 = sshll.u32 [#allocation2], 4
      %s29 = int_to_ptr.vmem [resolvable:$true] %s28
      %31 = dma.hbm_to_vmem [thread:$0]  %s27, 128, %s29, [#allocation3]
    $region5: #{tpu_custom_call.1} parent=1 // pred_fallthru
      _
    // Predicated region
    $region6: #{tpu_custom_call.1} parent=1 // pred_check
      _
    $region7: #{tpu_custom_call.1} parent=1 // pred_check_branch
      %33 = sbr.rel (0) target = $region9
    $region8: #{tpu_custom_call.1} parent=1 // pred_region
      %35 = vsyncadd [#allocation6], 0
      %s37 = sshll.u32 %s1, 4
      %s38 = int_to_ptr.hbm [resolvable:$true] %s37
      %s39 = sshll.u32 [#allocation5], 4
      %s40 = int_to_ptr.vmem [resolvable:$true] %s39
      %42 = dma.hbm_to_vmem [thread:$0]  %s38, 256, %s40, [#allocation6]
    $region9: #{tpu_custom_call.1} parent=1 // pred_fallthru
      _
    // Predicated region
    $region10: #{tpu_custom_call.1} parent=1 // pred_check
      _
    $region11: #{tpu_custom_call.1} parent=1 // pred_check_branch
      %44 = sbr.rel (0) target = $region13
    $region12: #{tpu_custom_call.1} parent=1 // pred_region
      %46 = vsyncadd [#allocation6], 0
      %s47 = sshll.u32 %s2, 4
      %s48 = int_to_ptr.hbm [resolvable:$true] %s47
      %s49 = sshll.u32 [#allocation7], 4
      %s50 = int_to_ptr.vmem [resolvable:$true] %s49
      %55 = dma.hbm_to_vmem [thread:$0]  %s48, 1024, %s50, [#allocation6], 256, 256, 16
    $region13: #{tpu_custom_call.1} parent=1 // pred_fallthru
      _
    // Predicated region
    $region14: #{tpu_custom_call.1} parent=1 // pred_check
      _
    $region15: #{tpu_custom_call.1} parent=1 // pred_check_branch
      %57 = sbr.rel (0) target = $region17
    $region16: #{tpu_custom_call.1} parent=1 // pred_region
      %59 = vsyncadd [#allocation9], 0
      %s61 = sshll.u32 %s3, 4
      %s62 = int_to_ptr.hbm [resolvable:$true] %s61
      %s63 = sshll.u32 [#allocation8], 4
      %s64 = int_to_ptr.vmem [resolvable:$true] %s63
      %66 = dma.hbm_to_vmem [thread:$0]  %s62, 32, %s64, [#allocation9]
    $region17: #{tpu_custom_call.1} parent=1 // pred_fallthru
      _
    // Predicated region
    $region18: #{tpu_custom_call.1} parent=1 // pred_check
      _
    $region19: #{tpu_custom_call.1} parent=1 // pred_check_branch
      %68 = sbr.rel (0) target = $region21
    $region20: #{tpu_custom_call.1} parent=1 // pred_region
      %70 = vsyncadd [#allocation9], 0
      %s71 = sshll.u32 %s4, 4
      %s72 = int_to_ptr.hbm [resolvable:$true] %s71
      %s73 = sshll.u32 [#allocation10], 4
      %s74 = int_to_ptr.vmem [resolvable:$true] %s73
      %79 = dma.hbm_to_vmem [thread:$0]  %s72, 24576, %s74, [#allocation9], 256, 256, 16
    $region21: #{tpu_custom_call.1} parent=1 // pred_fallthru
      _
    // Predicated region
    $region22: #{tpu_custom_call.1} parent=1 // pred_check
      _
    $region23: #{tpu_custom_call.1} parent=1 // pred_check_branch
      %81 = sbr.rel (0) target = $region25
    $region24: #{tpu_custom_call.1} parent=1 // pred_region
      %83 = vsyncadd [#allocation12], 0
      %s84 = sshll.u32 %s5, 4
      %s85 = int_to_ptr.hbm [resolvable:$true] %s84
      %s86 = sshll.u32 [#allocation11], 4
      %s87 = int_to_ptr.vmem [resolvable:$true] %s86
      %92 = dma.hbm_to_vmem [thread:$0]  %s85, 96, %s87, [#allocation12], 32, 32, 2
    $region25: #{tpu_custom_call.1} parent=1 // pred_fallthru
      _
    // Predicated region
    $region26: #{tpu_custom_call.1} parent=1 // pred_check
      _
    $region27: #{tpu_custom_call.1} parent=1 // pred_check_branch
      %94 = sbr.rel (0) target = $region29
    $region28: #{tpu_custom_call.1} parent=1 // pred_region
      %96 = vsyncadd [#allocation12], 0
      %s97 = sshll.u32 %s6, 4
      %s98 = int_to_ptr.hbm [resolvable:$true] %s97
      %s99 = sshll.u32 [#allocation13], 4
      %s100 = int_to_ptr.vmem [resolvable:$true] %s99
      %105 = dma.hbm_to_vmem [thread:$0]  %s98, 24576, %s100, [#allocation12], 256, 256, 16
    $region29: #{tpu_custom_call.1} parent=1 // pred_fallthru
      _
    // Predicated region
    $region30: #{tpu_custom_call.1} parent=1 // pred_check
      _
    $region31: #{tpu_custom_call.1} parent=1 // pred_check_branch
      %107 = sbr.rel (0) target = $region33
    $region32: #{tpu_custom_call.1} parent=1 // pred_region
      _
    $region33: #{tpu_custom_call.1} parent=1 // pred_fallthru
      _
    // Predicated region
    $region34: #{tpu_custom_call.1} parent=1 // pred_check
      _
    $region35: #{tpu_custom_call.1} parent=1 // pred_check_branch
      %109 = sbr.rel (0) target = $region37
    $region36: #{tpu_custom_call.1} parent=1 // pred_region
      %111 = vsyncadd [#allocation15], 0
      %s112 = sshll.u32 %s8, 4
      %s113 = int_to_ptr.hbm [resolvable:$true] %s112
      %s114 = sshll.u32 [#allocation14], 4
      %s115 = int_to_ptr.vmem [resolvable:$true] %s114
      %120 = dma.hbm_to_vmem [thread:$0]  %s113, 4096, %s115, [#allocation15], 128, 128, 8
    $region37: #{tpu_custom_call.1} parent=1 // pred_fallthru
      _
    // Predicated region
    $region38: #{tpu_custom_call.1} parent=1 // pred_check
      _
    $region39: #{tpu_custom_call.1} parent=1 // pred_check_branch
      %122 = sbr.rel (0) target = $region41
    $region40: #{tpu_custom_call.1} parent=1 // pred_region
      _
    $region41: #{tpu_custom_call.1} parent=1 // pred_fallthru
      _
    // Predicated region
    $region42: #{tpu_custom_call.1} parent=1 // pred_check
      _
    $region43: #{tpu_custom_call.1} parent=1 // pred_check_branch
      %124 = sbr.rel (0) target = $region45
    $region44: #{tpu_custom_call.1} parent=1 // pred_region
      %126 = dma.done [#allocation3], 128
    $region45: #{tpu_custom_call.1} parent=1 // pred_fallthru
      _
    // Predicated region
    $region46: #{tpu_custom_call.1} parent=1 // pred_check
      _
    $region47: #{tpu_custom_call.1} parent=1 // pred_check_branch
      %128 = sbr.rel (0) target = $region49
    $region48: #{tpu_custom_call.1} parent=1 // pred_region
      %130 = dma.done [#allocation6], 256
    $region49: #{tpu_custom_call.1} parent=1 // pred_fallthru
      _
    // Predicated region
    $region50: #{tpu_custom_call.1} parent=1 // pred_check
      _
    $region51: #{tpu_custom_call.1} parent=1 // pred_check_branch
      %132 = sbr.rel (0) target = $region53
    $region52: #{tpu_custom_call.1} parent=1 // pred_region
      %134 = dma.done [#allocation6], 1024
    $region53: #{tpu_custom_call.1} parent=1 // pred_fallthru
      _
    // Predicated region
    $region54: #{tpu_custom_call.1} parent=1 // pred_check
      _
    $region55: #{tpu_custom_call.1} parent=1 // pred_check_branch
      %136 = sbr.rel (0) target = $region57
    $region56: #{tpu_custom_call.1} parent=1 // pred_region
      %138 = dma.done [#allocation9], 32
    $region57: #{tpu_custom_call.1} parent=1 // pred_fallthru
      _
    // Predicated region
    $region58: #{tpu_custom_call.1} parent=1 // pred_check
      _
    $region59: #{tpu_custom_call.1} parent=1 // pred_check_branch
      %140 = sbr.rel (0) target = $region61
    $region60: #{tpu_custom_call.1} parent=1 // pred_region
      %142 = dma.done [#allocation9], 24576
    $region61: #{tpu_custom_call.1} parent=1 // pred_fallthru
      _
    // Predicated region
    $region62: #{tpu_custom_call.1} parent=1 // pred_check
      _
    $region63: #{tpu_custom_call.1} parent=1 // pred_check_branch
      %144 = sbr.rel (0) target = $region65
    $region64: #{tpu_custom_call.1} parent=1 // pred_region
      %146 = dma.done [#allocation12], 96
    $region65: #{tpu_custom_call.1} parent=1 // pred_fallthru
      _
    // Predicated region
    $region66: #{tpu_custom_call.1} parent=1 // pred_check
      _
    $region67: #{tpu_custom_call.1} parent=1 // pred_check_branch
      %148 = sbr.rel (0) target = $region69
    $region68: #{tpu_custom_call.1} parent=1 // pred_region
      %150 = dma.done [#allocation12], 24576
    $region69: #{tpu_custom_call.1} parent=1 // pred_fallthru
      _
    // Predicated region
    $region70: #{tpu_custom_call.1} parent=1 // pred_check
      _
    $region71: #{tpu_custom_call.1} parent=1 // pred_check_branch
      %152 = sbr.rel (0) target = $region73
    $region72: #{tpu_custom_call.1} parent=1 // pred_region
      %154 = dma.done [#allocation15], 4096
    $region73: #{tpu_custom_call.1} parent=1 // pred_fallthru
      _
    %v155 = vld [vmem:[#allocation2] sm:$0xff]
    %v156 = vld [vmem:[#allocation7] sm:$0xff]
    %v157 = vld [vmem:[#allocation7 + $0x8] sm:$0xff]
    %v158 = vld [vmem:[#allocation7 + $0x10] sm:$0xff]
    %v159 = vld [vmem:[#allocation7 + $0x18] sm:$0xff]
    %v160 = vld [vmem:[#allocation7 + $0x20] sm:$0xff]
    %v161 = vld [vmem:[#allocation7 + $0x28] sm:$0xff]
    %v162 = vld [vmem:[#allocation7 + $0x30] sm:$0xff]
    %v163 = vld [vmem:[#allocation7 + $0x38] sm:$0xff]
    %v164 = vld [vmem:[#allocation8] sm:$0x3]
    %v166 = vperm.slane %v164, 0
    %v167 = vperm.slane %v164, 1
    %vm170 = vcmask 261120
    %v172 = vsel %vm170, %v155, 0
    %174 = vmatpush.msra.mxu0 0.0
    %175 = vmatpush.msra.mxu0 0.0
    %176 = vmatpush.msra.mxu0 0.0
    %177 = vmatpush.msra.mxu0 0.0
    %178 = vmatpush.msra.mxu0 0.0
    %179 = vmatpush.msra.mxu0 0.0
    %180 = vmatpush.msra.mxu0 0.0
    %181 = vmatpush.msra.mxu0 0.0
    %182 = vmatpush.msra.mxu0 0.0
    %183 = vmatpush.msra.mxu0 0.0
    %184 = vmatpush.msra.mxu0 0.0
    %185 = vmatpush.msra.mxu0 0.0
    %186 = vmatpush.msra.mxu0 %v162
    %187 = vmatpush.msra.mxu0 %v160
    %188 = vmatpush.msra.mxu0 %v158
    %189 = vmatpush.msra.mxu0 %v156
    %190 = vmatmul.f32.gmra.mxu0 %v172
    %v191 = vpop.f32.mrf.mxu0
    %v192 = vadd.f32 %v166, %v191
    %193 = vdwg.mxu0
    %194 = vmatpush.msra.mxu0 0.0
    %195 = vmatpush.msra.mxu0 0.0
    %196 = vmatpush.msra.mxu0 0.0
    %197 = vmatpush.msra.mxu0 0.0
    %198 = vmatpush.msra.mxu0 0.0
    %199 = vmatpush.msra.mxu0 0.0
    %200 = vmatpush.msra.mxu0 0.0
    %201 = vmatpush.msra.mxu0 0.0
    %202 = vmatpush.msra.mxu0 0.0
    %203 = vmatpush.msra.mxu0 0.0
    %204 = vmatpush.msra.mxu0 0.0
    %205 = vmatpush.msra.mxu0 0.0
    %206 = vmatpush.msra.mxu0 %v163
    %207 = vmatpush.msra.mxu0 %v161
    %208 = vmatpush.msra.mxu0 %v159
    %209 = vmatpush.msra.mxu0 %v157
    %210 = vmatmul.f32.gmra.mxu0 %v172
    %v211 = vpop.f32.mrf.mxu0
    %v212 = vadd.f32 %v167, %v211
    %213 = vdwg.mxu0
    %v214 = vld [vmem:[#allocation5] ss:$8 sm:$0x3]
    %vm215 = vcmp.gt.f32.partialorder %v192, 0.0
    %vm216 = vcmp.gt.f32.partialorder %v212, 0.0
    %v218 = vperm.slane %v214, 0
    %v219 = vperm.slane %v214, 1
    %v222 = vmul.f32 %v218, %v192
    %v223 = vmul.f32 %v219, %v212
    %v224 = vsel %vm215, %v192, %v222
    %v225 = vsel %vm216, %v212, %v223
    %v226 = vld [vmem:[#allocation10] sm:$0xff]
    %v227 = vld [vmem:[#allocation10 + $0x8] sm:$0xff]
    %v228 = vld [vmem:[#allocation10 + $0x10] sm:$0xff]
    %v229 = vld [vmem:[#allocation10 + $0x18] sm:$0xff]
    %v230 = vld [vmem:[#allocation10 + $0x20] sm:$0xff]
    %v231 = vld [vmem:[#allocation10 + $0x28] sm:$0xff]
    %v232 = vld [vmem:[#allocation10 + $0x30] sm:$0xff]
    %v233 = vld [vmem:[#allocation10 + $0x38] sm:$0xff]
    %v234 = vld [vmem:[#allocation10 + $0x40] sm:$0xff]
    %v235 = vld [vmem:[#allocation10 + $0x48] sm:$0xff]
    %v236 = vld [vmem:[#allocation10 + $0x50] sm:$0xff]
    %v237 = vld [vmem:[#allocation10 + $0x58] sm:$0xff]
    %v238 = vld [vmem:[#allocation10 + $0x60] sm:$0xff]
    %v239 = vld [vmem:[#allocation10 + $0x68] sm:$0xff]
    %v240 = vld [vmem:[#allocation10 + $0x70] sm:$0xff]
    %v241 = vld [vmem:[#allocation10 + $0x78] sm:$0xff]
    %v242 = vld [vmem:[#allocation10 + $0x80] sm:$0xff]
    %v243 = vld [vmem:[#allocation10 + $0x88] sm:$0xff]
    %v244 = vld [vmem:[#allocation10 + $0x90] sm:$0xff]
    %v245 = vld [vmem:[#allocation10 + $0x98] sm:$0xff]
    %v246 = vld [vmem:[#allocation10 + $0xa0] sm:$0xff]
    %v247 = vld [vmem:[#allocation10 + $0xa8] sm:$0xff]
    %v248 = vld [vmem:[#allocation10 + $0xb0] sm:$0xff]
    %v249 = vld [vmem:[#allocation10 + $0xb8] sm:$0xff]
    %v250 = vld [vmem:[#allocation10 + $0xc0] sm:$0xff]
    %v251 = vld [vmem:[#allocation10 + $0xc8] sm:$0xff]
    %v252 = vld [vmem:[#allocation10 + $0xd0] sm:$0xff]
    %v253 = vld [vmem:[#allocation10 + $0xd8] sm:$0xff]
    %v254 = vld [vmem:[#allocation10 + $0xe0] sm:$0xff]
    %v255 = vld [vmem:[#allocation10 + $0xe8] sm:$0xff]
    %v256 = vld [vmem:[#allocation10 + $0xf0] sm:$0xff]
    %v257 = vld [vmem:[#allocation10 + $0xf8] sm:$0xff]
    %v258 = vld [vmem:[#allocation10 + $0x100] sm:$0xff]
    %v259 = vld [vmem:[#allocation10 + $0x108] sm:$0xff]
    %v260 = vld [vmem:[#allocation10 + $0x110] sm:$0xff]
    %v261 = vld [vmem:[#allocation10 + $0x118] sm:$0xff]
    %v262 = vld [vmem:[#allocation10 + $0x120] sm:$0xff]
    %v263 = vld [vmem:[#allocation10 + $0x128] sm:$0xff]
    %v264 = vld [vmem:[#allocation10 + $0x130] sm:$0xff]
    %v265 = vld [vmem:[#allocation10 + $0x138] sm:$0xff]
    %v266 = vld [vmem:[#allocation10 + $0x140] sm:$0xff]
    %v267 = vld [vmem:[#allocation10 + $0x148] sm:$0xff]
    %v268 = vld [vmem:[#allocation10 + $0x150] sm:$0xff]
    %v269 = vld [vmem:[#allocation10 + $0x158] sm:$0xff]
    %v270 = vld [vmem:[#allocation10 + $0x160] sm:$0xff]
    %v271 = vld [vmem:[#allocation10 + $0x168] sm:$0xff]
    %v272 = vld [vmem:[#allocation10 + $0x170] sm:$0xff]
    %v273 = vld [vmem:[#allocation10 + $0x178] sm:$0xff]
    %v274 = vld [vmem:[#allocation10 + $0x180] sm:$0xff]
    %v275 = vld [vmem:[#allocation10 + $0x188] sm:$0xff]
    %v276 = vld [vmem:[#allocation10 + $0x190] sm:$0xff]
    %v277 = vld [vmem:[#allocation10 + $0x198] sm:$0xff]
    %v278 = vld [vmem:[#allocation10 + $0x1a0] sm:$0xff]
    %v279 = vld [vmem:[#allocation10 + $0x1a8] sm:$0xff]
    %v280 = vld [vmem:[#allocation10 + $0x1b0] sm:$0xff]
    %v281 = vld [vmem:[#allocation10 + $0x1b8] sm:$0xff]
    %v282 = vld [vmem:[#allocation10 + $0x1c0] sm:$0xff]
    %v283 = vld [vmem:[#allocation10 + $0x1c8] sm:$0xff]
    %v284 = vld [vmem:[#allocation10 + $0x1d0] sm:$0xff]
    %v285 = vld [vmem:[#allocation10 + $0x1d8] sm:$0xff]
    %v286 = vld [vmem:[#allocation10 + $0x1e0] sm:$0xff]
    %v287 = vld [vmem:[#allocation10 + $0x1e8] sm:$0xff]
    %v288 = vld [vmem:[#allocation10 + $0x1f0] sm:$0xff]
    %v289 = vld [vmem:[#allocation10 + $0x1f8] sm:$0xff]
    %v290 = vld [vmem:[#allocation11] sm:$0x3]
    %v292 = vperm.slane %v290, 0
    %v293 = vperm.slane %v290, 1
    %296 = vmatpush.msra.mxu0 %v256
    %297 = vmatpush.msra.mxu0 %v254
    %298 = vmatpush.msra.mxu0 %v252
    %299 = vmatpush.msra.mxu0 %v250
    %300 = vmatpush.msra.mxu0 %v248
    %301 = vmatpush.msra.mxu0 %v246
    %302 = vmatpush.msra.mxu0 %v244
    %303 = vmatpush.msra.mxu0 %v242
    %304 = vmatpush.msra.mxu0 %v240
    %305 = vmatpush.msra.mxu0 %v238
    %306 = vmatpush.msra.mxu0 %v236
    %307 = vmatpush.msra.mxu0 %v234
    %308 = vmatpush.msra.mxu0 %v232
    %309 = vmatpush.msra.mxu0 %v230
    %310 = vmatpush.msra.mxu0 %v228
    %311 = vmatpush.msra.mxu0 %v226
    %312 = vmatmul.f32.gmra.mxu0 %v224
    %v313 = vpop.f32.mrf.mxu0
    %v314 = vadd.f32 %v292, %v313
    %315 = vdwg.mxu0
    %316 = vmatpush.msra.mxu0 %v288
    %317 = vmatpush.msra.mxu0 %v286
    %318 = vmatpush.msra.mxu0 %v284
    %319 = vmatpush.msra.mxu0 %v282
    %320 = vmatpush.msra.mxu0 %v280
    %321 = vmatpush.msra.mxu0 %v278
    %322 = vmatpush.msra.mxu0 %v276
    %323 = vmatpush.msra.mxu0 %v274
    %324 = vmatpush.msra.mxu0 %v272
    %325 = vmatpush.msra.mxu0 %v270
    %326 = vmatpush.msra.mxu0 %v268
    %327 = vmatpush.msra.mxu0 %v266
    %328 = vmatpush.msra.mxu0 %v264
    %329 = vmatpush.msra.mxu0 %v262
    %330 = vmatpush.msra.mxu0 %v260
    %331 = vmatpush.msra.mxu0 %v258
    %332 = vmatmul.f32.gmra.mxu0 %v225
    %v333 = vpop.f32.mrf.mxu0
    %v334 = vadd.f32 %v314, %v333
    %335 = vdwg.mxu0
    %336 = vmatpush.msra.mxu0 %v257
    %337 = vmatpush.msra.mxu0 %v255
    %338 = vmatpush.msra.mxu0 %v253
    %339 = vmatpush.msra.mxu0 %v251
    %340 = vmatpush.msra.mxu0 %v249
    %341 = vmatpush.msra.mxu0 %v247
    %342 = vmatpush.msra.mxu0 %v245
    %343 = vmatpush.msra.mxu0 %v243
    %344 = vmatpush.msra.mxu0 %v241
    %345 = vmatpush.msra.mxu0 %v239
    %346 = vmatpush.msra.mxu0 %v237
    %347 = vmatpush.msra.mxu0 %v235
    %348 = vmatpush.msra.mxu0 %v233
    %349 = vmatpush.msra.mxu0 %v231
    %350 = vmatpush.msra.mxu0 %v229
    %351 = vmatpush.msra.mxu0 %v227
    %352 = vmatmul.f32.gmra.mxu0 %v224
    %v353 = vpop.f32.mrf.mxu0
    %v354 = vadd.f32 %v293, %v353
    %355 = vdwg.mxu0
    %356 = vmatpush.msra.mxu0 %v289
    %357 = vmatpush.msra.mxu0 %v287
    %358 = vmatpush.msra.mxu0 %v285
    %359 = vmatpush.msra.mxu0 %v283
    %360 = vmatpush.msra.mxu0 %v281
    %361 = vmatpush.msra.mxu0 %v279
    %362 = vmatpush.msra.mxu0 %v277
    %363 = vmatpush.msra.mxu0 %v275
    %364 = vmatpush.msra.mxu0 %v273
    %365 = vmatpush.msra.mxu0 %v271
    %366 = vmatpush.msra.mxu0 %v269
    %367 = vmatpush.msra.mxu0 %v267
    %368 = vmatpush.msra.mxu0 %v265
    %369 = vmatpush.msra.mxu0 %v263
    %370 = vmatpush.msra.mxu0 %v261
    %371 = vmatpush.msra.mxu0 %v259
    %372 = vmatmul.f32.gmra.mxu0 %v225
    %v373 = vpop.f32.mrf.mxu0
    %v374 = vadd.f32 %v354, %v373
    %375 = vdwg.mxu0
    %s376 = scalar_lea.vmem [#allocation5], 1
    %v377 = vld [vmem:[%s376] ss:$8 sm:$0x3]
    %vm378 = vcmp.gt.f32.partialorder %v334, 0.0
    %vm379 = vcmp.gt.f32.partialorder %v374, 0.0
    %v381 = vperm.slane %v377, 0
    %v382 = vperm.slane %v377, 1
    %v385 = vmul.f32 %v381, %v334
    %v386 = vmul.f32 %v382, %v374
    %v387 = vsel %vm378, %v334, %v385
    %v388 = vsel %vm379, %v374, %v386
    %v389 = vld [vmem:[#allocation13] sm:$0xff]
    %v390 = vld [vmem:[#allocation13 + $0x8] sm:$0xff]
    %v391 = vld [vmem:[#allocation13 + $0x10] sm:$0xff]
    %v392 = vld [vmem:[#allocation13 + $0x18] sm:$0xff]
    %v393 = vld [vmem:[#allocation13 + $0x20] sm:$0xff]
    %v394 = vld [vmem:[#allocation13 + $0x28] sm:$0xff]
    %v395 = vld [vmem:[#allocation13 + $0x30] sm:$0xff]
    %v396 = vld [vmem:[#allocation13 + $0x38] sm:$0xff]
    %v397 = vld [vmem:[#allocation13 + $0x40] sm:$0xff]
    %v398 = vld [vmem:[#allocation13 + $0x48] sm:$0xff]
    %v399 = vld [vmem:[#allocation13 + $0x50] sm:$0xff]
    %v400 = vld [vmem:[#allocation13 + $0x58] sm:$0xff]
    %v401 = vld [vmem:[#allocation13 + $0x60] sm:$0xff]
    %v402 = vld [vmem:[#allocation13 + $0x68] sm:$0xff]
    %v403 = vld [vmem:[#allocation13 + $0x70] sm:$0xff]
    %v404 = vld [vmem:[#allocation13 + $0x78] sm:$0xff]
    %v405 = vld [vmem:[#allocation13 + $0x80] sm:$0xff]
    %v406 = vld [vmem:[#allocation13 + $0x88] sm:$0xff]
    %v407 = vld [vmem:[#allocation13 + $0x90] sm:$0xff]
    %v408 = vld [vmem:[#allocation13 + $0x98] sm:$0xff]
    %v409 = vld [vmem:[#allocation13 + $0xa0] sm:$0xff]
    %v410 = vld [vmem:[#allocation13 + $0xa8] sm:$0xff]
    %v411 = vld [vmem:[#allocation13 + $0xb0] sm:$0xff]
    %v412 = vld [vmem:[#allocation13 + $0xb8] sm:$0xff]
    %v413 = vld [vmem:[#allocation13 + $0xc0] sm:$0xff]
    %v414 = vld [vmem:[#allocation13 + $0xc8] sm:$0xff]
    %v415 = vld [vmem:[#allocation13 + $0xd0] sm:$0xff]
    %v416 = vld [vmem:[#allocation13 + $0xd8] sm:$0xff]
    %v417 = vld [vmem:[#allocation13 + $0xe0] sm:$0xff]
    %v418 = vld [vmem:[#allocation13 + $0xe8] sm:$0xff]
    %v419 = vld [vmem:[#allocation13 + $0xf0] sm:$0xff]
    %v420 = vld [vmem:[#allocation13 + $0xf8] sm:$0xff]
    %v421 = vld [vmem:[#allocation13 + $0x100] sm:$0xff]
    %v422 = vld [vmem:[#allocation13 + $0x108] sm:$0xff]
    %v423 = vld [vmem:[#allocation13 + $0x110] sm:$0xff]
    %v424 = vld [vmem:[#allocation13 + $0x118] sm:$0xff]
    %v425 = vld [vmem:[#allocation13 + $0x120] sm:$0xff]
    %v426 = vld [vmem:[#allocation13 + $0x128] sm:$0xff]
    %v427 = vld [vmem:[#allocation13 + $0x130] sm:$0xff]
    %v428 = vld [vmem:[#allocation13 + $0x138] sm:$0xff]
    %v429 = vld [vmem:[#allocation13 + $0x140] sm:$0xff]
    %v430 = vld [vmem:[#allocation13 + $0x148] sm:$0xff]
    %v431 = vld [vmem:[#allocation13 + $0x150] sm:$0xff]
    %v432 = vld [vmem:[#allocation13 + $0x158] sm:$0xff]
    %v433 = vld [vmem:[#allocation13 + $0x160] sm:$0xff]
    %v434 = vld [vmem:[#allocation13 + $0x168] sm:$0xff]
    %v435 = vld [vmem:[#allocation13 + $0x170] sm:$0xff]
    %v436 = vld [vmem:[#allocation13 + $0x178] sm:$0xff]
    %v437 = vld [vmem:[#allocation13 + $0x180] sm:$0xff]
    %v438 = vld [vmem:[#allocation13 + $0x188] sm:$0xff]
    %v439 = vld [vmem:[#allocation13 + $0x190] sm:$0xff]
    %v440 = vld [vmem:[#allocation13 + $0x198] sm:$0xff]
    %v441 = vld [vmem:[#allocation13 + $0x1a0] sm:$0xff]
    %v442 = vld [vmem:[#allocation13 + $0x1a8] sm:$0xff]
    %v443 = vld [vmem:[#allocation13 + $0x1b0] sm:$0xff]
    %v444 = vld [vmem:[#allocation13 + $0x1b8] sm:$0xff]
    %v445 = vld [vmem:[#allocation13 + $0x1c0] sm:$0xff]
    %v446 = vld [vmem:[#allocation13 + $0x1c8] sm:$0xff]
    %v447 = vld [vmem:[#allocation13 + $0x1d0] sm:$0xff]
    %v448 = vld [vmem:[#allocation13 + $0x1d8] sm:$0xff]
    %v449 = vld [vmem:[#allocation13 + $0x1e0] sm:$0xff]
    %v450 = vld [vmem:[#allocation13 + $0x1e8] sm:$0xff]
    %v451 = vld [vmem:[#allocation13 + $0x1f0] sm:$0xff]
    %v452 = vld [vmem:[#allocation13 + $0x1f8] sm:$0xff]
    %v453 = vld [vmem:[%s7] sm:$0x3]
    %v455 = vperm.slane %v453, 0
    %v456 = vperm.slane %v453, 1
    %459 = vmatpush.msra.mxu0 %v419
    %460 = vmatpush.msra.mxu0 %v417
    %461 = vmatpush.msra.mxu0 %v415
    %462 = vmatpush.msra.mxu0 %v413
    %463 = vmatpush.msra.mxu0 %v411
    %464 = vmatpush.msra.mxu0 %v409
    %465 = vmatpush.msra.mxu0 %v407
    %466 = vmatpush.msra.mxu0 %v405
    %467 = vmatpush.msra.mxu0 %v403
    %468 = vmatpush.msra.mxu0 %v401
    %469 = vmatpush.msra.mxu0 %v399
    %470 = vmatpush.msra.mxu0 %v397
    %471 = vmatpush.msra.mxu0 %v395
    %472 = vmatpush.msra.mxu0 %v393
    %473 = vmatpush.msra.mxu0 %v391
    %474 = vmatpush.msra.mxu0 %v389
    %475 = vmatmul.f32.gmra.mxu0 %v387
    %v476 = vpop.f32.mrf.mxu0
    %v477 = vadd.f32 %v455, %v476
    %478 = vdwg.mxu0
    %479 = vmatpush.msra.mxu0 %v451
    %480 = vmatpush.msra.mxu0 %v449
    %481 = vmatpush.msra.mxu0 %v447
    %482 = vmatpush.msra.mxu0 %v445
    %483 = vmatpush.msra.mxu0 %v443
    %484 = vmatpush.msra.mxu0 %v441
    %485 = vmatpush.msra.mxu0 %v439
    %486 = vmatpush.msra.mxu0 %v437
    %487 = vmatpush.msra.mxu0 %v435
    %488 = vmatpush.msra.mxu0 %v433
    %489 = vmatpush.msra.mxu0 %v431
    %490 = vmatpush.msra.mxu0 %v429
    %491 = vmatpush.msra.mxu0 %v427
    %492 = vmatpush.msra.mxu0 %v425
    %493 = vmatpush.msra.mxu0 %v423
    %494 = vmatpush.msra.mxu0 %v421
    %495 = vmatmul.f32.gmra.mxu0 %v388
    %v496 = vpop.f32.mrf.mxu0
    %v497 = vadd.f32 %v477, %v496
    %498 = vdwg.mxu0
    %499 = vmatpush.msra.mxu0 %v420
    %500 = vmatpush.msra.mxu0 %v418
    %501 = vmatpush.msra.mxu0 %v416
    %502 = vmatpush.msra.mxu0 %v414
    %503 = vmatpush.msra.mxu0 %v412
    %504 = vmatpush.msra.mxu0 %v410
    %505 = vmatpush.msra.mxu0 %v408
    %506 = vmatpush.msra.mxu0 %v406
    %507 = vmatpush.msra.mxu0 %v404
    %508 = vmatpush.msra.mxu0 %v402
    %509 = vmatpush.msra.mxu0 %v400
    %510 = vmatpush.msra.mxu0 %v398
    %511 = vmatpush.msra.mxu0 %v396
    %512 = vmatpush.msra.mxu0 %v394
    %513 = vmatpush.msra.mxu0 %v392
    %514 = vmatpush.msra.mxu0 %v390
    %515 = vmatmul.f32.gmra.mxu0 %v387
    %v516 = vpop.f32.mrf.mxu0
    %v517 = vadd.f32 %v456, %v516
    %518 = vdwg.mxu0
    %519 = vmatpush.msra.mxu0 %v452
    %520 = vmatpush.msra.mxu0 %v450
    %521 = vmatpush.msra.mxu0 %v448
    %522 = vmatpush.msra.mxu0 %v446
    %523 = vmatpush.msra.mxu0 %v444
    %524 = vmatpush.msra.mxu0 %v442
    %525 = vmatpush.msra.mxu0 %v440
    %526 = vmatpush.msra.mxu0 %v438
    %527 = vmatpush.msra.mxu0 %v436
    %528 = vmatpush.msra.mxu0 %v434
    %529 = vmatpush.msra.mxu0 %v432
    %530 = vmatpush.msra.mxu0 %v430
    %531 = vmatpush.msra.mxu0 %v428
    %532 = vmatpush.msra.mxu0 %v426
    %533 = vmatpush.msra.mxu0 %v424
    %534 = vmatpush.msra.mxu0 %v422
    %535 = vmatmul.f32.gmra.mxu0 %v388
    %v536 = vpop.f32.mrf.mxu0
    %v537 = vadd.f32 %v517, %v536
    %538 = vdwg.mxu0
    %s539 = scalar_lea.vmem [#allocation5], 2
    %v540 = vld [vmem:[%s539] ss:$8 sm:$0x3]
    %vm541 = vcmp.gt.f32.partialorder %v497, 0.0
    %vm542 = vcmp.gt.f32.partialorder %v537, 0.0
    %v544 = vperm.slane %v540, 0
    %v545 = vperm.slane %v540, 1
    %v548 = vmul.f32 %v544, %v497
    %v549 = vmul.f32 %v545, %v537
    %v550 = vsel %vm541, %v497, %v548
    %v551 = vsel %vm542, %v537, %v549
    %v552 = vadd.f32 %v224, %v550
    %v553 = vadd.f32 %v225, %v551
    %s554 = scalar_lea.vmem [#allocation10], 512
    %v555 = vld [vmem:[%s554] sm:$0xff]
    %v556 = vld [vmem:[%s554 + $0x8] sm:$0xff]
    %v557 = vld [vmem:[%s554 + $0x10] sm:$0xff]
    %v558 = vld [vmem:[%s554 + $0x18] sm:$0xff]
    %v559 = vld [vmem:[%s554 + $0x20] sm:$0xff]
    %v560 = vld [vmem:[%s554 + $0x28] sm:$0xff]
    %v561 = vld [vmem:[%s554 + $0x30] sm:$0xff]
    %v562 = vld [vmem:[%s554 + $0x38] sm:$0xff]
    %v563 = vld [vmem:[%s554 + $0x40] sm:$0xff]
    %v564 = vld [vmem:[%s554 + $0x48] sm:$0xff]
    %v565 = vld [vmem:[%s554 + $0x50] sm:$0xff]
    %v566 = vld [vmem:[%s554 + $0x58] sm:$0xff]
    %v567 = vld [vmem:[%s554 + $0x60] sm:$0xff]
    %v568 = vld [vmem:[%s554 + $0x68] sm:$0xff]
    %v569 = vld [vmem:[%s554 + $0x70] sm:$0xff]
    %v570 = vld [vmem:[%s554 + $0x78] sm:$0xff]
    %v571 = vld [vmem:[%s554 + $0x80] sm:$0xff]
    %v572 = vld [vmem:[%s554 + $0x88] sm:$0xff]
    %v573 = vld [vmem:[%s554 + $0x90] sm:$0xff]
    %v574 = vld [vmem:[%s554 + $0x98] sm:$0xff]
    %v575 = vld [vmem:[%s554 + $0xa0] sm:$0xff]
    %v576 = vld [vmem:[%s554 + $0xa8] sm:$0xff]
    %v577 = vld [vmem:[%s554 + $0xb0] sm:$0xff]
    %v578 = vld [vmem:[%s554 + $0xb8] sm:$0xff]
    %v579 = vld [vmem:[%s554 + $0xc0] sm:$0xff]
    %v580 = vld [vmem:[%s554 + $0xc8] sm:$0xff]
    %v581 = vld [vmem:[%s554 + $0xd0] sm:$0xff]
    %v582 = vld [vmem:[%s554 + $0xd8] sm:$0xff]
    %v583 = vld [vmem:[%s554 + $0xe0] sm:$0xff]
    %v584 = vld [vmem:[%s554 + $0xe8] sm:$0xff]
    %v585 = vld [vmem:[%s554 + $0xf0] sm:$0xff]
    %v586 = vld [vmem:[%s554 + $0xf8] sm:$0xff]
    %v587 = vld [vmem:[%s554 + $0x100] sm:$0xff]
    %v588 = vld [vmem:[%s554 + $0x108] sm:$0xff]
    %v589 = vld [vmem:[%s554 + $0x110] sm:$0xff]
    %v590 = vld [vmem:[%s554 + $0x118] sm:$0xff]
    %v591 = vld [vmem:[%s554 + $0x120] sm:$0xff]
    %v592 = vld [vmem:[%s554 + $0x128] sm:$0xff]
    %v593 = vld [vmem:[%s554 + $0x130] sm:$0xff]
    %v594 = vld [vmem:[%s554 + $0x138] sm:$0xff]
    %v595 = vld [vmem:[%s554 + $0x140] sm:$0xff]
    %v596 = vld [vmem:[%s554 + $0x148] sm:$0xff]
    %v597 = vld [vmem:[%s554 + $0x150] sm:$0xff]
    %v598 = vld [vmem:[%s554 + $0x158] sm:$0xff]
    %v599 = vld [vmem:[%s554 + $0x160] sm:$0xff]
    %v600 = vld [vmem:[%s554 + $0x168] sm:$0xff]
    %v601 = vld [vmem:[%s554 + $0x170] sm:$0xff]
    %v602 = vld [vmem:[%s554 + $0x178] sm:$0xff]
    %v603 = vld [vmem:[%s554 + $0x180] sm:$0xff]
    %v604 = vld [vmem:[%s554 + $0x188] sm:$0xff]
    %v605 = vld [vmem:[%s554 + $0x190] sm:$0xff]
    %v606 = vld [vmem:[%s554 + $0x198] sm:$0xff]
    %v607 = vld [vmem:[%s554 + $0x1a0] sm:$0xff]
    %v608 = vld [vmem:[%s554 + $0x1a8] sm:$0xff]
    %v609 = vld [vmem:[%s554 + $0x1b0] sm:$0xff]
    %v610 = vld [vmem:[%s554 + $0x1b8] sm:$0xff]
    %v611 = vld [vmem:[%s554 + $0x1c0] sm:$0xff]
    %v612 = vld [vmem:[%s554 + $0x1c8] sm:$0xff]
    %v613 = vld [vmem:[%s554 + $0x1d0] sm:$0xff]
    %v614 = vld [vmem:[%s554 + $0x1d8] sm:$0xff]
    %v615 = vld [vmem:[%s554 + $0x1e0] sm:$0xff]
    %v616 = vld [vmem:[%s554 + $0x1e8] sm:$0xff]
    %v617 = vld [vmem:[%s554 + $0x1f0] sm:$0xff]
    %v618 = vld [vmem:[%s554 + $0x1f8] sm:$0xff]
    %s619 = scalar_lea.vmem [#allocation11], 2
    %v620 = vld [vmem:[%s619] sm:$0x3]
    %v622 = vperm.slane %v620, 0
    %v623 = vperm.slane %v620, 1
    %626 = vmatpush.msra.mxu0 %v585
    %627 = vmatpush.msra.mxu0 %v583
    %628 = vmatpush.msra.mxu0 %v581
    %629 = vmatpush.msra.mxu0 %v579
    %630 = vmatpush.msra.mxu0 %v577
    %631 = vmatpush.msra.mxu0 %v575
    %632 = vmatpush.msra.mxu0 %v573
    %633 = vmatpush.msra.mxu0 %v571
    %634 = vmatpush.msra.mxu0 %v569
    %635 = vmatpush.msra.mxu0 %v567
    %636 = vmatpush.msra.mxu0 %v565
    %637 = vmatpush.msra.mxu0 %v563
    %638 = vmatpush.msra.mxu0 %v561
    %639 = vmatpush.msra.mxu0 %v559
    %640 = vmatpush.msra.mxu0 %v557
    %641 = vmatpush.msra.mxu0 %v555
    %642 = vmatmul.f32.gmra.mxu0 %v552
    %v643 = vpop.f32.mrf.mxu0
    %v644 = vadd.f32 %v622, %v643
    %645 = vdwg.mxu0
    %646 = vmatpush.msra.mxu0 %v617
    %647 = vmatpush.msra.mxu0 %v615
    %648 = vmatpush.msra.mxu0 %v613
    %649 = vmatpush.msra.mxu0 %v611
    %650 = vmatpush.msra.mxu0 %v609
    %651 = vmatpush.msra.mxu0 %v607
    %652 = vmatpush.msra.mxu0 %v605
    %653 = vmatpush.msra.mxu0 %v603
    %654 = vmatpush.msra.mxu0 %v601
    %655 = vmatpush.msra.mxu0 %v599
    %656 = vmatpush.msra.mxu0 %v597
    %657 = vmatpush.msra.mxu0 %v595
    %658 = vmatpush.msra.mxu0 %v593
    %659 = vmatpush.msra.mxu0 %v591
    %660 = vmatpush.msra.mxu0 %v589
    %661 = vmatpush.msra.mxu0 %v587
    %662 = vmatmul.f32.gmra.mxu0 %v553
    %v663 = vpop.f32.mrf.mxu0
    %v664 = vadd.f32 %v644, %v663
    %665 = vdwg.mxu0
    %666 = vmatpush.msra.mxu0 %v586
    %667 = vmatpush.msra.mxu0 %v584
    %668 = vmatpush.msra.mxu0 %v582
    %669 = vmatpush.msra.mxu0 %v580
    %670 = vmatpush.msra.mxu0 %v578
    %671 = vmatpush.msra.mxu0 %v576
    %672 = vmatpush.msra.mxu0 %v574
    %673 = vmatpush.msra.mxu0 %v572
    %674 = vmatpush.msra.mxu0 %v570
    %675 = vmatpush.msra.mxu0 %v568
    %676 = vmatpush.msra.mxu0 %v566
    %677 = vmatpush.msra.mxu0 %v564
    %678 = vmatpush.msra.mxu0 %v562
    %679 = vmatpush.msra.mxu0 %v560
    %680 = vmatpush.msra.mxu0 %v558
    %681 = vmatpush.msra.mxu0 %v556
    %682 = vmatmul.f32.gmra.mxu0 %v552
    %v683 = vpop.f32.mrf.mxu0
    %v684 = vadd.f32 %v623, %v683
    %685 = vdwg.mxu0
    %686 = vmatpush.msra.mxu0 %v618
    %687 = vmatpush.msra.mxu0 %v616
    %688 = vmatpush.msra.mxu0 %v614
    %689 = vmatpush.msra.mxu0 %v612
    %690 = vmatpush.msra.mxu0 %v610
    %691 = vmatpush.msra.mxu0 %v608
    %692 = vmatpush.msra.mxu0 %v606
    %693 = vmatpush.msra.mxu0 %v604
    %694 = vmatpush.msra.mxu0 %v602
    %695 = vmatpush.msra.mxu0 %v600
    %696 = vmatpush.msra.mxu0 %v598
    %697 = vmatpush.msra.mxu0 %v596
    %698 = vmatpush.msra.mxu0 %v594
    %699 = vmatpush.msra.mxu0 %v592
    %700 = vmatpush.msra.mxu0 %v590
    %701 = vmatpush.msra.mxu0 %v588
    %702 = vmatmul.f32.gmra.mxu0 %v553
    %v703 = vpop.f32.mrf.mxu0
    %v704 = vadd.f32 %v684, %v703
    %705 = vdwg.mxu0
    %s706 = scalar_lea.vmem [#allocation5], 3
    %v707 = vld [vmem:[%s706] ss:$8 sm:$0x3]
    %vm708 = vcmp.gt.f32.partialorder %v664, 0.0
    %vm709 = vcmp.gt.f32.partialorder %v704, 0.0
    %v711 = vperm.slane %v707, 0
    %v712 = vperm.slane %v707, 1
    %v715 = vmul.f32 %v711, %v664
    %v716 = vmul.f32 %v712, %v704
    %v717 = vsel %vm708, %v664, %v715
    %v718 = vsel %vm709, %v704, %v716
    %s719 = scalar_lea.vmem [#allocation13], 512
    %v720 = vld [vmem:[%s719] sm:$0xff]
    %v721 = vld [vmem:[%s719 + $0x8] sm:$0xff]
    %v722 = vld [vmem:[%s719 + $0x10] sm:$0xff]
    %v723 = vld [vmem:[%s719 + $0x18] sm:$0xff]
    %v724 = vld [vmem:[%s719 + $0x20] sm:$0xff]
    %v725 = vld [vmem:[%s719 + $0x28] sm:$0xff]
    %v726 = vld [vmem:[%s719 + $0x30] sm:$0xff]
    %v727 = vld [vmem:[%s719 + $0x38] sm:$0xff]
    %v728 = vld [vmem:[%s719 + $0x40] sm:$0xff]
    %v729 = vld [vmem:[%s719 + $0x48] sm:$0xff]
    %v730 = vld [vmem:[%s719 + $0x50] sm:$0xff]
    %v731 = vld [vmem:[%s719 + $0x58] sm:$0xff]
    %v732 = vld [vmem:[%s719 + $0x60] sm:$0xff]
    %v733 = vld [vmem:[%s719 + $0x68] sm:$0xff]
    %v734 = vld [vmem:[%s719 + $0x70] sm:$0xff]
    %v735 = vld [vmem:[%s719 + $0x78] sm:$0xff]
    %v736 = vld [vmem:[%s719 + $0x80] sm:$0xff]
    %v737 = vld [vmem:[%s719 + $0x88] sm:$0xff]
    %v738 = vld [vmem:[%s719 + $0x90] sm:$0xff]
    %v739 = vld [vmem:[%s719 + $0x98] sm:$0xff]
    %v740 = vld [vmem:[%s719 + $0xa0] sm:$0xff]
    %v741 = vld [vmem:[%s719 + $0xa8] sm:$0xff]
    %v742 = vld [vmem:[%s719 + $0xb0] sm:$0xff]
    %v743 = vld [vmem:[%s719 + $0xb8] sm:$0xff]
    %v744 = vld [vmem:[%s719 + $0xc0] sm:$0xff]
    %v745 = vld [vmem:[%s719 + $0xc8] sm:$0xff]
    %v746 = vld [vmem:[%s719 + $0xd0] sm:$0xff]
    %v747 = vld [vmem:[%s719 + $0xd8] sm:$0xff]
    %v748 = vld [vmem:[%s719 + $0xe0] sm:$0xff]
    %v749 = vld [vmem:[%s719 + $0xe8] sm:$0xff]
    %v750 = vld [vmem:[%s719 + $0xf0] sm:$0xff]
    %v751 = vld [vmem:[%s719 + $0xf8] sm:$0xff]
    %v752 = vld [vmem:[%s719 + $0x100] sm:$0xff]
    %v753 = vld [vmem:[%s719 + $0x108] sm:$0xff]
    %v754 = vld [vmem:[%s719 + $0x110] sm:$0xff]
    %v755 = vld [vmem:[%s719 + $0x118] sm:$0xff]
    %v756 = vld [vmem:[%s719 + $0x120] sm:$0xff]
    %v757 = vld [vmem:[%s719 + $0x128] sm:$0xff]
    %v758 = vld [vmem:[%s719 + $0x130] sm:$0xff]
    %v759 = vld [vmem:[%s719 + $0x138] sm:$0xff]
    %v760 = vld [vmem:[%s719 + $0x140] sm:$0xff]
    %v761 = vld [vmem:[%s719 + $0x148] sm:$0xff]
    %v762 = vld [vmem:[%s719 + $0x150] sm:$0xff]
    %v763 = vld [vmem:[%s719 + $0x158] sm:$0xff]
    %v764 = vld [vmem:[%s719 + $0x160] sm:$0xff]
    %v765 = vld [vmem:[%s719 + $0x168] sm:$0xff]
    %v766 = vld [vmem:[%s719 + $0x170] sm:$0xff]
    %v767 = vld [vmem:[%s719 + $0x178] sm:$0xff]
    %v768 = vld [vmem:[%s719 + $0x180] sm:$0xff]
    %v769 = vld [vmem:[%s719 + $0x188] sm:$0xff]
    %v770 = vld [vmem:[%s719 + $0x190] sm:$0xff]
    %v771 = vld [vmem:[%s719 + $0x198] sm:$0xff]
    %v772 = vld [vmem:[%s719 + $0x1a0] sm:$0xff]
    %v773 = vld [vmem:[%s719 + $0x1a8] sm:$0xff]
    %v774 = vld [vmem:[%s719 + $0x1b0] sm:$0xff]
    %v775 = vld [vmem:[%s719 + $0x1b8] sm:$0xff]
    %v776 = vld [vmem:[%s719 + $0x1c0] sm:$0xff]
    %v777 = vld [vmem:[%s719 + $0x1c8] sm:$0xff]
    %v778 = vld [vmem:[%s719 + $0x1d0] sm:$0xff]
    %v779 = vld [vmem:[%s719 + $0x1d8] sm:$0xff]
    %v780 = vld [vmem:[%s719 + $0x1e0] sm:$0xff]
    %v781 = vld [vmem:[%s719 + $0x1e8] sm:$0xff]
    %v782 = vld [vmem:[%s719 + $0x1f0] sm:$0xff]
    %v783 = vld [vmem:[%s719 + $0x1f8] sm:$0xff]
    %s784 = scalar_lea.vmem %s7, 2
    %v785 = vld [vmem:[%s784] sm:$0x3]
    %v787 = vperm.slane %v785, 0
    %v788 = vperm.slane %v785, 1
    %791 = vmatpush.msra.mxu0 %v750
    %792 = vmatpush.msra.mxu0 %v748
    %793 = vmatpush.msra.mxu0 %v746
    %794 = vmatpush.msra.mxu0 %v744
    %795 = vmatpush.msra.mxu0 %v742
    %796 = vmatpush.msra.mxu0 %v740
    %797 = vmatpush.msra.mxu0 %v738
    %798 = vmatpush.msra.mxu0 %v736
    %799 = vmatpush.msra.mxu0 %v734
    %800 = vmatpush.msra.mxu0 %v732
    %801 = vmatpush.msra.mxu0 %v730
    %802 = vmatpush.msra.mxu0 %v728
    %803 = vmatpush.msra.mxu0 %v726
    %804 = vmatpush.msra.mxu0 %v724
    %805 = vmatpush.msra.mxu0 %v722
    %806 = vmatpush.msra.mxu0 %v720
    %807 = vmatmul.f32.gmra.mxu0 %v717
    %v808 = vpop.f32.mrf.mxu0
    %v809 = vadd.f32 %v787, %v808
    %810 = vdwg.mxu0
    %811 = vmatpush.msra.mxu0 %v782
    %812 = vmatpush.msra.mxu0 %v780
    %813 = vmatpush.msra.mxu0 %v778
    %814 = vmatpush.msra.mxu0 %v776
    %815 = vmatpush.msra.mxu0 %v774
    %816 = vmatpush.msra.mxu0 %v772
    %817 = vmatpush.msra.mxu0 %v770
    %818 = vmatpush.msra.mxu0 %v768
    %819 = vmatpush.msra.mxu0 %v766
    %820 = vmatpush.msra.mxu0 %v764
    %821 = vmatpush.msra.mxu0 %v762
    %822 = vmatpush.msra.mxu0 %v760
    %823 = vmatpush.msra.mxu0 %v758
    %824 = vmatpush.msra.mxu0 %v756
    %825 = vmatpush.msra.mxu0 %v754
    %826 = vmatpush.msra.mxu0 %v752
    %827 = vmatmul.f32.gmra.mxu0 %v718
    %v828 = vpop.f32.mrf.mxu0
    %v829 = vadd.f32 %v809, %v828
    %830 = vdwg.mxu0
    %831 = vmatpush.msra.mxu0 %v751
    %832 = vmatpush.msra.mxu0 %v749
    %833 = vmatpush.msra.mxu0 %v747
    %834 = vmatpush.msra.mxu0 %v745
    %835 = vmatpush.msra.mxu0 %v743
    %836 = vmatpush.msra.mxu0 %v741
    %837 = vmatpush.msra.mxu0 %v739
    %838 = vmatpush.msra.mxu0 %v737
    %839 = vmatpush.msra.mxu0 %v735
    %840 = vmatpush.msra.mxu0 %v733
    %841 = vmatpush.msra.mxu0 %v731
    %842 = vmatpush.msra.mxu0 %v729
    %843 = vmatpush.msra.mxu0 %v727
    %844 = vmatpush.msra.mxu0 %v725
    %845 = vmatpush.msra.mxu0 %v723
    %846 = vmatpush.msra.mxu0 %v721
    %847 = vmatmul.f32.gmra.mxu0 %v717
    %v848 = vpop.f32.mrf.mxu0
    %v849 = vadd.f32 %v788, %v848
    %850 = vdwg.mxu0
    %851 = vmatpush.msra.mxu0 %v783
    %852 = vmatpush.msra.mxu0 %v781
    %853 = vmatpush.msra.mxu0 %v779
    %854 = vmatpush.msra.mxu0 %v777
    %855 = vmatpush.msra.mxu0 %v775
    %856 = vmatpush.msra.mxu0 %v773
    %857 = vmatpush.msra.mxu0 %v771
    %858 = vmatpush.msra.mxu0 %v769
    %859 = vmatpush.msra.mxu0 %v767
    %860 = vmatpush.msra.mxu0 %v765
    %861 = vmatpush.msra.mxu0 %v763
    %862 = vmatpush.msra.mxu0 %v761
    %863 = vmatpush.msra.mxu0 %v759
    %864 = vmatpush.msra.mxu0 %v757
    %865 = vmatpush.msra.mxu0 %v755
    %866 = vmatpush.msra.mxu0 %v753
    %867 = vmatmul.f32.gmra.mxu0 %v718
    %v868 = vpop.f32.mrf.mxu0
    %v869 = vadd.f32 %v849, %v868
    %870 = vdwg.mxu0
    %s871 = scalar_lea.vmem [#allocation5], 4
    %v872 = vld [vmem:[%s871] ss:$8 sm:$0x3]
    %vm873 = vcmp.gt.f32.partialorder %v829, 0.0
    %vm874 = vcmp.gt.f32.partialorder %v869, 0.0
    %v876 = vperm.slane %v872, 0
    %v877 = vperm.slane %v872, 1
    %v880 = vmul.f32 %v876, %v829
    %v881 = vmul.f32 %v877, %v869
    %v882 = vsel %vm873, %v829, %v880
    %v883 = vsel %vm874, %v869, %v881
    %v884 = vadd.f32 %v552, %v882
    %v885 = vadd.f32 %v553, %v883
    %s886 = scalar_lea.vmem [#allocation10], 1024
    %v887 = vld [vmem:[%s886] sm:$0xff]
    %v888 = vld [vmem:[%s886 + $0x8] sm:$0xff]
    %v889 = vld [vmem:[%s886 + $0x10] sm:$0xff]
    %v890 = vld [vmem:[%s886 + $0x18] sm:$0xff]
    %v891 = vld [vmem:[%s886 + $0x20] sm:$0xff]
    %v892 = vld [vmem:[%s886 + $0x28] sm:$0xff]
    %v893 = vld [vmem:[%s886 + $0x30] sm:$0xff]
    %v894 = vld [vmem:[%s886 + $0x38] sm:$0xff]
    %v895 = vld [vmem:[%s886 + $0x40] sm:$0xff]
    %v896 = vld [vmem:[%s886 + $0x48] sm:$0xff]
    %v897 = vld [vmem:[%s886 + $0x50] sm:$0xff]
    %v898 = vld [vmem:[%s886 + $0x58] sm:$0xff]
    %v899 = vld [vmem:[%s886 + $0x60] sm:$0xff]
    %v900 = vld [vmem:[%s886 + $0x68] sm:$0xff]
    %v901 = vld [vmem:[%s886 + $0x70] sm:$0xff]
    %v902 = vld [vmem:[%s886 + $0x78] sm:$0xff]
    %v903 = vld [vmem:[%s886 + $0x80] sm:$0xff]
    %v904 = vld [vmem:[%s886 + $0x88] sm:$0xff]
    %v905 = vld [vmem:[%s886 + $0x90] sm:$0xff]
    %v906 = vld [vmem:[%s886 + $0x98] sm:$0xff]
    %v907 = vld [vmem:[%s886 + $0xa0] sm:$0xff]
    %v908 = vld [vmem:[%s886 + $0xa8] sm:$0xff]
    %v909 = vld [vmem:[%s886 + $0xb0] sm:$0xff]
    %v910 = vld [vmem:[%s886 + $0xb8] sm:$0xff]
    %v911 = vld [vmem:[%s886 + $0xc0] sm:$0xff]
    %v912 = vld [vmem:[%s886 + $0xc8] sm:$0xff]
    %v913 = vld [vmem:[%s886 + $0xd0] sm:$0xff]
    %v914 = vld [vmem:[%s886 + $0xd8] sm:$0xff]
    %v915 = vld [vmem:[%s886 + $0xe0] sm:$0xff]
    %v916 = vld [vmem:[%s886 + $0xe8] sm:$0xff]
    %v917 = vld [vmem:[%s886 + $0xf0] sm:$0xff]
    %v918 = vld [vmem:[%s886 + $0xf8] sm:$0xff]
    %v919 = vld [vmem:[%s886 + $0x100] sm:$0xff]
    %v920 = vld [vmem:[%s886 + $0x108] sm:$0xff]
    %v921 = vld [vmem:[%s886 + $0x110] sm:$0xff]
    %v922 = vld [vmem:[%s886 + $0x118] sm:$0xff]
    %v923 = vld [vmem:[%s886 + $0x120] sm:$0xff]
    %v924 = vld [vmem:[%s886 + $0x128] sm:$0xff]
    %v925 = vld [vmem:[%s886 + $0x130] sm:$0xff]
    %v926 = vld [vmem:[%s886 + $0x138] sm:$0xff]
    %v927 = vld [vmem:[%s886 + $0x140] sm:$0xff]
    %v928 = vld [vmem:[%s886 + $0x148] sm:$0xff]
    %v929 = vld [vmem:[%s886 + $0x150] sm:$0xff]
    %v930 = vld [vmem:[%s886 + $0x158] sm:$0xff]
    %v931 = vld [vmem:[%s886 + $0x160] sm:$0xff]
    %v932 = vld [vmem:[%s886 + $0x168] sm:$0xff]
    %v933 = vld [vmem:[%s886 + $0x170] sm:$0xff]
    %v934 = vld [vmem:[%s886 + $0x178] sm:$0xff]
    %v935 = vld [vmem:[%s886 + $0x180] sm:$0xff]
    %v936 = vld [vmem:[%s886 + $0x188] sm:$0xff]
    %v937 = vld [vmem:[%s886 + $0x190] sm:$0xff]
    %v938 = vld [vmem:[%s886 + $0x198] sm:$0xff]
    %v939 = vld [vmem:[%s886 + $0x1a0] sm:$0xff]
    %v940 = vld [vmem:[%s886 + $0x1a8] sm:$0xff]
    %v941 = vld [vmem:[%s886 + $0x1b0] sm:$0xff]
    %v942 = vld [vmem:[%s886 + $0x1b8] sm:$0xff]
    %v943 = vld [vmem:[%s886 + $0x1c0] sm:$0xff]
    %v944 = vld [vmem:[%s886 + $0x1c8] sm:$0xff]
    %v945 = vld [vmem:[%s886 + $0x1d0] sm:$0xff]
    %v946 = vld [vmem:[%s886 + $0x1d8] sm:$0xff]
    %v947 = vld [vmem:[%s886 + $0x1e0] sm:$0xff]
    %v948 = vld [vmem:[%s886 + $0x1e8] sm:$0xff]
    %v949 = vld [vmem:[%s886 + $0x1f0] sm:$0xff]
    %v950 = vld [vmem:[%s886 + $0x1f8] sm:$0xff]
    %s951 = scalar_lea.vmem [#allocation11], 4
    %v952 = vld [vmem:[%s951] sm:$0x3]
    %v954 = vperm.slane %v952, 0
    %v955 = vperm.slane %v952, 1
    %958 = vmatpush.msra.mxu0 %v917
    %959 = vmatpush.msra.mxu0 %v915
    %960 = vmatpush.msra.mxu0 %v913
    %961 = vmatpush.msra.mxu0 %v911
    %962 = vmatpush.msra.mxu0 %v909
    %963 = vmatpush.msra.mxu0 %v907
    %964 = vmatpush.msra.mxu0 %v905
    %965 = vmatpush.msra.mxu0 %v903
    %966 = vmatpush.msra.mxu0 %v901
    %967 = vmatpush.msra.mxu0 %v899
    %968 = vmatpush.msra.mxu0 %v897
    %969 = vmatpush.msra.mxu0 %v895
    %970 = vmatpush.msra.mxu0 %v893
    %971 = vmatpush.msra.mxu0 %v891
    %972 = vmatpush.msra.mxu0 %v889
    %973 = vmatpush.msra.mxu0 %v887
    %974 = vmatmul.f32.gmra.mxu0 %v884
    %v975 = vpop.f32.mrf.mxu0
    %v976 = vadd.f32 %v954, %v975
    %977 = vdwg.mxu0
    %978 = vmatpush.msra.mxu0 %v949
    %979 = vmatpush.msra.mxu0 %v947
    %980 = vmatpush.msra.mxu0 %v945
    %981 = vmatpush.msra.mxu0 %v943
    %982 = vmatpush.msra.mxu0 %v941
    %983 = vmatpush.msra.mxu0 %v939
    %984 = vmatpush.msra.mxu0 %v937
    %985 = vmatpush.msra.mxu0 %v935
    %986 = vmatpush.msra.mxu0 %v933
    %987 = vmatpush.msra.mxu0 %v931
    %988 = vmatpush.msra.mxu0 %v929
    %989 = vmatpush.msra.mxu0 %v927
    %990 = vmatpush.msra.mxu0 %v925
    %991 = vmatpush.msra.mxu0 %v923
    %992 = vmatpush.msra.mxu0 %v921
    %993 = vmatpush.msra.mxu0 %v919
    %994 = vmatmul.f32.gmra.mxu0 %v885
    %v995 = vpop.f32.mrf.mxu0
    %v996 = vadd.f32 %v976, %v995
    %997 = vdwg.mxu0
    %998 = vmatpush.msra.mxu0 %v918
    %999 = vmatpush.msra.mxu0 %v916
    %1000 = vmatpush.msra.mxu0 %v914
    %1001 = vmatpush.msra.mxu0 %v912
    %1002 = vmatpush.msra.mxu0 %v910
    %1003 = vmatpush.msra.mxu0 %v908
    %1004 = vmatpush.msra.mxu0 %v906
    %1005 = vmatpush.msra.mxu0 %v904
    %1006 = vmatpush.msra.mxu0 %v902
    %1007 = vmatpush.msra.mxu0 %v900
    %1008 = vmatpush.msra.mxu0 %v898
    %1009 = vmatpush.msra.mxu0 %v896
    %1010 = vmatpush.msra.mxu0 %v894
    %1011 = vmatpush.msra.mxu0 %v892
    %1012 = vmatpush.msra.mxu0 %v890
    %1013 = vmatpush.msra.mxu0 %v888
    %1014 = vmatmul.f32.gmra.mxu0 %v884
    %v1015 = vpop.f32.mrf.mxu0
    %v1016 = vadd.f32 %v955, %v1015
    %1017 = vdwg.mxu0
    %1018 = vmatpush.msra.mxu0 %v950
    %1019 = vmatpush.msra.mxu0 %v948
    %1020 = vmatpush.msra.mxu0 %v946
    %1021 = vmatpush.msra.mxu0 %v944
    %1022 = vmatpush.msra.mxu0 %v942
    %1023 = vmatpush.msra.mxu0 %v940
    %1024 = vmatpush.msra.mxu0 %v938
    %1025 = vmatpush.msra.mxu0 %v936
    %1026 = vmatpush.msra.mxu0 %v934
    %1027 = vmatpush.msra.mxu0 %v932
    %1028 = vmatpush.msra.mxu0 %v930
    %1029 = vmatpush.msra.mxu0 %v928
    %1030 = vmatpush.msra.mxu0 %v926
    %1031 = vmatpush.msra.mxu0 %v924
    %1032 = vmatpush.msra.mxu0 %v922
    %1033 = vmatpush.msra.mxu0 %v920
    %1034 = vmatmul.f32.gmra.mxu0 %v885
    %v1035 = vpop.f32.mrf.mxu0
    %v1036 = vadd.f32 %v1016, %v1035
    %1037 = vdwg.mxu0
    %s1038 = scalar_lea.vmem [#allocation5], 5
    %v1039 = vld [vmem:[%s1038] ss:$8 sm:$0x3]
    %vm1040 = vcmp.gt.f32.partialorder %v996, 0.0
    %vm1041 = vcmp.gt.f32.partialorder %v1036, 0.0
    %v1043 = vperm.slane %v1039, 0
    %v1044 = vperm.slane %v1039, 1
    %v1047 = vmul.f32 %v1043, %v996
    %v1048 = vmul.f32 %v1044, %v1036
    %v1049 = vsel %vm1040, %v996, %v1047
    %v1050 = vsel %vm1041, %v1036, %v1048
    %s1051 = scalar_lea.vmem [#allocation13], 1024
    %v1052 = vld [vmem:[%s1051] sm:$0xff]
    %v1053 = vld [vmem:[%s1051 + $0x8] sm:$0xff]
    %v1054 = vld [vmem:[%s1051 + $0x10] sm:$0xff]
    %v1055 = vld [vmem:[%s1051 + $0x18] sm:$0xff]
    %v1056 = vld [vmem:[%s1051 + $0x20] sm:$0xff]
    %v1057 = vld [vmem:[%s1051 + $0x28] sm:$0xff]
    %v1058 = vld [vmem:[%s1051 + $0x30] sm:$0xff]
    %v1059 = vld [vmem:[%s1051 + $0x38] sm:$0xff]
    %v1060 = vld [vmem:[%s1051 + $0x40] sm:$0xff]
    %v1061 = vld [vmem:[%s1051 + $0x48] sm:$0xff]
    %v1062 = vld [vmem:[%s1051 + $0x50] sm:$0xff]
    %v1063 = vld [vmem:[%s1051 + $0x58] sm:$0xff]
    %v1064 = vld [vmem:[%s1051 + $0x60] sm:$0xff]
    %v1065 = vld [vmem:[%s1051 + $0x68] sm:$0xff]
    %v1066 = vld [vmem:[%s1051 + $0x70] sm:$0xff]
    %v1067 = vld [vmem:[%s1051 + $0x78] sm:$0xff]
    %v1068 = vld [vmem:[%s1051 + $0x80] sm:$0xff]
    %v1069 = vld [vmem:[%s1051 + $0x88] sm:$0xff]
    %v1070 = vld [vmem:[%s1051 + $0x90] sm:$0xff]
    %v1071 = vld [vmem:[%s1051 + $0x98] sm:$0xff]
    %v1072 = vld [vmem:[%s1051 + $0xa0] sm:$0xff]
    %v1073 = vld [vmem:[%s1051 + $0xa8] sm:$0xff]
    %v1074 = vld [vmem:[%s1051 + $0xb0] sm:$0xff]
    %v1075 = vld [vmem:[%s1051 + $0xb8] sm:$0xff]
    %v1076 = vld [vmem:[%s1051 + $0xc0] sm:$0xff]
    %v1077 = vld [vmem:[%s1051 + $0xc8] sm:$0xff]
    %v1078 = vld [vmem:[%s1051 + $0xd0] sm:$0xff]
    %v1079 = vld [vmem:[%s1051 + $0xd8] sm:$0xff]
    %v1080 = vld [vmem:[%s1051 + $0xe0] sm:$0xff]
    %v1081 = vld [vmem:[%s1051 + $0xe8] sm:$0xff]
    %v1082 = vld [vmem:[%s1051 + $0xf0] sm:$0xff]
    %v1083 = vld [vmem:[%s1051 + $0xf8] sm:$0xff]
    %v1084 = vld [vmem:[%s1051 + $0x100] sm:$0xff]
    %v1085 = vld [vmem:[%s1051 + $0x108] sm:$0xff]
    %v1086 = vld [vmem:[%s1051 + $0x110] sm:$0xff]
    %v1087 = vld [vmem:[%s1051 + $0x118] sm:$0xff]
    %v1088 = vld [vmem:[%s1051 + $0x120] sm:$0xff]
    %v1089 = vld [vmem:[%s1051 + $0x128] sm:$0xff]
    %v1090 = vld [vmem:[%s1051 + $0x130] sm:$0xff]
    %v1091 = vld [vmem:[%s1051 + $0x138] sm:$0xff]
    %v1092 = vld [vmem:[%s1051 + $0x140] sm:$0xff]
    %v1093 = vld [vmem:[%s1051 + $0x148] sm:$0xff]
    %v1094 = vld [vmem:[%s1051 + $0x150] sm:$0xff]
    %v1095 = vld [vmem:[%s1051 + $0x158] sm:$0xff]
    %v1096 = vld [vmem:[%s1051 + $0x160] sm:$0xff]
    %v1097 = vld [vmem:[%s1051 + $0x168] sm:$0xff]
    %v1098 = vld [vmem:[%s1051 + $0x170] sm:$0xff]
    %v1099 = vld [vmem:[%s1051 + $0x178] sm:$0xff]
    %v1100 = vld [vmem:[%s1051 + $0x180] sm:$0xff]
    %v1101 = vld [vmem:[%s1051 + $0x188] sm:$0xff]
    %v1102 = vld [vmem:[%s1051 + $0x190] sm:$0xff]
    %v1103 = vld [vmem:[%s1051 + $0x198] sm:$0xff]
    %v1104 = vld [vmem:[%s1051 + $0x1a0] sm:$0xff]
    %v1105 = vld [vmem:[%s1051 + $0x1a8] sm:$0xff]
    %v1106 = vld [vmem:[%s1051 + $0x1b0] sm:$0xff]
    %v1107 = vld [vmem:[%s1051 + $0x1b8] sm:$0xff]
    %v1108 = vld [vmem:[%s1051 + $0x1c0] sm:$0xff]
    %v1109 = vld [vmem:[%s1051 + $0x1c8] sm:$0xff]
    %v1110 = vld [vmem:[%s1051 + $0x1d0] sm:$0xff]
    %v1111 = vld [vmem:[%s1051 + $0x1d8] sm:$0xff]
    %v1112 = vld [vmem:[%s1051 + $0x1e0] sm:$0xff]
    %v1113 = vld [vmem:[%s1051 + $0x1e8] sm:$0xff]
    %v1114 = vld [vmem:[%s1051 + $0x1f0] sm:$0xff]
    %v1115 = vld [vmem:[%s1051 + $0x1f8] sm:$0xff]
    %s1116 = scalar_lea.vmem %s7, 4
    %v1117 = vld [vmem:[%s1116] sm:$0x3]
    %v1119 = vperm.slane %v1117, 0
    %v1120 = vperm.slane %v1117, 1
    %1123 = vmatpush.msra.mxu0 %v1082
    %1124 = vmatpush.msra.mxu0 %v1080
    %1125 = vmatpush.msra.mxu0 %v1078
    %1126 = vmatpush.msra.mxu0 %v1076
    %1127 = vmatpush.msra.mxu0 %v1074
    %1128 = vmatpush.msra.mxu0 %v1072
    %1129 = vmatpush.msra.mxu0 %v1070
    %1130 = vmatpush.msra.mxu0 %v1068
    %1131 = vmatpush.msra.mxu0 %v1066
    %1132 = vmatpush.msra.mxu0 %v1064
    %1133 = vmatpush.msra.mxu0 %v1062
    %1134 = vmatpush.msra.mxu0 %v1060
    %1135 = vmatpush.msra.mxu0 %v1058
    %1136 = vmatpush.msra.mxu0 %v1056
    %1137 = vmatpush.msra.mxu0 %v1054
    %1138 = vmatpush.msra.mxu0 %v1052
    %1139 = vmatmul.f32.gmra.mxu0 %v1049
    %v1140 = vpop.f32.mrf.mxu0
    %v1141 = vadd.f32 %v1119, %v1140
    %1142 = vdwg.mxu0
    %1143 = vmatpush.msra.mxu0 %v1114
    %1144 = vmatpush.msra.mxu0 %v1112
    %1145 = vmatpush.msra.mxu0 %v1110
    %1146 = vmatpush.msra.mxu0 %v1108
    %1147 = vmatpush.msra.mxu0 %v1106
    %1148 = vmatpush.msra.mxu0 %v1104
    %1149 = vmatpush.msra.mxu0 %v1102
    %1150 = vmatpush.msra.mxu0 %v1100
    %1151 = vmatpush.msra.mxu0 %v1098
    %1152 = vmatpush.msra.mxu0 %v1096
    %1153 = vmatpush.msra.mxu0 %v1094
    %1154 = vmatpush.msra.mxu0 %v1092
    %1155 = vmatpush.msra.mxu0 %v1090
    %1156 = vmatpush.msra.mxu0 %v1088
    %1157 = vmatpush.msra.mxu0 %v1086
    %1158 = vmatpush.msra.mxu0 %v1084
    %1159 = vmatmul.f32.gmra.mxu0 %v1050
    %v1160 = vpop.f32.mrf.mxu0
    %v1161 = vadd.f32 %v1141, %v1160
    %1162 = vdwg.mxu0
    %1163 = vmatpush.msra.mxu0 %v1083
    %1164 = vmatpush.msra.mxu0 %v1081
    %1165 = vmatpush.msra.mxu0 %v1079
    %1166 = vmatpush.msra.mxu0 %v1077
    %1167 = vmatpush.msra.mxu0 %v1075
    %1168 = vmatpush.msra.mxu0 %v1073
    %1169 = vmatpush.msra.mxu0 %v1071
    %1170 = vmatpush.msra.mxu0 %v1069
    %1171 = vmatpush.msra.mxu0 %v1067
    %1172 = vmatpush.msra.mxu0 %v1065
    %1173 = vmatpush.msra.mxu0 %v1063
    %1174 = vmatpush.msra.mxu0 %v1061
    %1175 = vmatpush.msra.mxu0 %v1059
    %1176 = vmatpush.msra.mxu0 %v1057
    %1177 = vmatpush.msra.mxu0 %v1055
    %1178 = vmatpush.msra.mxu0 %v1053
    %1179 = vmatmul.f32.gmra.mxu0 %v1049
    %v1180 = vpop.f32.mrf.mxu0
    %v1181 = vadd.f32 %v1120, %v1180
    %1182 = vdwg.mxu0
    %1183 = vmatpush.msra.mxu0 %v1115
    %1184 = vmatpush.msra.mxu0 %v1113
    %1185 = vmatpush.msra.mxu0 %v1111
    %1186 = vmatpush.msra.mxu0 %v1109
    %1187 = vmatpush.msra.mxu0 %v1107
    %1188 = vmatpush.msra.mxu0 %v1105
    %1189 = vmatpush.msra.mxu0 %v1103
    %1190 = vmatpush.msra.mxu0 %v1101
    %1191 = vmatpush.msra.mxu0 %v1099
    %1192 = vmatpush.msra.mxu0 %v1097
    %1193 = vmatpush.msra.mxu0 %v1095
    %1194 = vmatpush.msra.mxu0 %v1093
    %1195 = vmatpush.msra.mxu0 %v1091
    %1196 = vmatpush.msra.mxu0 %v1089
    %1197 = vmatpush.msra.mxu0 %v1087
    %1198 = vmatpush.msra.mxu0 %v1085
    %1199 = vmatmul.f32.gmra.mxu0 %v1050
    %v1200 = vpop.f32.mrf.mxu0
    %v1201 = vadd.f32 %v1181, %v1200
    %1202 = vdwg.mxu0
    %s1203 = scalar_lea.vmem [#allocation5], 6
    %v1204 = vld [vmem:[%s1203] ss:$8 sm:$0x3]
    %vm1205 = vcmp.gt.f32.partialorder %v1161, 0.0
    %vm1206 = vcmp.gt.f32.partialorder %v1201, 0.0
    %v1208 = vperm.slane %v1204, 0
    %v1209 = vperm.slane %v1204, 1
    %v1212 = vmul.f32 %v1208, %v1161
    %v1213 = vmul.f32 %v1209, %v1201
    %v1214 = vsel %vm1205, %v1161, %v1212
    %v1215 = vsel %vm1206, %v1201, %v1213
    %v1216 = vadd.f32 %v884, %v1214
    %v1217 = vadd.f32 %v885, %v1215
    %v1218 = vld [vmem:[#allocation14] sm:$0xff]
    %v1219 = vld [vmem:[#allocation14 + $0x8] sm:$0xff]
    %v1220 = vld [vmem:[#allocation14 + $0x10] sm:$0xff]
    %v1221 = vld [vmem:[#allocation14 + $0x18] sm:$0xff]
    %v1222 = vld [vmem:[#allocation14 + $0x20] sm:$0xff]
    %v1223 = vld [vmem:[#allocation14 + $0x28] sm:$0xff]
    %v1224 = vld [vmem:[#allocation14 + $0x30] sm:$0xff]
    %v1225 = vld [vmem:[#allocation14 + $0x38] sm:$0xff]
    %v1226 = vld [vmem:[#allocation14 + $0x40] sm:$0xff]
    %v1227 = vld [vmem:[#allocation14 + $0x48] sm:$0xff]
    %v1228 = vld [vmem:[#allocation14 + $0x50] sm:$0xff]
    %v1229 = vld [vmem:[#allocation14 + $0x58] sm:$0xff]
    %v1230 = vld [vmem:[#allocation14 + $0x60] sm:$0xff]
    %v1231 = vld [vmem:[#allocation14 + $0x68] sm:$0xff]
    %v1232 = vld [vmem:[#allocation14 + $0x70] sm:$0xff]
    %v1233 = vld [vmem:[#allocation14 + $0x78] sm:$0xff]
    %v1234 = vld [vmem:[#allocation14 + $0x80] sm:$0xff]
    %v1235 = vld [vmem:[#allocation14 + $0x88] sm:$0xff]
    %v1236 = vld [vmem:[#allocation14 + $0x90] sm:$0xff]
    %v1237 = vld [vmem:[#allocation14 + $0x98] sm:$0xff]
    %v1238 = vld [vmem:[#allocation14 + $0xa0] sm:$0xff]
    %v1239 = vld [vmem:[#allocation14 + $0xa8] sm:$0xff]
    %v1240 = vld [vmem:[#allocation14 + $0xb0] sm:$0xff]
    %v1241 = vld [vmem:[#allocation14 + $0xb8] sm:$0xff]
    %v1242 = vld [vmem:[#allocation14 + $0xc0] sm:$0xff]
    %v1243 = vld [vmem:[#allocation14 + $0xc8] sm:$0xff]
    %v1244 = vld [vmem:[#allocation14 + $0xd0] sm:$0xff]
    %v1245 = vld [vmem:[#allocation14 + $0xd8] sm:$0xff]
    %v1246 = vld [vmem:[#allocation14 + $0xe0] sm:$0xff]
    %v1247 = vld [vmem:[#allocation14 + $0xe8] sm:$0xff]
    %v1248 = vld [vmem:[#allocation14 + $0xf0] sm:$0xff]
    %v1249 = vld [vmem:[#allocation14 + $0xf8] sm:$0xff]
    %v1250 = vld [vmem:[%s9] sm:$0x1]
    %v1252 = vperm.slane %v1250, 0
    %1254 = vmatpush.msra.mxu0 %v1233
    %1255 = vmatpush.msra.mxu0 %v1232
    %1256 = vmatpush.msra.mxu0 %v1231
    %1257 = vmatpush.msra.mxu0 %v1230
    %1258 = vmatpush.msra.mxu0 %v1229
    %1259 = vmatpush.msra.mxu0 %v1228
    %1260 = vmatpush.msra.mxu0 %v1227
    %1261 = vmatpush.msra.mxu0 %v1226
    %1262 = vmatpush.msra.mxu0 %v1225
    %1263 = vmatpush.msra.mxu0 %v1224
    %1264 = vmatpush.msra.mxu0 %v1223
    %1265 = vmatpush.msra.mxu0 %v1222
    %1266 = vmatpush.msra.mxu0 %v1221
    %1267 = vmatpush.msra.mxu0 %v1220
    %1268 = vmatpush.msra.mxu0 %v1219
    %1269 = vmatpush.msra.mxu0 %v1218
    %1270 = vmatmul.f32.gmra.mxu0 %v1216
    %v1271 = vpop.f32.mrf.mxu0
    %v1272 = vadd.f32 %v1252, %v1271
    %1273 = vdwg.mxu0
    %1274 = vmatpush.msra.mxu0 %v1249
    %1275 = vmatpush.msra.mxu0 %v1248
    %1276 = vmatpush.msra.mxu0 %v1247
    %1277 = vmatpush.msra.mxu0 %v1246
    %1278 = vmatpush.msra.mxu0 %v1245
    %1279 = vmatpush.msra.mxu0 %v1244
    %1280 = vmatpush.msra.mxu0 %v1243
    %1281 = vmatpush.msra.mxu0 %v1242
    %1282 = vmatpush.msra.mxu0 %v1241
    %1283 = vmatpush.msra.mxu0 %v1240
    %1284 = vmatpush.msra.mxu0 %v1239
    %1285 = vmatpush.msra.mxu0 %v1238
    %1286 = vmatpush.msra.mxu0 %v1237
    %1287 = vmatpush.msra.mxu0 %v1236
    %1288 = vmatpush.msra.mxu0 %v1235
    %1289 = vmatpush.msra.mxu0 %v1234
    %1290 = vmatmul.f32.gmra.mxu0 %v1217
    %v1291 = vpop.f32.mrf.mxu0
    %v1292 = vadd.f32 %v1272, %v1291
    %1293 = vdwg.mxu0
    %1294 = vst [vmem:[#allocation16] sm:$0xff] %v1292
    // Predicated region
    $region74: #{tpu_custom_call.1} parent=1 // pred_check
      _
    $region75: #{tpu_custom_call.1} parent=1 // pred_check_branch
      %1296 = sbr.rel (0) target = $region77
    $region76: #{tpu_custom_call.1} parent=1 // pred_region
      %1298 = vsyncadd [#allocation4], 0
      %s1300 = sshll.u32 [#allocation16], 4
      %s1301 = int_to_ptr.vmem [resolvable:$true] %s1300
      %s1302 = sshll.u32 %s10, 4
      %s1303 = int_to_ptr.hbm [resolvable:$true] %s1302
      %1305 = dma.vmem_to_hbm [thread:$0]  %s1301, 128, %s1303, [#allocation4]
    $region77: #{tpu_custom_call.1} parent=1 // pred_fallthru
      _
    // Predicated region
    $region78: #{tpu_custom_call.1} parent=1 // pred_check
      _
    $region79: #{tpu_custom_call.1} parent=1 // pred_check_branch
      %1307 = sbr.rel (0) target = $region81
    $region80: #{tpu_custom_call.1} parent=1 // pred_region
      %1309 = dma.done [#allocation4], 128
    $region81: #{tpu_custom_call.1} parent=1 // pred_fallthru
      _
    %1310 = vsyncpa [#allocation3], 1
    %1311 = vsyncpa [#allocation6], 1
    %1312 = vsyncpa [#allocation9], 1
    %1313 = vsyncpa [#allocation12], 1
    %1314 = vsyncpa [#allocation15], 1
    %1315 = vsyncpa [#allocation4], 1

</llo_original>
